<compile_context>
chip_gen: v6e
topology: v6e:2x2x1
jax: 0.10.0
libtpu: 0.0.40
codegen_flags: <defaults>
</compile_context>

<pallas_src>
import functools

import jax
import jax.numpy as jnp
import numpy as np
from jax import lax
from jax.experimental import pallas as pl
from jax.experimental.pallas import tpu as pltpu

LANE = 128


def _round_up(x, m):
    return (x + m - 1) // m * m


# ----------------------------- Pallas kernels ------------------------------ #

def _conv3x3_tap_kernel(*refs, wp, m_rows, mode, relu6):
    """3x3/stride-1 conv + BN (+ fused 1x1-conv shortcut | + residual) (+ReLU6).

    One image per grid step.  The spatially padded NHWC input arrives flattened
    to (rows, Cin); tap (dy, dx) of the 3x3 stencil is the contiguous row
    window starting at dy*wp + dx, so no im2col tensor exists in HBM.  The 9
    tap matmuls accumulate into a f32 VMEM scratch; BN / shortcut / ReLU6 run
    as a f32 epilogue.
    """
    if mode == "conv":
        (x_ref, w_ref, scale_ref, shift_ref,
         xs_ref, ws_ref, sscale_ref, sshift_ref, o_ref, acc_ref) = refs
    elif mode == "add":
        (x_ref, w_ref, scale_ref, shift_ref, res_ref, o_ref, acc_ref) = refs
    else:
        (x_ref, w_ref, scale_ref, shift_ref, o_ref, acc_ref) = refs

    for t in range(9):
        dy, dx = divmod(t, 3)
        xt = x_ref[pl.ds(dy * wp + dx, m_rows), :]          # (M, Cin) bf16
        part = jnp.dot(xt, w_ref[t], preferred_element_type=jnp.float32)
        if t == 0:
            acc_ref[...] = part
        else:
            acc_ref[...] += part

    y = acc_ref[...] * scale_ref[...] + shift_ref[...]
    if mode == "conv":            # fused 1x1-conv + BN shortcut
        s = jnp.dot(xs_ref[...], ws_ref[...], preferred_element_type=jnp.float32)
        y = y + s * sscale_ref[...] + sshift_ref[...]
    elif mode == "add":           # identity shortcut, pre-flattened f32
        y = y + res_ref[...]
    if relu6:
        y = jnp.clip(y, 0.0, 6.0)
    o_ref[...] = y.astype(o_ref.dtype)


def _matmul_bn_kernel(x_ref, w_ref, scale_ref, shift_ref, o_ref, *, relu6):
    acc = jnp.dot(x_ref[...], w_ref[...], preferred_element_type=jnp.float32)
    y = acc * scale_ref[...] + shift_ref[...]
    if relu6:
        y = jnp.clip(y, 0.0, 6.0)
    o_ref[...] = y.astype(o_ref.dtype)


# ----------------------------- kernel wrappers ------------------------------ #

def conv3x3_tap(x_nhwc, w_taps, scale, shift, *, relu6, shortcut=None,
                out_dtype=jnp.float32):
    """3x3 stride-1 'same' conv via in-kernel tap accumulation (no HBM im2col).

    x_nhwc : (B, H, W, C) un-padded input.
    w_taps : (9, C, Npad)  tap-major weights (t = dy*3 + dx), Npad lane-padded.
    scale, shift : (1, Npad) folded BN.
    shortcut: None
            | ("conv", xs_flat(B, M, Cs), ws(Cs, Npad), ss(1, Npad), sb(1, Npad))
            | ("add",  res_flat(B, M, Npad) f32)
    Returns (B, H, W+2, Npad); the last two width columns are throw-away.
    """
    B, H, W, C = x_nhwc.shape
    wp = W + 2                     # padded width
    m = H * wp                     # output rows per image (incl. 2 junk cols)
    npad = w_taps.shape[-1]
    # pad: 1 top / 2 bottom / 1 left / 1 right.  The extra bottom row keeps the
    # flattened tap windows of the junk columns in-bounds.
    xp = jnp.pad(x_nhwc, ((0, 0), (1, 2), (1, 1), (0, 0)))
    rows = (H + 3) * wp
    x_flat = xp.reshape(B, rows, C).astype(jnp.bfloat16)

    mode = shortcut[0] if shortcut is not None else None
    in_specs = [
        pl.BlockSpec((None, rows, C), lambda b: (b, 0, 0)),   # activation stream
        pl.BlockSpec((9, C, npad), lambda b: (0, 0, 0)),      # weights (resident)
        pl.BlockSpec((1, npad), lambda b: (0, 0)),            # BN scale (resident)
        pl.BlockSpec((1, npad), lambda b: (0, 0)),            # BN shift (resident)
    ]
    args = [x_flat, w_taps, scale, shift]
    flops = 2 * B * m * C * npad * 9
    if mode == "conv":
        _, xs_flat, ws, ss, sb = shortcut
        cs = xs_flat.shape[-1]
        in_specs += [pl.BlockSpec((None, m, cs), lambda b: (b, 0, 0)),
                     pl.BlockSpec((cs, npad), lambda b: (0, 0)),
                     pl.BlockSpec((1, npad), lambda b: (0, 0)),
                     pl.BlockSpec((1, npad), lambda b: (0, 0))]
        args += [xs_flat, ws, ss, sb]
        flops += 2 * B * m * cs * npad
    elif mode == "add":
        _, res_flat = shortcut
        in_specs += [pl.BlockSpec((None, m, npad), lambda b: (b, 0, 0))]
        args += [res_flat]

    in_bytes = sum(int(a.size) * a.dtype.itemsize for a in args)
    out_bytes = B * m * npad * np.dtype(out_dtype).itemsize

    out = pl.pallas_call(
        functools.partial(_conv3x3_tap_kernel, wp=wp, m_rows=m,
                          mode=mode, relu6=relu6),
        out_shape=jax.ShapeDtypeStruct((B, m, npad), out_dtype),
        grid_spec=pltpu.PrefetchScalarGridSpec(
            num_scalar_prefetch=0,
            grid=(B,),
            in_specs=in_specs,
            out_specs=pl.BlockSpec((None, m, npad), lambda b: (b, 0, 0)),
            scratch_shapes=[pltpu.VMEM((m, npad), jnp.float32)],
        ),
        compiler_params=pltpu.CompilerParams(
            dimension_semantics=("parallel",),        # both TCs on v7x
            vmem_limit_bytes=64 * 1024 * 1024),
        cost_estimate=pl.CostEstimate(flops=flops, transcendentals=0,
                                      bytes_accessed=int(in_bytes + out_bytes)),
    )(*args)
    return out.reshape(B, H, wp, npad)


def conv_as_matmul(patches, w, scale, shift, *, relu6, out_dtype, block_m=512):
    """im2col fallback for strided convs: (M, K) @ (K, Npad), tiled over M.

    Weights / BN vectors use constant index_maps so they stay VMEM-resident
    across the M grid; the M axis is "parallel".
    """
    M, K = patches.shape
    npad = w.shape[1]
    tm = min(block_m, _round_up(M, 8))
    mp = _round_up(M, tm)
    if mp != M:
        patches = jnp.pad(patches, ((0, mp - M), (0, 0)))
    in_bytes = (mp * K + K * npad) * 2 + 2 * npad * 4
    out_bytes = mp * npad * np.dtype(out_dtype).itemsize

    out = pl.pallas_call(
        functools.partial(_matmul_bn_kernel, relu6=relu6),
        out_shape=jax.ShapeDtypeStruct((mp, npad), out_dtype),
        grid_spec=pltpu.PrefetchScalarGridSpec(
            num_scalar_prefetch=0,
            grid=(mp // tm,),
            in_specs=[pl.BlockSpec((tm, K), lambda i: (i, 0)),
                      pl.BlockSpec((K, npad), lambda i: (0, 0)),
                      pl.BlockSpec((1, npad), lambda i: (0, 0)),
                      pl.BlockSpec((1, npad), lambda i: (0, 0))],
            out_specs=pl.BlockSpec((tm, npad), lambda i: (i, 0)),
        ),
        compiler_params=pltpu.CompilerParams(
            dimension_semantics=("parallel",),
            vmem_limit_bytes=64 * 1024 * 1024),
        cost_estimate=pl.CostEstimate(flops=2 * mp * K * npad, transcendentals=0,
                                      bytes_accessed=int(in_bytes + out_bytes)),
    )(patches, w, scale, shift)
    return out[:M]


# ------------------------------- JAX glue ---------------------------------- #

def _im2col(x_nhwc, kh, kw, stride, pad):
    B, H, W, C = x_nhwc.shape
    Ho = (H + 2 * pad - kh) // stride + 1
    Wo = (W + 2 * pad - kw) // stride + 1
    xp = jnp.pad(x_nhwc, ((0, 0), (pad, pad), (pad, pad), (0, 0)))
    cols = []
    for dy in range(kh):
        for dx in range(kw):
            cols.append(xp[:, dy:dy + (Ho - 1) * stride + 1:stride,
                              dx:dx + (Wo - 1) * stride + 1:stride, :])
    patches = jnp.concatenate(cols, axis=-1)           # (B, Ho, Wo, kh*kw*C)
    return patches.reshape(B * Ho * Wo, kh * kw * C), (Ho, Wo)


def _fold_bn(bn, npad, eps=1e-5):
    scale = bn["gamma"] / jnp.sqrt(bn["var"] + eps)
    shift = bn["beta"] - bn["mean"] * scale
    c = scale.shape[0]
    return (jnp.pad(scale, (0, npad - c)).reshape(1, npad).astype(jnp.float32),
            jnp.pad(shift, (0, npad - c)).reshape(1, npad).astype(jnp.float32))


def _w3x3_taps(w_oihw, cin_pad, npad):
    # (Cout, Cin, 3, 3) -> (9, cin_pad, npad), tap index t = dy*3 + dx.
    cout, cin, kh, kw = w_oihw.shape
    w = jnp.transpose(w_oihw, (2, 3, 1, 0)).reshape(kh * kw, cin, cout)
    w = jnp.pad(w, ((0, 0), (0, cin_pad - cin), (0, npad - cout)))
    return w.astype(jnp.bfloat16)


def _w_matmul(w_oihw, npad):
    # (Cout, Cin, kh, kw) -> (kh*kw*Cin, npad), matching _im2col ordering.
    cout, cin, kh, kw = w_oihw.shape
    w = jnp.transpose(w_oihw, (2, 3, 1, 0)).reshape(kh * kw * cin, cout)
    return jnp.pad(w, ((0, 0), (0, npad - cout))).astype(jnp.bfloat16)


def basic_block_forward(x_nchw, params, stride):
    # NCHW -> NHWC (channels minor keeps loads/stores lane-dense).  The two
    # boundary transposes exist only to match the PyTorch NCHW interface.
    x = jnp.transpose(x_nchw, (0, 2, 3, 1)).astype(jnp.float32)
    B, H, W, cin = x.shape
    cout = params["w1"].shape[0]
    npad = _round_up(cout, LANE)

    # ---- conv1 (3x3, stride, pad=1) + BN1 + ReLU6 -> y1 (B,Ho,Wo,npad) bf16
    s1, b1 = _fold_bn(params["bn1"], npad)
    if stride == 1:
        y1 = conv3x3_tap(x, _w3x3_taps(params["w1"], cin, npad), s1, b1,
                         relu6=True, out_dtype=jnp.bfloat16)
        Ho, Wo = H, W
        y1 = y1[:, :, :Wo, :]
    else:
        patches, (Ho, Wo) = _im2col(x, 3, 3, stride, 1)
        y1 = conv_as_matmul(patches.astype(jnp.bfloat16),
                            _w_matmul(params["w1"], npad), s1, b1,
                            relu6=True, out_dtype=jnp.bfloat16)
        y1 = y1.reshape(B, Ho, Wo, npad)

    # ---- shortcut operands (fused into the conv2 kernel) ----
    wp2 = Wo + 2
    m2 = Ho * wp2
    if stride != 1 or cin != cout:
        xs = x[:, ::stride, ::stride, :]
        xs = jnp.pad(xs, ((0, 0), (0, 0), (0, wp2 - Wo), (0, 0)))
        shortcut = ("conv", xs.reshape(B, m2, cin).astype(jnp.bfloat16),
                    _w_matmul(params["ws"], npad),
                    *_fold_bn(params["bns"], npad))
    else:
        res = jnp.pad(x, ((0, 0), (0, 0), (0, wp2 - Wo), (0, npad - cin)))
        shortcut = ("add", res.reshape(B, m2, npad).astype(jnp.float32))

    # ---- conv2 (3x3, 1, pad=1) + BN2 + shortcut + ReLU6, one fused kernel ----
    s2, b2 = _fold_bn(params["bn2"], npad)
    out = conv3x3_tap(y1, _w3x3_taps(params["w2"], npad, npad), s2, b2,
                      relu6=True, shortcut=shortcut, out_dtype=jnp.float32)
    out = out[:, :, :Wo, :cout]
    return jnp.transpose(out, (0, 3, 1, 2))            # NHWC -> NCHW


# --------------------------- reference (pure JAX) --------------------------- #

def _ref_conv(x, w, stride, pad):
    # bf16 inputs + f32 accumulation, matching the Pallas kernels.
    return lax.conv_general_dilated(
        x.astype(jnp.bfloat16), w.astype(jnp.bfloat16),
        window_strides=(stride, stride), padding=[(pad, pad), (pad, pad)],
        dimension_numbers=("NCHW", "OIHW", "NCHW"),
        preferred_element_type=jnp.float32)


def basic_block_reference(x, params, stride, eps=1e-5):
    def bn(y, p):
        sc = p["gamma"] / jnp.sqrt(p["var"] + eps)
        sh = p["beta"] - p["mean"] * sc
        return y * sc.reshape(1, -1, 1, 1) + sh.reshape(1, -1, 1, 1)

    y = jnp.clip(bn(_ref_conv(x, params["w1"], stride, 1), params["bn1"]), 0.0, 6.0)
    y = bn(_ref_conv(y, params["w2"], 1, 1), params["bn2"])
    if stride != 1 or x.shape[1] != params["w1"].shape[0]:
        s = bn(_ref_conv(x, params["ws"], stride, 0), params["bns"])
    else:
        s = x
    return jnp.clip(y + s, 0.0, 6.0)


# ---------------------------------- main ------------------------------------ #

def _make_bn(key, c):
    k0, k1, k2, k3 = jax.random.split(key, 4)
    return dict(
        gamma=1.0 + 0.1 * jax.random.normal(k0, (c,), jnp.float32),
        beta=0.1 * jax.random.normal(k1, (c,), jnp.float32),
        mean=0.1 * jax.random.normal(k2, (c,), jnp.float32),
        var=0.5 + jax.random.uniform(k3, (c,), jnp.float32),
    )


def _make_params(key, cin, cout, stride):
    ks = jax.random.split(key, 6)
    p = dict(
        w1=0.2 * jax.random.normal(ks[0], (cout, cin, 3, 3), jnp.float32),
        w2=0.2 * jax.random.normal(ks[1], (cout, cout, 3, 3), jnp.float32),
        bn1=_make_bn(ks[2], cout),
        bn2=_make_bn(ks[3], cout),
    )
    if stride != 1 or cin != cout:
        p["ws"] = 0.2 * jax.random.normal(ks[4], (cout, cin, 1, 1), jnp.float32)
        p["bns"] = _make_bn(ks[5], cout)
    return p


if __name__ == "__main__":
    fwd = jax.jit(basic_block_forward, static_argnames=("stride",))
    key = jax.random.PRNGKey(0)
    k1, k2, k3, k4 = jax.random.split(key, 4)

    # Case 1: downsampling block (stride 2, Cin != Cout) -> fused conv-shortcut.
    x1 = jax.random.normal(k1, (2, 4, 16, 16), jnp.float32)
    p1 = _make_params(k2, 4, 8, 2)
    out1 = jax.block_until_ready(fwd(x1, p1, stride=2))
    ref1 = basic_block_reference(x1, p1, 2)
    np.testing.assert_allclose(np.asarray(out1), np.asarray(ref1),
                               rtol=2e-2, atol=2e-2)

    # Case 2: identity block (stride 1, Cin == Cout) -> fused residual add.
    x2 = jax.random.normal(k3, (2, 8, 8, 8), jnp.float32)
    p2 = _make_params(k4, 8, 8, 1)
    out2 = jax.block_until_ready(fwd(x2, p2, stride=1))
    ref2 = basic_block_reference(x2, p2, 1)
    np.testing.assert_allclose(np.asarray(out2), np.asarray(ref2),
                               rtol=2e-2, atol=2e-2)

    print("KERNEL_OK")
</pallas_src>

<mosaic_0001>
module attributes {stable_mosaic.version = 11 : i64} {
  func.func @_matmul_bn_kernel(%arg0: i32, %arg1: memref<128x36xbf16, #tpu.memory_space<vmem>>, %arg2: memref<36x128xbf16, #tpu.memory_space<vmem>>, %arg3: memref<1x128xf32, #tpu.memory_space<vmem>>, %arg4: memref<1x128xf32, #tpu.memory_space<vmem>>, %arg5: memref<128x128xbf16, #tpu.memory_space<vmem>>) attributes {dimension_semantics = [#tpu.dimension_semantics<parallel>], iteration_bounds = array<i64: 1>, scalar_prefetch = 0 : i64, scratch_operands = 0 : i64, tpu.core_type = #tpu.core_type<tc>, window_params = [{transform_indices = @transform_0, window_bounds = array<i64: 128, 36>}, {pipeline_mode = #tpu.pipeline_mode<synchronous>, transform_indices = @transform_1, window_bounds = array<i64: 36, 128>}, {pipeline_mode = #tpu.pipeline_mode<synchronous>, transform_indices = @transform_2, window_bounds = array<i64: 1, 128>}, {pipeline_mode = #tpu.pipeline_mode<synchronous>, transform_indices = @transform_3, window_bounds = array<i64: 1, 128>}, {transform_indices = @transform_4, window_bounds = array<i64: 128, 128>}]} {
    %c0 = arith.constant 0 : index
    %c0_0 = arith.constant 0 : index
    %0 = vector.load %arg1[%c0, %c0_0] : memref<128x36xbf16, #tpu.memory_space<vmem>>, vector<128x36xbf16>
    %c0_1 = arith.constant 0 : index
    %c0_2 = arith.constant 0 : index
    %1 = vector.load %arg2[%c0_1, %c0_2] : memref<36x128xbf16, #tpu.memory_space<vmem>>, vector<36x128xbf16>
    %cst = arith.constant dense<0.000000e+00> : vector<128x128xf32>
    %2 = tpu.matmul %0, %1, %cst {dimension_numbers = #tpu.dot_dimension_numbers<[1], [0], [0], [1], [0, 0, 1, 1], [], []>} : vector<128x36xbf16>, vector<36x128xbf16>, vector<128x128xf32> -> vector<128x128xf32>
    %c0_3 = arith.constant 0 : index
    %c0_4 = arith.constant 0 : index
    %3 = vector.load %arg3[%c0_3, %c0_4] : memref<1x128xf32, #tpu.memory_space<vmem>>, vector<1x128xf32>
    %4 = vector.broadcast %3 : vector<1x128xf32> to vector<128x128xf32>
    %5 = arith.mulf %2, %4 : vector<128x128xf32>
    %c0_5 = arith.constant 0 : index
    %c0_6 = arith.constant 0 : index
    %6 = vector.load %arg4[%c0_5, %c0_6] : memref<1x128xf32, #tpu.memory_space<vmem>>, vector<1x128xf32>
    %7 = vector.broadcast %6 : vector<1x128xf32> to vector<128x128xf32>
    %8 = arith.addf %5, %7 : vector<128x128xf32>
    %cst_7 = arith.constant 0.000000e+00 : f32
    %cst_8 = arith.constant 6.000000e+00 : f32
    %9 = vector.broadcast %cst_7 : f32 to vector<128x128xf32>
    %10 = arith.maximumf %9, %8 : vector<128x128xf32>
    %11 = vector.broadcast %cst_8 : f32 to vector<128x128xf32>
    %12 = arith.minimumf %11, %10 : vector<128x128xf32>
    %13 = arith.truncf %12 : vector<128x128xf32> to vector<128x128xbf16>
    %c0_9 = arith.constant 0 : index
    %c0_10 = arith.constant 0 : index
    %14 = vector.load %arg5[%c0_9, %c0_10] : memref<128x128xbf16, #tpu.memory_space<vmem>>, vector<128x128xbf16>
    tpu.vector_store %arg5[%c0_9, %c0_10], %13 {strides = array<i32>} : memref<128x128xbf16, #tpu.memory_space<vmem>>, vector<128x128xbf16>,
    return
  }
  func.func @transform_0(%arg0: i32) -> (i32, i32) {
    %c0_i32 = arith.constant 0 : i32
    %c0_i32_0 = arith.constant 0 : i32
    return %arg0, %c0_i32 : i32, i32
  }
  func.func @transform_1(%arg0: i32) -> (i32, i32) {
    %c0_i32 = arith.constant 0 : i32
    %c0_i32_0 = arith.constant 0 : i32
    %c0_i32_1 = arith.constant 0 : i32
    return %c0_i32, %c0_i32_0 : i32, i32
  }
  func.func @transform_2(%arg0: i32) -> (i32, i32) {
    %c0_i32 = arith.constant 0 : i32
    %c0_i32_0 = arith.constant 0 : i32
    %c0_i32_1 = arith.constant 0 : i32
    return %c0_i32, %c0_i32_0 : i32, i32
  }
  func.func @transform_3(%arg0: i32) -> (i32, i32) {
    %c0_i32 = arith.constant 0 : i32
    %c0_i32_0 = arith.constant 0 : i32
    %c0_i32_1 = arith.constant 0 : i32
    return %c0_i32, %c0_i32_0 : i32, i32
  }
  func.func @transform_4(%arg0: i32) -> (i32, i32) {
    %c0_i32 = arith.constant 0 : i32
    %c0_i32_0 = arith.constant 0 : i32
    return %arg0, %c0_i32 : i32, i32
  }
}

module attributes {stable_mosaic.version = 11 : i64} {
  func.func @_conv3x3_tap_kernel(%arg0: i32, %arg1: memref<1x110x128xbf16, #tpu.memory_space<vmem>>, %arg2: memref<9x128x128xbf16, #tpu.memory_space<vmem>>, %arg3: memref<1x128xf32, #tpu.memory_space<vmem>>, %arg4: memref<1x128xf32, #tpu.memory_space<vmem>>, %arg5: memref<1x80x4xbf16, #tpu.memory_space<vmem>>, %arg6: memref<4x128xbf16, #tpu.memory_space<vmem>>, %arg7: memref<1x128xf32, #tpu.memory_space<vmem>>, %arg8: memref<1x128xf32, #tpu.memory_space<vmem>>, %arg9: memref<1x80x128xf32, #tpu.memory_space<vmem>>, %arg10: memref<80x128xf32, #tpu.memory_space<vmem>>) attributes {dimension_semantics = [#tpu.dimension_semantics<parallel>], iteration_bounds = array<i64: 2>, scalar_prefetch = 0 : i64, scratch_operands = 1 : i64, tpu.core_type = #tpu.core_type<tc>, window_params = [{transform_indices = @transform_0, window_bounds = array<i64: 1, 110, 128>}, {pipeline_mode = #tpu.pipeline_mode<synchronous>, transform_indices = @transform_1, window_bounds = array<i64: 9, 128, 128>}, {pipeline_mode = #tpu.pipeline_mode<synchronous>, transform_indices = @transform_2, window_bounds = array<i64: 1, 128>}, {pipeline_mode = #tpu.pipeline_mode<synchronous>, transform_indices = @transform_3, window_bounds = array<i64: 1, 128>}, {transform_indices = @transform_4, window_bounds = array<i64: 1, 80, 4>}, {pipeline_mode = #tpu.pipeline_mode<synchronous>, transform_indices = @transform_5, window_bounds = array<i64: 4, 128>}, {pipeline_mode = #tpu.pipeline_mode<synchronous>, transform_indices = @transform_6, window_bounds = array<i64: 1, 128>}, {pipeline_mode = #tpu.pipeline_mode<synchronous>, transform_indices = @transform_7, window_bounds = array<i64: 1, 128>}, {transform_indices = @transform_8, window_bounds = array<i64: 1, 80, 128>}]} {
    %c0 = arith.constant 0 : index
    %c0_0 = arith.constant 0 : index
    %c0_1 = arith.constant 0 : index
    %0 = vector.load %arg1[%c0, %c0_0, %c0_1] : memref<1x110x128xbf16, #tpu.memory_space<vmem>>, vector<1x80x128xbf16>
    %1 = vector.shape_cast %0 : vector<1x80x128xbf16> to vector<80x128xbf16>
    %c0_2 = arith.constant 0 : index
    %c0_3 = arith.constant 0 : index
    %c0_4 = arith.constant 0 : index
    %2 = vector.load %arg2[%c0_2, %c0_3, %c0_4] : memref<9x128x128xbf16, #tpu.memory_space<vmem>>, vector<1x128x128xbf16>
    %3 = vector.shape_cast %2 : vector<1x128x128xbf16> to vector<128x128xbf16>
    %cst = arith.constant dense<0.000000e+00> : vector<80x128xf32>
    %4 = tpu.matmul %1, %3, %cst {dimension_numbers = #tpu.dot_dimension_numbers<[1], [0], [0], [1], [0, 0, 1, 1], [], []>} : vector<80x128xbf16>, vector<128x128xbf16>, vector<80x128xf32> -> vector<80x128xf32>
    %c0_5 = arith.constant 0 : index
    %c0_6 = arith.constant 0 : index
    %5 = vector.load %arg10[%c0_5, %c0_6] : memref<80x128xf32, #tpu.memory_space<vmem>>, vector<80x128xf32>
    tpu.vector_store %arg10[%c0_5, %c0_6], %4 {strides = array<i32>} : memref<80x128xf32, #tpu.memory_space<vmem>>, vector<80x128xf32>,
    %c0_7 = arith.constant 0 : index
    %c1 = arith.constant 1 : index
    %c0_8 = arith.constant 0 : index
    %6 = vector.load %arg1[%c0_7, %c1, %c0_8] : memref<1x110x128xbf16, #tpu.memory_space<vmem>>, vector<1x80x128xbf16>
    %7 = vector.shape_cast %6 : vector<1x80x128xbf16> to vector<80x128xbf16>
    %c1_9 = arith.constant 1 : index
    %c0_10 = arith.constant 0 : index
    %c0_11 = arith.constant 0 : index
    %8 = vector.load %arg2[%c1_9, %c0_10, %c0_11] : memref<9x128x128xbf16, #tpu.memory_space<vmem>>, vector<1x128x128xbf16>
    %9 = vector.shape_cast %8 : vector<1x128x128xbf16> to vector<128x128xbf16>
    %cst_12 = arith.constant dense<0.000000e+00> : vector<80x128xf32>
    %10 = tpu.matmul %7, %9, %cst_12 {dimension_numbers = #tpu.dot_dimension_numbers<[1], [0], [0], [1], [0, 0, 1, 1], [], []>} : vector<80x128xbf16>, vector<128x128xbf16>, vector<80x128xf32> -> vector<80x128xf32>
    %c0_13 = arith.constant 0 : index
    %c0_14 = arith.constant 0 : index
    %11 = vector.load %arg10[%c0_13, %c0_14] : memref<80x128xf32, #tpu.memory_space<vmem>>, vector<80x128xf32>
    %12 = arith.addf %11, %10 : vector<80x128xf32>
    %c0_15 = arith.constant 0 : index
    %c0_16 = arith.constant 0 : index
    %13 = vector.load %arg10[%c0_15, %c0_16] : memref<80x128xf32, #tpu.memory_space<vmem>>, vector<80x128xf32>
    tpu.vector_store %arg10[%c0_15, %c0_16], %12 {strides = array<i32>} : memref<80x128xf32, #tpu.memory_space<vmem>>, vector<80x128xf32>,
    %c0_17 = arith.constant 0 : index
    %c2 = arith.constant 2 : index
    %c0_18 = arith.constant 0 : index
    %14 = vector.load %arg1[%c0_17, %c2, %c0_18] : memref<1x110x128xbf16, #tpu.memory_space<vmem>>, vector<1x80x128xbf16>
    %15 = vector.shape_cast %14 : vector<1x80x128xbf16> to vector<80x128xbf16>
    %c2_19 = arith.constant 2 : index
    %c0_20 = arith.constant 0 : index
    %c0_21 = arith.constant 0 : index
    %16 = vector.load %arg2[%c2_19, %c0_20, %c0_21] : memref<9x128x128xbf16, #tpu.memory_space<vmem>>, vector<1x128x128xbf16>
    %17 = vector.shape_cast %16 : vector<1x128x128xbf16> to vector<128x128xbf16>
    %cst_22 = arith.constant dense<0.000000e+00> : vector<80x128xf32>
    %18 = tpu.matmul %15, %17, %cst_22 {dimension_numbers = #tpu.dot_dimension_numbers<[1], [0], [0], [1], [0, 0, 1, 1], [], []>} : vector<80x128xbf16>, vector<128x128xbf16>, vector<80x128xf32> -> vector<80x128xf32>
    %c0_23 = arith.constant 0 : index
    %c0_24 = arith.constant 0 : index
    %19 = vector.load %arg10[%c0_23, %c0_24] : memref<80x128xf32, #tpu.memory_space<vmem>>, vector<80x128xf32>
    %20 = arith.addf %19, %18 : vector<80x128xf32>
    %c0_25 = arith.constant 0 : index
    %c0_26 = arith.constant 0 : index
    %21 = vector.load %arg10[%c0_25, %c0_26] : memref<80x128xf32, #tpu.memory_space<vmem>>, vector<80x128xf32>
    tpu.vector_store %arg10[%c0_25, %c0_26], %20 {strides = array<i32>} : memref<80x128xf32, #tpu.memory_space<vmem>>, vector<80x128xf32>,
    %c0_27 = arith.constant 0 : index
    %c10 = arith.constant 10 : index
    %c0_28 = arith.constant 0 : index
    %22 = vector.load %arg1[%c0_27, %c10, %c0_28] : memref<1x110x128xbf16, #tpu.memory_space<vmem>>, vector<1x80x128xbf16>
    %23 = vector.shape_cast %22 : vector<1x80x128xbf16> to vector<80x128xbf16>
    %c3 = arith.constant 3 : index
    %c0_29 = arith.constant 0 : index
    %c0_30 = arith.constant 0 : index
    %24 = vector.load %arg2[%c3, %c0_29, %c0_30] : memref<9x128x128xbf16, #tpu.memory_space<vmem>>, vector<1x128x128xbf16>
    %25 = vector.shape_cast %24 : vector<1x128x128xbf16> to vector<128x128xbf16>
    %cst_31 = arith.constant dense<0.000000e+00> : vector<80x128xf32>
    %26 = tpu.matmul %23, %25, %cst_31 {dimension_numbers = #tpu.dot_dimension_numbers<[1], [0], [0], [1], [0, 0, 1, 1], [], []>} : vector<80x128xbf16>, vector<128x128xbf16>, vector<80x128xf32> -> vector<80x128xf32>
    %c0_32 = arith.constant 0 : index
    %c0_33 = arith.constant 0 : index
    %27 = vector.load %arg10[%c0_32, %c0_33] : memref<80x128xf32, #tpu.memory_space<vmem>>, vector<80x128xf32>
    %28 = arith.addf %27, %26 : vector<80x128xf32>
    %c0_34 = arith.constant 0 : index
    %c0_35 = arith.constant 0 : index
    %29 = vector.load %arg10[%c0_34, %c0_35] : memref<80x128xf32, #tpu.memory_space<vmem>>, vector<80x128xf32>
    tpu.vector_store %arg10[%c0_34, %c0_35], %28 {strides = array<i32>} : memref<80x128xf32, #tpu.memory_space<vmem>>, vector<80x128xf32>,
    %c0_36 = arith.constant 0 : index
    %c11 = arith.constant 11 : index
    %c0_37 = arith.constant 0 : index
    %30 = vector.load %arg1[%c0_36, %c11, %c0_37] : memref<1x110x128xbf16, #tpu.memory_space<vmem>>, vector<1x80x128xbf16>
    %31 = vector.shape_cast %30 : vector<1x80x128xbf16> to vector<80x128xbf16>
    %c4 = arith.constant 4 : index
    %c0_38 = arith.constant 0 : index
    %c0_39 = arith.constant 0 : index
    %32 = vector.load %arg2[%c4, %c0_38, %c0_39] : memref<9x128x128xbf16, #tpu.memory_space<vmem>>, vector<1x128x128xbf16>
    %33 = vector.shape_cast %32 : vector<1x128x128xbf16> to vector<128x128xbf16>
    %cst_40 = arith.constant dense<0.000000e+00> : vector<80x128xf32>
    %34 = tpu.matmul %31, %33, %cst_40 {dimension_numbers = #tpu.dot_dimension_numbers<[1], [0], [0], [1], [0, 0, 1, 1], [], []>} : vector<80x128xbf16>, vector<128x128xbf16>, vector<80x128xf32> -> vector<80x128xf32>
    %c0_41 = arith.constant 0 : index
    %c0_42 = arith.constant 0 : index
    %35 = vector.load %arg10[%c0_41, %c0_42] : memref<80x128xf32, #tpu.memory_space<vmem>>, vector<80x128xf32>
    %36 = arith.addf %35, %34 : vector<80x128xf32>
    %c0_43 = arith.constant 0 : index
    %c0_44 = arith.constant 0 : index
    %37 = vector.load %arg10[%c0_43, %c0_44] : memref<80x128xf32, #tpu.memory_space<vmem>>, vector<80x128xf32>
    tpu.vector_store %arg10[%c0_43, %c0_44], %36 {strides = array<i32>} : memref<80x128xf32, #tpu.memory_space<vmem>>, vector<80x128xf32>,
    %c0_45 = arith.constant 0 : index
    %c12 = arith.constant 12 : index
    %c0_46 = arith.constant 0 : index
    %38 = vector.load %arg1[%c0_45, %c12, %c0_46] : memref<1x110x128xbf16, #tpu.memory_space<vmem>>, vector<1x80x128xbf16>
    %39 = vector.shape_cast %38 : vector<1x80x128xbf16> to vector<80x128xbf16>
    %c5 = arith.constant 5 : index
    %c0_47 = arith.constant 0 : index
    %c0_48 = arith.constant 0 : index
    %40 = vector.load %arg2[%c5, %c0_47, %c0_48] : memref<9x128x128xbf16, #tpu.memory_space<vmem>>, vector<1x128x128xbf16>
    %41 = vector.shape_cast %40 : vector<1x128x128xbf16> to vector<128x128xbf16>
    %cst_49 = arith.constant dense<0.000000e+00> : vector<80x128xf32>
    %42 = tpu.matmul %39, %41, %cst_49 {dimension_numbers = #tpu.dot_dimension_numbers<[1], [0], [0], [1], [0, 0, 1, 1], [], []>} : vector<80x128xbf16>, vector<128x128xbf16>, vector<80x128xf32> -> vector<80x128xf32>
    %c0_50 = arith.constant 0 : index
    %c0_51 = arith.constant 0 : index
    %43 = vector.load %arg10[%c0_50, %c0_51] : memref<80x128xf32, #tpu.memory_space<vmem>>, vector<80x128xf32>
    %44 = arith.addf %43, %42 : vector<80x128xf32>
    %c0_52 = arith.constant 0 : index
    %c0_53 = arith.constant 0 : index
    %45 = vector.load %arg10[%c0_52, %c0_53] : memref<80x128xf32, #tpu.memory_space<vmem>>, vector<80x128xf32>
    tpu.vector_store %arg10[%c0_52, %c0_53], %44 {strides = array<i32>} : memref<80x128xf32, #tpu.memory_space<vmem>>, vector<80x128xf32>,
    %c0_54 = arith.constant 0 : index
    %c20 = arith.constant 20 : index
    %c0_55 = arith.constant 0 : index
    %46 = vector.load %arg1[%c0_54, %c20, %c0_55] : memref<1x110x128xbf16, #tpu.memory_space<vmem>>, vector<1x80x128xbf16>
    %47 = vector.shape_cast %46 : vector<1x80x128xbf16> to vector<80x128xbf16>
    %c6 = arith.constant 6 : index
    %c0_56 = arith.constant 0 : index
    %c0_57 = arith.constant 0 : index
    %48 = vector.load %arg2[%c6, %c0_56, %c0_57] : memref<9x128x128xbf16, #tpu.memory_space<vmem>>, vector<1x128x128xbf16>
    %49 = vector.shape_cast %48 : vector<1x128x128xbf16> to vector<128x128xbf16>
    %cst_58 = arith.constant dense<0.000000e+00> : vector<80x128xf32>
    %50 = tpu.matmul %47, %49, %cst_58 {dimension_numbers = #tpu.dot_dimension_numbers<[1], [0], [0], [1], [0, 0, 1, 1], [], []>} : vector<80x128xbf16>, vector<128x128xbf16>, vector<80x128xf32> -> vector<80x128xf32>
    %c0_59 = arith.constant 0 : index
    %c0_60 = arith.constant 0 : index
    %51 = vector.load %arg10[%c0_59, %c0_60] : memref<80x128xf32, #tpu.memory_space<vmem>>, vector<80x128xf32>
    %52 = arith.addf %51, %50 : vector<80x128xf32>
    %c0_61 = arith.constant 0 : index
    %c0_62 = arith.constant 0 : index
    %53 = vector.load %arg10[%c0_61, %c0_62] : memref<80x128xf32, #tpu.memory_space<vmem>>, vector<80x128xf32>
    tpu.vector_store %arg10[%c0_61, %c0_62], %52 {strides = array<i32>} : memref<80x128xf32, #tpu.memory_space<vmem>>, vector<80x128xf32>,
    %c0_63 = arith.constant 0 : index
    %c21 = arith.constant 21 : index
    %c0_64 = arith.constant 0 : index
    %54 = vector.load %arg1[%c0_63, %c21, %c0_64] : memref<1x110x128xbf16, #tpu.memory_space<vmem>>, vector<1x80x128xbf16>
    %55 = vector.shape_cast %54 : vector<1x80x128xbf16> to vector<80x128xbf16>
    %c7 = arith.constant 7 : index
    %c0_65 = arith.constant 0 : index
    %c0_66 = arith.constant 0 : index
    %56 = vector.load %arg2[%c7, %c0_65, %c0_66] : memref<9x128x128xbf16, #tpu.memory_space<vmem>>, vector<1x128x128xbf16>
    %57 = vector.shape_cast %56 : vector<1x128x128xbf16> to vector<128x128xbf16>
    %cst_67 = arith.constant dense<0.000000e+00> : vector<80x128xf32>
    %58 = tpu.matmul %55, %57, %cst_67 {dimension_numbers = #tpu.dot_dimension_numbers<[1], [0], [0], [1], [0, 0, 1, 1], [], []>} : vector<80x128xbf16>, vector<128x128xbf16>, vector<80x128xf32> -> vector<80x128xf32>
    %c0_68 = arith.constant 0 : index
    %c0_69 = arith.constant 0 : index
    %59 = vector.load %arg10[%c0_68, %c0_69] : memref<80x128xf32, #tpu.memory_space<vmem>>, vector<80x128xf32>
    %60 = arith.addf %59, %58 : vector<80x128xf32>
    %c0_70 = arith.constant 0 : index
    %c0_71 = arith.constant 0 : index
    %61 = vector.load %arg10[%c0_70, %c0_71] : memref<80x128xf32, #tpu.memory_space<vmem>>, vector<80x128xf32>
    tpu.vector_store %arg10[%c0_70, %c0_71], %60 {strides = array<i32>} : memref<80x128xf32, #tpu.memory_space<vmem>>, vector<80x128xf32>,
    %c0_72 = arith.constant 0 : index
    %c22 = arith.constant 22 : index
    %c0_73 = arith.constant 0 : index
    %62 = vector.load %arg1[%c0_72, %c22, %c0_73] : memref<1x110x128xbf16, #tpu.memory_space<vmem>>, vector<1x80x128xbf16>
    %63 = vector.shape_cast %62 : vector<1x80x128xbf16> to vector<80x128xbf16>
    %c8 = arith.constant 8 : index
    %c0_74 = arith.constant 0 : index
    %c0_75 = arith.constant 0 : index
    %64 = vector.load %arg2[%c8, %c0_74, %c0_75] : memref<9x128x128xbf16, #tpu.memory_space<vmem>>, vector<1x128x128xbf16>
    %65 = vector.shape_cast %64 : vector<1x128x128xbf16> to vector<128x128xbf16>
    %cst_76 = arith.constant dense<0.000000e+00> : vector<80x128xf32>
    %66 = tpu.matmul %63, %65, %cst_76 {dimension_numbers = #tpu.dot_dimension_numbers<[1], [0], [0], [1], [0, 0, 1, 1], [], []>} : vector<80x128xbf16>, vector<128x128xbf16>, vector<80x128xf32> -> vector<80x128xf32>
    %c0_77 = arith.constant 0 : index
    %c0_78 = arith.constant 0 : index
    %67 = vector.load %arg10[%c0_77, %c0_78] : memref<80x128xf32, #tpu.memory_space<vmem>>, vector<80x128xf32>
    %68 = arith.addf %67, %66 : vector<80x128xf32>
    %c0_79 = arith.constant 0 : index
    %c0_80 = arith.constant 0 : index
    %69 = vector.load %arg10[%c0_79, %c0_80] : memref<80x128xf32, #tpu.memory_space<vmem>>, vector<80x128xf32>
    tpu.vector_store %arg10[%c0_79, %c0_80], %68 {strides = array<i32>} : memref<80x128xf32, #tpu.memory_space<vmem>>, vector<80x128xf32>,
    %c0_81 = arith.constant 0 : index
    %c0_82 = arith.constant 0 : index
    %70 = vector.load %arg10[%c0_81, %c0_82] : memref<80x128xf32, #tpu.memory_space<vmem>>, vector<80x128xf32>
    %c0_83 = arith.constant 0 : index
    %c0_84 = arith.constant 0 : index
    %71 = vector.load %arg3[%c0_83, %c0_84] : memref<1x128xf32, #tpu.memory_space<vmem>>, vector<1x128xf32>
    %72 = vector.broadcast %71 : vector<1x128xf32> to vector<80x128xf32>
    %73 = arith.mulf %70, %72 : vector<80x128xf32>
    %c0_85 = arith.constant 0 : index
    %c0_86 = arith.constant 0 : index
    %74 = vector.load %arg4[%c0_85, %c0_86] : memref<1x128xf32, #tpu.memory_space<vmem>>, vector<1x128xf32>
    %75 = vector.broadcast %74 : vector<1x128xf32> to vector<80x128xf32>
    %76 = arith.addf %73, %75 : vector<80x128xf32>
    %c0_87 = arith.constant 0 : index
    %c0_88 = arith.constant 0 : index
    %c0_89 = arith.constant 0 : index
    %77 = vector.load %arg5[%c0_87, %c0_88, %c0_89] : memref<1x80x4xbf16, #tpu.memory_space<vmem>>, vector<1x80x4xbf16>
    %78 = vector.shape_cast %77 : vector<1x80x4xbf16> to vector<80x4xbf16>
    %c0_90 = arith.constant 0 : index
    %c0_91 = arith.constant 0 : index
    %79 = vector.load %arg6[%c0_90, %c0_91] : memref<4x128xbf16, #tpu.memory_space<vmem>>, vector<4x128xbf16>
    %cst_92 = arith.constant dense<0.000000e+00> : vector<80x128xf32>
    %80 = tpu.matmul %78, %79, %cst_92 {dimension_numbers = #tpu.dot_dimension_numbers<[1], [0], [0], [1], [0, 0, 1, 1], [], []>} : vector<80x4xbf16>, vector<4x128xbf16>, vector<80x128xf32> -> vector<80x128xf32>
    %c0_93 = arith.constant 0 : index
    %c0_94 = arith.constant 0 : index
    %81 = vector.load %arg7[%c0_93, %c0_94] : memref<1x128xf32, #tpu.memory_space<vmem>>, vector<1x128xf32>
    %82 = vector.broadcast %81 : vector<1x128xf32> to vector<80x128xf32>
    %83 = arith.mulf %80, %82 : vector<80x128xf32>
    %84 = arith.addf %76, %83 : vector<80x128xf32>
    %c0_95 = arith.constant 0 : index
    %c0_96 = arith.constant 0 : index
    %85 = vector.load %arg8[%c0_95, %c0_96] : memref<1x128xf32, #tpu.memory_space<vmem>>, vector<1x128xf32>
    %86 = vector.broadcast %85 : vector<1x128xf32> to vector<80x128xf32>
    %87 = arith.addf %84, %86 : vector<80x128xf32>
    %cst_97 = arith.constant 0.000000e+00 : f32
    %cst_98 = arith.constant 6.000000e+00 : f32
    %88 = vector.broadcast %cst_97 : f32 to vector<80x128xf32>
    %89 = arith.maximumf %88, %87 : vector<80x128xf32>
    %90 = vector.broadcast %cst_98 : f32 to vector<80x128xf32>
    %91 = arith.minimumf %90, %89 : vector<80x128xf32>
    %c0_99 = arith.constant 0 : index
    %c0_100 = arith.constant 0 : index
    %c0_101 = arith.constant 0 : index
    %92 = vector.load %arg9[%c0_99, %c0_100, %c0_101] : memref<1x80x128xf32, #tpu.memory_space<vmem>>, vector<1x80x128xf32>
    %93 = vector.shape_cast %92 : vector<1x80x128xf32> to vector<80x128xf32>
    %94 = vector.shape_cast %91 : vector<80x128xf32> to vector<1x80x128xf32>
    tpu.vector_store %arg9[%c0_99, %c0_100, %c0_101], %94 {strides = array<i32>} : memref<1x80x128xf32, #tpu.memory_space<vmem>>, vector<1x80x128xf32>,
    return
  }
  func.func @transform_0(%arg0: i32) -> (i32, i32, i32) {
    %c0_i32 = arith.constant 0 : i32
    %c0_i32_0 = arith.constant 0 : i32
    %c0_i32_1 = arith.constant 0 : i32
    return %arg0, %c0_i32, %c0_i32_0 : i32, i32, i32
  }
  func.func @transform_1(%arg0: i32) -> (i32, i32, i32) {
    %c0_i32 = arith.constant 0 : i32
    %c0_i32_0 = arith.constant 0 : i32
    %c0_i32_1 = arith.constant 0 : i32
    %c0_i32_2 = arith.constant 0 : i32
    return %c0_i32, %c0_i32_0, %c0_i32_1 : i32, i32, i32
  }
  func.func @transform_2(%arg0: i32) -> (i32, i32) {
    %c0_i32 = arith.constant 0 : i32
    %c0_i32_0 = arith.constant 0 : i32
    %c0_i32_1 = arith.constant 0 : i32
    return %c0_i32, %c0_i32_0 : i32, i32
  }
  func.func @transform_3(%arg0: i32) -> (i32, i32) {
    %c0_i32 = arith.constant 0 : i32
    %c0_i32_0 = arith.constant 0 : i32
    %c0_i32_1 = arith.constant 0 : i32
    return %c0_i32, %c0_i32_0 : i32, i32
  }
  func.func @transform_4(%arg0: i32) -> (i32, i32, i32) {
    %c0_i32 = arith.constant 0 : i32
    %c0_i32_0 = arith.constant 0 : i32
    %c0_i32_1 = arith.constant 0 : i32
    return %arg0, %c0_i32, %c0_i32_0 : i32, i32, i32
  }
  func.func @transform_5(%arg0: i32) -> (i32, i32) {
    %c0_i32 = arith.constant 0 : i32
    %c0_i32_0 = arith.constant 0 : i32
    %c0_i32_1 = arith.constant 0 : i32
    return %c0_i32, %c0_i32_0 : i32, i32
  }
  func.func @transform_6(%arg0: i32) -> (i32, i32) {
    %c0_i32 = arith.constant 0 : i32
    %c0_i32_0 = arith.constant 0 : i32
    %c0_i32_1 = arith.constant 0 : i32
    return %c0_i32, %c0_i32_0 : i32, i32
  }
  func.func @transform_7(%arg0: i32) -> (i32, i32) {
    %c0_i32 = arith.constant 0 : i32
    %c0_i32_0 = arith.constant 0 : i32
    %c0_i32_1 = arith.constant 0 : i32
    return %c0_i32, %c0_i32_0 : i32, i32
  }
  func.func @transform_8(%arg0: i32) -> (i32, i32, i32) {
    %c0_i32 = arith.constant 0 : i32
    %c0_i32_0 = arith.constant 0 : i32
    %c0_i32_1 = arith.constant 0 : i32
    return %arg0, %c0_i32, %c0_i32_0 : i32, i32, i32
  }
}

</mosaic_0001>

<llo_original>
// kernel: basic_block_forward.2
$region0: #{basic_block_forward.2}
  #allocation0 [shape = 'u32[]', space=smem, size = 0x4, offset = 0x4, fixed_abs, tag = 'smem constant byte address 0x4 - core index']
  #allocation1 [shape = 'u32[144,128]{1,0:T(1,128)}', space=vmem, size = 0x12000, scoped, tag = 'internal scratch']
  %s0 = inlined_call_operand.vmem [shape: bf16[128,36], index: 0, kind: input, shape index: {}]
  %s1 = inlined_call_operand.vmem [shape: bf16[36,128], index: 1, kind: input, shape index: {}]
  %s2 = inlined_call_operand.vmem [shape: f32[1,128], index: 2, kind: input, shape index: {}]
  %s3 = inlined_call_operand.vmem [shape: f32[1,128], index: 3, kind: input, shape index: {}]
  %s4 = inlined_call_operand.vmem [shape: bf16[128,128], index: 4, kind: output, shape index: {}]
  %s5 = sld [smem:[#allocation0]]
  $region26: #{basic_block_forward.2} parent=0
    _
  %s7 = ssub.s32 1, %s5
  %s8 = scalar_select 0, %s7, %s5
  // Predicated region
  $region2: #{basic_block_forward.2} parent=0 // pred_check
    _
  $region3: #{basic_block_forward.2} parent=0 // pred_check_branch
    %10 = sbr.rel (0) target = $region5
  $region4: #{basic_block_forward.2} parent=0 // pred_region
    _
  $region5: #{basic_block_forward.2} parent=0 // pred_fallthru
    _
  // Predicated region
  $region6: #{basic_block_forward.2} parent=0 // pred_check
    _
  $region7: #{basic_block_forward.2} parent=0 // pred_check_branch
    %12 = sbr.rel (0) target = $region9
  $region8: #{basic_block_forward.2} parent=0 // pred_region
    _
  $region9: #{basic_block_forward.2} parent=0 // pred_fallthru
    _
  // Predicated region
  $region10: #{basic_block_forward.2} parent=0 // pred_check
    _
  $region11: #{basic_block_forward.2} parent=0 // pred_check_branch
    %14 = sbr.rel (0) target = $region13
  $region12: #{basic_block_forward.2} parent=0 // pred_region
    _
  $region13: #{basic_block_forward.2} parent=0 // pred_fallthru
    _
  // Predicated region
  $region14: #{basic_block_forward.2} parent=0 // pred_check
    _
  $region15: #{basic_block_forward.2} parent=0 // pred_check_branch
    %16 = sbr.rel (0) target = $region17
  $region16: #{basic_block_forward.2} parent=0 // pred_region
    _
  $region17: #{basic_block_forward.2} parent=0 // pred_fallthru
    _
  %v18 = vld [vmem:[%s0] sm:$0xf]
  %v19 = vld [vmem:[%s0 + $0x4] sm:$0xf]
  %v20 = vld [vmem:[%s0 + $0x8] sm:$0xf]
  %v21 = vld [vmem:[%s0 + $0xc] sm:$0xf]
  %v22 = vld [vmem:[%s0 + $0x10] sm:$0xf]
  %v23 = vld [vmem:[%s0 + $0x14] sm:$0xf]
  %v24 = vld [vmem:[%s0 + $0x18] sm:$0xf]
  %v25 = vld [vmem:[%s0 + $0x1c] sm:$0xf]
  %v26 = vld [vmem:[%s0 + $0x20] sm:$0xf]
  %v27 = vld [vmem:[%s0 + $0x24] sm:$0xf]
  %v28 = vld [vmem:[%s0 + $0x28] sm:$0xf]
  %v29 = vld [vmem:[%s0 + $0x2c] sm:$0xf]
  %v30 = vld [vmem:[%s0 + $0x30] sm:$0xf]
  %v31 = vld [vmem:[%s0 + $0x34] sm:$0xf]
  %v32 = vld [vmem:[%s0 + $0x38] sm:$0xf]
  %v33 = vld [vmem:[%s0 + $0x3c] sm:$0xf]
  %v34 = vld [vmem:[%s1] sm:$0xf]
  %v35 = vld [vmem:[%s1 + $0x4] sm:$0xf]
  %v36 = vld [vmem:[%s1 + $0x8] sm:$0xf]
  %v37 = vld [vmem:[%s1 + $0xc] sm:$0xf]
  %v38 = vld [vmem:[%s1 + $0x10] sm:$0x3]
  %v55 = vunpack.c.l.b16 %v18
  %v56 = vunpack.c.l.b16 %v19
  %v57 = vunpack.c.l.b16 %v20
  %v58 = vunpack.c.l.b16 %v21
  %v59 = vunpack.c.l.b16 %v22
  %v60 = vunpack.c.l.b16 %v23
  %v61 = vunpack.c.l.b16 %v24
  %v62 = vunpack.c.l.b16 %v25
  %v63 = vunpack.c.l.b16 %v26
  %v64 = vunpack.c.l.b16 %v27
  %v65 = vunpack.c.l.b16 %v28
  %v66 = vunpack.c.l.b16 %v29
  %v67 = vunpack.c.l.b16 %v30
  %v68 = vunpack.c.l.b16 %v31
  %v69 = vunpack.c.l.b16 %v32
  %v70 = vunpack.c.l.b16 %v33
  %v71 = vpack.c.b16 %v56, %v55
  %v72 = vpack.c.b16 %v58, %v57
  %v73 = vpack.c.b16 %v60, %v59
  %v74 = vpack.c.b16 %v62, %v61
  %v75 = vpack.c.b16 %v64, %v63
  %v76 = vpack.c.b16 %v66, %v65
  %v77 = vpack.c.b16 %v68, %v67
  %v78 = vpack.c.b16 %v70, %v69
  %v84 = vunpack.c.l.b16 %v34
  %v85 = vunpack.c.l.b16 %v35
  %v86 = vunpack.c.l.b16 %v36
  %v87 = vunpack.c.l.b16 %v37
  %v88 = vunpack.c.l.b16 %v38
  %v89 = vpack.c.b16 %v85, %v84
  %v90 = vpack.c.b16 %v87, %v86
  %v91 = vpack.c.b16 %v88, %v88
  %vm94 = vcmask 293888
  %v96 = vsel %vm94, %v71, 0
  %v99 = vsel %vm94, %v72, 0
  %v102 = vsel %vm94, %v73, 0
  %v105 = vsel %vm94, %v74, 0
  %v108 = vsel %vm94, %v75, 0
  %v111 = vsel %vm94, %v76, 0
  %v114 = vsel %vm94, %v77, 0
  %v117 = vsel %vm94, %v78, 0
  %vm119 = vcmask 1041408
  %v121 = vsel %vm119, %v91, 0
  %123 = vmatprep.subr.bf16.mxu0 0
  %124 = vmatpush1.bf16.msra.mxu0 0
  %125 = vmatprep.subr.bf16.mxu0 0
  %126 = vmatpush1.bf16.msra.mxu0 0
  %127 = vmatprep.subr.bf16.mxu0 0
  %128 = vmatpush1.bf16.msra.mxu0 0
  %129 = vmatprep.subr.bf16.mxu0 0
  %130 = vmatpush1.bf16.msra.mxu0 0
  %131 = vmatprep.subr.bf16.mxu0 0
  %132 = vmatpush1.bf16.msra.mxu0 0
  %133 = vmatprep.subr.bf16.mxu0 0
  %134 = vmatpush1.bf16.msra.mxu0 %v121
  %135 = vmatprep.subr.bf16.mxu0 0
  %136 = vmatpush1.bf16.msra.mxu0 %v90
  %137 = vmatprep.subr.bf16.mxu0 0
  %138 = vmatpush1.bf16.msra.mxu0 %v89
  %139 = vmatprep.subr.bf16.mxu0 0
  %140 = vmatpush2.bf16.msra.mxu0 0
  %141 = vmatprep.subr.bf16.mxu0 0
  %142 = vmatpush2.bf16.msra.mxu0 0
  %143 = vmatprep.subr.bf16.mxu0 0
  %144 = vmatpush2.bf16.msra.mxu0 0
  %145 = vmatprep.subr.bf16.mxu0 0
  %146 = vmatpush2.bf16.msra.mxu0 0
  %147 = vmatprep.subr.bf16.mxu0 0
  %148 = vmatpush2.bf16.msra.mxu0 0
  %149 = vmatprep.subr.bf16.mxu0 0
  %150 = vmatpush2.bf16.msra.mxu0 0
  %151 = vmatprep.subr.bf16.mxu0 0
  %152 = vmatpush2.bf16.msra.mxu0 0
  %153 = vmatprep.subr.bf16.mxu0 0
  %154 = vmatpush2.bf16.msra.mxu0 0
  %155 = vmatprep.mubr.bf16.mxu0 0
  %156 = vmatmul.mubr.bf16.gmra.mxu0 %v96
  %v157 = vpop.f32.mrf.mxu0
  %v158 = vadd.f32 0.0, %v157
  %v159 = vpop.f32.mrf.mxu0
  %v160 = vpop.f32.mrf.mxu0
  %v161 = vadd.f32 0.0, %v160
  %v162 = vpop.f32.mrf.mxu0
  %163 = vmatprep.mubr.bf16.mxu0 0
  %164 = vmatmul.mubr.bf16.gmra.mxu0 %v99
  %v165 = vpop.f32.mrf.mxu0
  %v166 = vadd.f32 0.0, %v165
  %v167 = vpop.f32.mrf.mxu0
  %v168 = vpop.f32.mrf.mxu0
  %v169 = vadd.f32 0.0, %v168
  %v170 = vpop.f32.mrf.mxu0
  %171 = vmatprep.mubr.bf16.mxu0 0
  %172 = vmatmul.mubr.bf16.gmra.mxu0 %v102
  %v173 = vpop.f32.mrf.mxu0
  %v174 = vadd.f32 0.0, %v173
  %v175 = vpop.f32.mrf.mxu0
  %v176 = vpop.f32.mrf.mxu0
  %v177 = vadd.f32 0.0, %v176
  %v178 = vpop.f32.mrf.mxu0
  %179 = vmatprep.mubr.bf16.mxu0 0
  %180 = vmatmul.mubr.bf16.gmra.mxu0 %v105
  %v181 = vpop.f32.mrf.mxu0
  %v182 = vadd.f32 0.0, %v181
  %v183 = vpop.f32.mrf.mxu0
  %v184 = vpop.f32.mrf.mxu0
  %v185 = vadd.f32 0.0, %v184
  %v186 = vpop.f32.mrf.mxu0
  %187 = vmatprep.mubr.bf16.mxu0 0
  %188 = vmatmul.mubr.bf16.gmra.mxu0 %v108
  %v189 = vpop.f32.mrf.mxu0
  %v190 = vadd.f32 0.0, %v189
  %v191 = vpop.f32.mrf.mxu0
  %v192 = vpop.f32.mrf.mxu0
  %v193 = vadd.f32 0.0, %v192
  %v194 = vpop.f32.mrf.mxu0
  %195 = vmatprep.mubr.bf16.mxu0 0
  %196 = vmatmul.mubr.bf16.gmra.mxu0 %v111
  %v197 = vpop.f32.mrf.mxu0
  %v198 = vadd.f32 0.0, %v197
  %v199 = vpop.f32.mrf.mxu0
  %v200 = vpop.f32.mrf.mxu0
  %v201 = vadd.f32 0.0, %v200
  %v202 = vpop.f32.mrf.mxu0
  %203 = vmatprep.mubr.bf16.mxu0 0
  %204 = vmatmul.mubr.bf16.gmra.mxu0 %v114
  %v205 = vpop.f32.mrf.mxu0
  %v206 = vadd.f32 0.0, %v205
  %v207 = vpop.f32.mrf.mxu0
  %v208 = vpop.f32.mrf.mxu0
  %v209 = vadd.f32 0.0, %v208
  %v210 = vpop.f32.mrf.mxu0
  %211 = vmatprep.mubr.bf16.mxu0 0
  %212 = vmatmul.mubr.bf16.gmra.mxu0 %v117
  %v213 = vpop.f32.mrf.mxu0
  %v214 = vadd.f32 0.0, %v213
  %v215 = vpop.f32.mrf.mxu0
  %v216 = vpop.f32.mrf.mxu0
  %v217 = vadd.f32 0.0, %v216
  %v218 = vpop.f32.mrf.mxu0
  %219 = vdwg.mxu0
  %v220 = vld [vmem:[%s2] sm:$0x1]
  %v222 = vlaneseq
  %v223 = vshrl.u32 %v222, 7
  %v224 = vsub.s32 0, %v223
  %v225 = vrot.slane %v220, %v224
  %v227 = vmul.f32 %v158, %v225
  %v228 = vmul.f32 %v161, %v225
  %v229 = vmul.f32 %v166, %v225
  %v230 = vmul.f32 %v169, %v225
  %v231 = vmul.f32 %v174, %v225
  %v232 = vmul.f32 %v177, %v225
  %v233 = vmul.f32 %v182, %v225
  %v234 = vmul.f32 %v185, %v225
  %v235 = vmul.f32 %v190, %v225
  %v236 = vmul.f32 %v193, %v225
  %v237 = vmul.f32 %v198, %v225
  %v238 = vmul.f32 %v201, %v225
  %v239 = vmul.f32 %v206, %v225
  %v240 = vmul.f32 %v209, %v225
  %v241 = vmul.f32 %v214, %v225
  %v242 = vmul.f32 %v217, %v225
  %v243 = vld [vmem:[%s3] sm:$0x1]
  %v245 = vlaneseq
  %v246 = vshrl.u32 %v245, 7
  %v247 = vsub.s32 0, %v246
  %v248 = vrot.slane %v243, %v247
  %v250 = vadd.f32 %v227, %v248
  %v251 = vadd.f32 %v228, %v248
  %v252 = vadd.f32 %v229, %v248
  %v253 = vadd.f32 %v230, %v248
  %v254 = vadd.f32 %v231, %v248
  %v255 = vadd.f32 %v232, %v248
  %v256 = vadd.f32 %v233, %v248
  %v257 = vadd.f32 %v234, %v248
  %v258 = vadd.f32 %v235, %v248
  %v259 = vadd.f32 %v236, %v248
  %v260 = vadd.f32 %v237, %v248
  %v261 = vadd.f32 %v238, %v248
  %v262 = vadd.f32 %v239, %v248
  %v263 = vadd.f32 %v240, %v248
  %v264 = vadd.f32 %v241, %v248
  %v265 = vadd.f32 %v242, %v248
  %v266 = vmax.f32 %v250, 0.0
  %v267 = vmax.f32 %v251, 0.0
  %v268 = vmax.f32 %v252, 0.0
  %v269 = vmax.f32 %v253, 0.0
  %v270 = vmax.f32 %v254, 0.0
  %v271 = vmax.f32 %v255, 0.0
  %v272 = vmax.f32 %v256, 0.0
  %v273 = vmax.f32 %v257, 0.0
  %v274 = vmax.f32 %v258, 0.0
  %v275 = vmax.f32 %v259, 0.0
  %v276 = vmax.f32 %v260, 0.0
  %v277 = vmax.f32 %v261, 0.0
  %v278 = vmax.f32 %v262, 0.0
  %v279 = vmax.f32 %v263, 0.0
  %v280 = vmax.f32 %v264, 0.0
  %v281 = vmax.f32 %v265, 0.0
  %v282 = vmin.f32 %v266, 6.0
  %v283 = vmin.f32 %v267, 6.0
  %v284 = vmin.f32 %v268, 6.0
  %v285 = vmin.f32 %v269, 6.0
  %v286 = vmin.f32 %v270, 6.0
  %v287 = vmin.f32 %v271, 6.0
  %v288 = vmin.f32 %v272, 6.0
  %v289 = vmin.f32 %v273, 6.0
  %v290 = vmin.f32 %v274, 6.0
  %v291 = vmin.f32 %v275, 6.0
  %v292 = vmin.f32 %v276, 6.0
  %v293 = vmin.f32 %v277, 6.0
  %v294 = vmin.f32 %v278, 6.0
  %v295 = vmin.f32 %v279, 6.0
  %v296 = vmin.f32 %v280, 6.0
  %v297 = vmin.f32 %v281, 6.0
  %v298 = vpack.c.bf16 %v283, %v282
  %v299 = vpack.c.bf16 %v285, %v284
  %v300 = vpack.c.bf16 %v287, %v286
  %v301 = vpack.c.bf16 %v289, %v288
  %v302 = vpack.c.bf16 %v291, %v290
  %v303 = vpack.c.bf16 %v293, %v292
  %v304 = vpack.c.bf16 %v295, %v294
  %v305 = vpack.c.bf16 %v297, %v296
  %v314 = vunpack.c.l.b16 %v298
  %v315 = vunpack.c.h.b16 %v298
  %v316 = vunpack.c.l.b16 %v299
  %v317 = vunpack.c.h.b16 %v299
  %v318 = vunpack.c.l.b16 %v300
  %v319 = vunpack.c.h.b16 %v300
  %v320 = vunpack.c.l.b16 %v301
  %v321 = vunpack.c.h.b16 %v301
  %v322 = vunpack.c.l.b16 %v302
  %v323 = vunpack.c.h.b16 %v302
  %v324 = vunpack.c.l.b16 %v303
  %v325 = vunpack.c.h.b16 %v303
  %v326 = vunpack.c.l.b16 %v304
  %v327 = vunpack.c.h.b16 %v304
  %v328 = vunpack.c.l.b16 %v305
  %v329 = vunpack.c.h.b16 %v305
  %v330 = vpack.c.b16 %v314, %v314
  %v331 = vpack.c.b16 %v315, %v315
  %v332 = vpack.c.b16 %v316, %v316
  %v333 = vpack.c.b16 %v317, %v317
  %v334 = vpack.c.b16 %v318, %v318
  %v335 = vpack.c.b16 %v319, %v319
  %v336 = vpack.c.b16 %v320, %v320
  %v337 = vpack.c.b16 %v321, %v321
  %v338 = vpack.c.b16 %v322, %v322
  %v339 = vpack.c.b16 %v323, %v323
  %v340 = vpack.c.b16 %v324, %v324
  %v341 = vpack.c.b16 %v325, %v325
  %v342 = vpack.c.b16 %v326, %v326
  %v343 = vpack.c.b16 %v327, %v327
  %v344 = vpack.c.b16 %v328, %v328
  %v345 = vpack.c.b16 %v329, %v329
  %362 = vst [vmem:[%s4] sm:$0xf] %v330
  %363 = vst [vmem:[%s4 + $0x4] sm:$0xf] %v331
  %364 = vst [vmem:[%s4 + $0x8] sm:$0xf] %v332
  %365 = vst [vmem:[%s4 + $0xc] sm:$0xf] %v333
  %366 = vst [vmem:[%s4 + $0x10] sm:$0xf] %v334
  %367 = vst [vmem:[%s4 + $0x14] sm:$0xf] %v335
  %368 = vst [vmem:[%s4 + $0x18] sm:$0xf] %v336
  %369 = vst [vmem:[%s4 + $0x1c] sm:$0xf] %v337
  %370 = vst [vmem:[%s4 + $0x20] sm:$0xf] %v338
  %371 = vst [vmem:[%s4 + $0x24] sm:$0xf] %v339
  %372 = vst [vmem:[%s4 + $0x28] sm:$0xf] %v340
  %373 = vst [vmem:[%s4 + $0x2c] sm:$0xf] %v341
  %374 = vst [vmem:[%s4 + $0x30] sm:$0xf] %v342
  %375 = vst [vmem:[%s4 + $0x34] sm:$0xf] %v343
  %376 = vst [vmem:[%s4 + $0x38] sm:$0xf] %v344
  %377 = vst [vmem:[%s4 + $0x3c] sm:$0xf] %v345
  // Predicated region
  $region18: #{basic_block_forward.2} parent=0 // pred_check
    _
  $region19: #{basic_block_forward.2} parent=0 // pred_check_branch
    %379 = sbr.rel (0) target = $region21
  $region20: #{basic_block_forward.2} parent=0 // pred_region
    _
  $region21: #{basic_block_forward.2} parent=0 // pred_fallthru
    _
  // Predicated region
  $region22: #{basic_block_forward.2} parent=0 // pred_check
    _
  $region23: #{basic_block_forward.2} parent=0 // pred_check_branch
    %381 = sbr.rel (0) target = $region25
  $region24: #{basic_block_forward.2} parent=0 // pred_region
    _
  $region25: #{basic_block_forward.2} parent=0 // pred_fallthru
    _

// kernel: basic_block_forward.3
$region0: #{basic_block_forward.3}
  #allocation0 [shape = 'u32[]', space=smem, size = 0x4, offset = 0x4, fixed_abs, tag = 'smem constant byte address 0x4 - core index']
  #allocation1 [shape = 'u32[144,128]{1,0:T(1,128)}', space=vmem, size = 0x12000, scoped, tag = 'internal scratch']
  #allocation2 [shape = 'f32[80,128]{1,0:T(8,128)}', space=vmem, size = 0xa000, scoped, tag = 'scratch operand']
  %s0 = inlined_call_operand.vmem [shape: bf16[2,110,128], index: 0, kind: input, shape index: {}]
  %s1 = inlined_call_operand.vmem [shape: bf16[9,128,128], index: 1, kind: input, shape index: {}]
  %s2 = inlined_call_operand.vmem [shape: f32[1,128], index: 2, kind: input, shape index: {}]
  %s3 = inlined_call_operand.vmem [shape: f32[1,128], index: 3, kind: input, shape index: {}]
  %s4 = inlined_call_operand.vmem [shape: bf16[2,80,4], index: 4, kind: input, shape index: {}]
  %s5 = inlined_call_operand.vmem [shape: bf16[4,128], index: 5, kind: input, shape index: {}]
  %s6 = inlined_call_operand.vmem [shape: f32[1,128], index: 6, kind: input, shape index: {}]
  %s7 = inlined_call_operand.vmem [shape: f32[1,128], index: 7, kind: input, shape index: {}]
  %s8 = inlined_call_operand.vmem [shape: f32[2,80,128], index: 8, kind: output, shape index: {}]
  %s9 = sld [smem:[#allocation0]]
  $region65: #{basic_block_forward.3} parent=0
    _
  %s11 = ssub.s32 1, %s9
  %s12 = scalar_select 0, %s11, %s9
  loop: start=0, step=1, limit=4
  $region2: #{basic_block_forward.3} parent=0 // loop_pre_header
    _
  $region3: #{basic_block_forward.3} parent=0 // loop_header
    %s14 = sphi 0, %s18
    %p15 = scmp.ge.s32.totalorder %s14, 4
    %s24 = sphi 0, %s26
    %s27 = sphi 0, %s24
    %s28 = sphi 0, %s27
    %s44 = sphi 0, %s28
    %s48 = sphi 0, %s48
    %s50 = sphi 0, %s48
    %s51 = sphi 0, %s50
    %s65 = sphi 0, %s51
    %s69 = sphi 0, %s69
    %s71 = sphi 0, %s69
    %s72 = sphi 0, %s71
    %s86 = sphi 0, %s72
    %s90 = sphi 0, %s90
    %s92 = sphi 0, %s90
    %s93 = sphi 0, %s92
    %s107 = sphi 0, %s93
    %s113 = sphi 0, %s115
    %s116 = sphi 0, %s113
    %s117 = sphi 0, %s116
    %s133 = sphi 0, %s117
    %s137 = sphi 0, %s137
    %s139 = sphi 0, %s137
    %s140 = sphi 0, %s139
    %s154 = sphi 0, %s140
    %s158 = sphi 0, %s158
    %s160 = sphi 0, %s158
    %s161 = sphi 0, %s160
    %s175 = sphi 0, %s161
    %s179 = sphi 0, %s179
    %s181 = sphi 0, %s179
    %s182 = sphi 0, %s181
    %s196 = sphi 0, %s182
    %s202 = sphi 0, %s204
    %s205 = sphi 0, %s202
    %s206 = sphi 0, %s205
    %s222 = sphi 0, %s206
  $region4: #{basic_block_forward.3} parent=0 // loop_header_branch
    %17 = sbr.rel (%p15) target = $region8
  $region5: #{basic_block_forward.3} parent=0 // loop_body
    %s19 = ssub.s32 %s14, 1
    %s20 = ssub.s32 %s14, 2
    %s21 = sadd.s32 %s14, 1
    %s22 = ssub.s32 %s14, %s21
    %p23 = scmp.eq.s32.totalorder %s22, 0
    %s25 = sadd.s32 %s24, 1
    %s26 = scalar_select %p23, %s24, %s25
    %p29 = pneg %p23
    %p30 = scmp.eq.s32.totalorder %s14, 1
    %p31 = por %p29, %p30
    %p32 = scmp.ne.s32.totalorder %s24, %s27
    %p33 = scmp.eq.s32.totalorder %s14, 0
    %p34 = por %p32, %p33
    %p35 = scmp.ne.s32.totalorder %s24, %s27
    %p36 = scmp.eq.s32.totalorder %s19, 1
    %p37 = por %p35, %p36
    %p38 = scmp.ne.s32.totalorder %s27, %s28
    %p39 = scmp.eq.s32.totalorder %s19, 0
    %p40 = por %p38, %p39
    %p41 = scmp.ne.s32.totalorder %s27, %s28
    %p42 = scmp.eq.s32.totalorder %s20, 1
    %p43 = por %p41, %p42
    %p45 = scmp.ne.s32.totalorder %s28, %s44
    %p46 = scmp.eq.s32.totalorder %s20, 0
    %p47 = por %p45, %p46
    %s49 = sadd.s32 %s48, 1
    %p52 = scmp.eq.s32.totalorder %s14, 1
    %p53 = scmp.ne.s32.totalorder %s48, %s50
    %p54 = scmp.eq.s32.totalorder %s14, 0
    %p55 = por %p53, %p54
    %p56 = scmp.ne.s32.totalorder %s48, %s50
    %p57 = scmp.eq.s32.totalorder %s19, 1
    %p58 = por %p56, %p57
    %p59 = scmp.ne.s32.totalorder %s50, %s51
    %p60 = scmp.eq.s32.totalorder %s19, 0
    %p61 = por %p59, %p60
    %p62 = scmp.ne.s32.totalorder %s50, %s51
    %p63 = scmp.eq.s32.totalorder %s20, 1
    %p64 = por %p62, %p63
    %p66 = scmp.ne.s32.totalorder %s51, %s65
    %p67 = scmp.eq.s32.totalorder %s20, 0
    %p68 = por %p66, %p67
    %s70 = sadd.s32 %s69, 1
    %p73 = scmp.eq.s32.totalorder %s14, 1
    %p74 = scmp.ne.s32.totalorder %s69, %s71
    %p75 = scmp.eq.s32.totalorder %s14, 0
    %p76 = por %p74, %p75
    %p77 = scmp.ne.s32.totalorder %s69, %s71
    %p78 = scmp.eq.s32.totalorder %s19, 1
    %p79 = por %p77, %p78
    %p80 = scmp.ne.s32.totalorder %s71, %s72
    %p81 = scmp.eq.s32.totalorder %s19, 0
    %p82 = por %p80, %p81
    %p83 = scmp.ne.s32.totalorder %s71, %s72
    %p84 = scmp.eq.s32.totalorder %s20, 1
    %p85 = por %p83, %p84
    %p87 = scmp.ne.s32.totalorder %s72, %s86
    %p88 = scmp.eq.s32.totalorder %s20, 0
    %p89 = por %p87, %p88
    %s91 = sadd.s32 %s90, 1
    %p94 = scmp.eq.s32.totalorder %s14, 1
    %p95 = scmp.ne.s32.totalorder %s90, %s92
    %p96 = scmp.eq.s32.totalorder %s14, 0
    %p97 = por %p95, %p96
    %p98 = scmp.ne.s32.totalorder %s90, %s92
    %p99 = scmp.eq.s32.totalorder %s19, 1
    %p100 = por %p98, %p99
    %p101 = scmp.ne.s32.totalorder %s92, %s93
    %p102 = scmp.eq.s32.totalorder %s19, 0
    %p103 = por %p101, %p102
    %p104 = scmp.ne.s32.totalorder %s92, %s93
    %p105 = scmp.eq.s32.totalorder %s20, 1
    %p106 = por %p104, %p105
    %p108 = scmp.ne.s32.totalorder %s93, %s107
    %p109 = scmp.eq.s32.totalorder %s20, 0
    %p110 = por %p108, %p109
    %s111 = ssub.s32 %s14, %s21
    %p112 = scmp.eq.s32.totalorder %s111, 0
    %s114 = sadd.s32 %s113, 1
    %s115 = scalar_select %p112, %s113, %s114
    %p118 = pneg %p112
    %p119 = scmp.eq.s32.totalorder %s14, 1
    %p120 = por %p118, %p119
    %p121 = scmp.ne.s32.totalorder %s113, %s116
    %p122 = scmp.eq.s32.totalorder %s14, 0
    %p123 = por %p121, %p122
    %p124 = scmp.ne.s32.totalorder %s113, %s116
    %p125 = scmp.eq.s32.totalorder %s19, 1
    %p126 = por %p124, %p125
    %p127 = scmp.ne.s32.totalorder %s116, %s117
    %p128 = scmp.eq.s32.totalorder %s19, 0
    %p129 = por %p127, %p128
    %p130 = scmp.ne.s32.totalorder %s116, %s117
    %p131 = scmp.eq.s32.totalorder %s20, 1
    %p132 = por %p130, %p131
    %p134 = scmp.ne.s32.totalorder %s117, %s133
    %p135 = scmp.eq.s32.totalorder %s20, 0
    %p136 = por %p134, %p135
    %s138 = sadd.s32 %s137, 1
    %p141 = scmp.eq.s32.totalorder %s14, 1
    %p142 = scmp.ne.s32.totalorder %s137, %s139
    %p143 = scmp.eq.s32.totalorder %s14, 0
    %p144 = por %p142, %p143
    %p145 = scmp.ne.s32.totalorder %s137, %s139
    %p146 = scmp.eq.s32.totalorder %s19, 1
    %p147 = por %p145, %p146
    %p148 = scmp.ne.s32.totalorder %s139, %s140
    %p149 = scmp.eq.s32.totalorder %s19, 0
    %p150 = por %p148, %p149
    %p151 = scmp.ne.s32.totalorder %s139, %s140
    %p152 = scmp.eq.s32.totalorder %s20, 1
    %p153 = por %p151, %p152
    %p155 = scmp.ne.s32.totalorder %s140, %s154
    %p156 = scmp.eq.s32.totalorder %s20, 0
    %p157 = por %p155, %p156
    %s159 = sadd.s32 %s158, 1
    %p162 = scmp.eq.s32.totalorder %s14, 1
    %p163 = scmp.ne.s32.totalorder %s158, %s160
    %p164 = scmp.eq.s32.totalorder %s14, 0
    %p165 = por %p163, %p164
    %p166 = scmp.ne.s32.totalorder %s158, %s160
    %p167 = scmp.eq.s32.totalorder %s19, 1
    %p168 = por %p166, %p167
    %p169 = scmp.ne.s32.totalorder %s160, %s161
    %p170 = scmp.eq.s32.totalorder %s19, 0
    %p171 = por %p169, %p170
    %p172 = scmp.ne.s32.totalorder %s160, %s161
    %p173 = scmp.eq.s32.totalorder %s20, 1
    %p174 = por %p172, %p173
    %p176 = scmp.ne.s32.totalorder %s161, %s175
    %p177 = scmp.eq.s32.totalorder %s20, 0
    %p178 = por %p176, %p177
    %s180 = sadd.s32 %s179, 1
    %p183 = scmp.eq.s32.totalorder %s14, 1
    %p184 = scmp.ne.s32.totalorder %s179, %s181
    %p185 = scmp.eq.s32.totalorder %s14, 0
    %p186 = por %p184, %p185
    %p187 = scmp.ne.s32.totalorder %s179, %s181
    %p188 = scmp.eq.s32.totalorder %s19, 1
    %p189 = por %p187, %p188
    %p190 = scmp.ne.s32.totalorder %s181, %s182
    %p191 = scmp.eq.s32.totalorder %s19, 0
    %p192 = por %p190, %p191
    %p193 = scmp.ne.s32.totalorder %s181, %s182
    %p194 = scmp.eq.s32.totalorder %s20, 1
    %p195 = por %p193, %p194
    %p197 = scmp.ne.s32.totalorder %s182, %s196
    %p198 = scmp.eq.s32.totalorder %s20, 0
    %p199 = por %p197, %p198
    %s200 = ssub.s32 %s14, %s21
    %p201 = scmp.eq.s32.totalorder %s200, 0
    %s203 = sadd.s32 %s202, 1
    %s204 = scalar_select %p201, %s202, %s203
    %p207 = pneg %p201
    %p208 = scmp.eq.s32.totalorder %s14, 1
    %p209 = por %p207, %p208
    %p210 = scmp.ne.s32.totalorder %s202, %s205
    %p211 = scmp.eq.s32.totalorder %s14, 0
    %p212 = por %p210, %p211
    %p213 = scmp.ne.s32.totalorder %s202, %s205
    %p214 = scmp.eq.s32.totalorder %s19, 1
    %p215 = por %p213, %p214
    %p216 = scmp.ne.s32.totalorder %s205, %s206
    %p217 = scmp.eq.s32.totalorder %s19, 0
    %p218 = por %p216, %p217
    %p219 = scmp.ne.s32.totalorder %s205, %s206
    %p220 = scmp.eq.s32.totalorder %s20, 1
    %p221 = por %p219, %p220
    %p223 = scmp.ne.s32.totalorder %s206, %s222
    %p224 = scmp.eq.s32.totalorder %s20, 0
    %p225 = por %p223, %p224
    %p226 = scmp.le.s32.totalorder 1, %s14
    %p227 = scmp.lt.s32.totalorder %s14, 3
    %p228 = pnand %p226, %p227
    %p229 = pneg %p228
    // Predicated region
    $region9: #{basic_block_forward.3} parent=5 // pred_check
      _
    $region10: #{basic_block_forward.3} parent=5 // pred_check_branch
      %231 = sbr.rel (%p228) target = $region12
    $region11: #{basic_block_forward.3} parent=5 // pred_region
      %s232 = ssub.s32 %s14, 1
      // Predicated region
      $region13: #{basic_block_forward.3} parent=11 // pred_check
        %p233 = pneg %p61
      $region14: #{basic_block_forward.3} parent=11 // pred_check_branch
        %235 = sbr.rel (%p233) target = $region16
      $region15: #{basic_block_forward.3} parent=11 // pred_region
        _
      $region16: #{basic_block_forward.3} parent=11 // pred_fallthru
        _
      // Predicated region
      $region17: #{basic_block_forward.3} parent=11 // pred_check
        %p236 = pneg %p82
      $region18: #{basic_block_forward.3} parent=11 // pred_check_branch
        %238 = sbr.rel (%p236) target = $region20
      $region19: #{basic_block_forward.3} parent=11 // pred_region
        _
      $region20: #{basic_block_forward.3} parent=11 // pred_fallthru
        _
      // Predicated region
      $region21: #{basic_block_forward.3} parent=11 // pred_check
        %p239 = pneg %p103
      $region22: #{basic_block_forward.3} parent=11 // pred_check_branch
        %241 = sbr.rel (%p239) target = $region24
      $region23: #{basic_block_forward.3} parent=11 // pred_region
        _
      $region24: #{basic_block_forward.3} parent=11 // pred_fallthru
        _
      // Predicated region
      $region25: #{basic_block_forward.3} parent=11 // pred_check
        %p242 = pneg %p150
      $region26: #{basic_block_forward.3} parent=11 // pred_check_branch
        %244 = sbr.rel (%p242) target = $region28
      $region27: #{basic_block_forward.3} parent=11 // pred_region
        _
      $region28: #{basic_block_forward.3} parent=11 // pred_fallthru
        _
      // Predicated region
      $region29: #{basic_block_forward.3} parent=11 // pred_check
        %p245 = pneg %p171
      $region30: #{basic_block_forward.3} parent=11 // pred_check_branch
        %247 = sbr.rel (%p245) target = $region32
      $region31: #{basic_block_forward.3} parent=11 // pred_region
        _
      $region32: #{basic_block_forward.3} parent=11 // pred_fallthru
        _
      // Predicated region
      $region33: #{basic_block_forward.3} parent=11 // pred_check
        %p248 = pneg %p192
      $region34: #{basic_block_forward.3} parent=11 // pred_check_branch
        %250 = sbr.rel (%p248) target = $region36
      $region35: #{basic_block_forward.3} parent=11 // pred_region
        _
      $region36: #{basic_block_forward.3} parent=11 // pred_fallthru
        _
    $region12: #{basic_block_forward.3} parent=5 // pred_fallthru
      _
    %p251 = scmp.lt.s32.totalorder %s14, 2
    // Predicated region
    $region37: #{basic_block_forward.3} parent=5 // pred_check
      %p252 = pneg %p251
    $region38: #{basic_block_forward.3} parent=5 // pred_check_branch
      %254 = sbr.rel (%p252) target = $region40
    $region39: #{basic_block_forward.3} parent=5 // pred_region
      // Predicated region
      $region41: #{basic_block_forward.3} parent=39 // pred_check
        %p255 = pneg %p34
      $region42: #{basic_block_forward.3} parent=39 // pred_check_branch
        %257 = sbr.rel (%p255) target = $region44
      $region43: #{basic_block_forward.3} parent=39 // pred_region
        %p258 = scmp.lt.s32.totalorder %s14, 1
        %s259 = scalar_select %p258, %s14, 1
        %s260 = smul.addr %s259, 14
        %s261 = smul.addr %s260, 4
        %s262 = scalar_lea.vmem %s0, %s261
      $region44: #{basic_block_forward.3} parent=39 // pred_fallthru
        _
      // Predicated region
      $region45: #{basic_block_forward.3} parent=39 // pred_check
        %p263 = pneg %p123
      $region46: #{basic_block_forward.3} parent=39 // pred_check_branch
        %265 = sbr.rel (%p263) target = $region48
      $region47: #{basic_block_forward.3} parent=39 // pred_region
        %p266 = scmp.lt.s32.totalorder %s14, 1
        %s267 = scalar_select %p266, %s14, 1
        %s268 = smul.addr %s267, 10
        %s269 = smul.addr %s268, 4
        %s270 = scalar_lea.vmem %s4, %s269
      $region48: #{basic_block_forward.3} parent=39 // pred_fallthru
        _
    $region40: #{basic_block_forward.3} parent=5 // pred_fallthru
      _
    %p271 = scmp.le.s32.totalorder 1, %s14
    %p272 = scmp.lt.s32.totalorder %s14, 3
    %p273 = pnand %p271, %p272
    %p274 = pneg %p273
    // Predicated region
    $region49: #{basic_block_forward.3} parent=5 // pred_check
      _
    $region50: #{basic_block_forward.3} parent=5 // pred_check_branch
      %276 = sbr.rel (%p273) target = $region52
    $region51: #{basic_block_forward.3} parent=5 // pred_region
      %s277 = ssub.s32 %s14, 1
      %p278 = scmp.lt.s32.totalorder %s19, 1
      %s279 = scalar_select %p278, %s19, 1
      %s280 = smul.addr %s279, 14
      %s281 = smul.addr %s280, 4
      %s282 = scalar_lea.vmem %s0, %s281
      %p283 = pneg %p40
      %p284 = pneg %p37
      %p285 = pneg %p61
      %p286 = pneg %p58
      %p287 = pneg %p82
      %p288 = pneg %p79
      %p289 = pneg %p103
      %p290 = pneg %p100
      %p291 = scmp.lt.s32.totalorder %s19, 1
      %s292 = scalar_select %p291, %s19, 1
      %s293 = smul.addr %s292, 10
      %s294 = smul.addr %s293, 4
      %s295 = scalar_lea.vmem %s4, %s294
      %p296 = pneg %p129
      %p297 = pneg %p126
      %p298 = pneg %p150
      %p299 = pneg %p147
      %p300 = pneg %p171
      %p301 = pneg %p168
      %p302 = pneg %p192
      %p303 = pneg %p189
      %p304 = pneg %p218
      %p305 = pneg %p215
      %p306 = scmp.lt.s32.totalorder %s19, 1
      %s307 = scalar_select %p306, %s19, 1
      %s308 = smul.addr %s307, 10
      %s309 = smul.addr %s308, 8
      %s310 = scalar_lea.vmem %s8, %s309
      %p311 = scmp.lt.s32.totalorder %s19, 1
      %s312 = scalar_select %p311, %s19, 1
      %s313 = smul.addr %s312, 14
      %s314 = smul.addr %s313, 4
      %s315 = scalar_lea.vmem %s0, %s314
      %p316 = scmp.lt.s32.totalorder %s19, 1
      %s317 = scalar_select %p316, %s19, 1
      %s318 = smul.addr %s317, 10
      %s319 = smul.addr %s318, 4
      %s320 = scalar_lea.vmem %s4, %s319
      %p321 = scmp.lt.s32.totalorder %s19, 1
      %s322 = scalar_select %p321, %s19, 1
      %s323 = smul.addr %s322, 10
      %s324 = smul.addr %s323, 8
      %s325 = scalar_lea.vmem %s8, %s324
      %v327 = vld [vmem:[%s315] sm:$0xf]
      %v328 = vld [vmem:[%s315 + $0x4] sm:$0xf]
      %v329 = vld [vmem:[%s315 + $0x8] sm:$0xf]
      %v330 = vld [vmem:[%s315 + $0xc] sm:$0xf]
      %v331 = vld [vmem:[%s315 + $0x10] sm:$0xf]
      %v332 = vld [vmem:[%s315 + $0x14] sm:$0xf]
      %v333 = vld [vmem:[%s315 + $0x18] sm:$0xf]
      %v334 = vld [vmem:[%s315 + $0x1c] sm:$0xf]
      %v335 = vld [vmem:[%s315 + $0x20] sm:$0xf]
      %v336 = vld [vmem:[%s315 + $0x24] sm:$0xf]
      %v337 = vld [vmem:[%s1] sm:$0xf]
      %v338 = vld [vmem:[%s1 + $0x4] sm:$0xf]
      %v339 = vld [vmem:[%s1 + $0x8] sm:$0xf]
      %v340 = vld [vmem:[%s1 + $0xc] sm:$0xf]
      %v341 = vld [vmem:[%s1 + $0x10] sm:$0xf]
      %v342 = vld [vmem:[%s1 + $0x14] sm:$0xf]
      %v343 = vld [vmem:[%s1 + $0x18] sm:$0xf]
      %v344 = vld [vmem:[%s1 + $0x1c] sm:$0xf]
      %v345 = vld [vmem:[%s1 + $0x20] sm:$0xf]
      %v346 = vld [vmem:[%s1 + $0x24] sm:$0xf]
      %v347 = vld [vmem:[%s1 + $0x28] sm:$0xf]
      %v348 = vld [vmem:[%s1 + $0x2c] sm:$0xf]
      %v349 = vld [vmem:[%s1 + $0x30] sm:$0xf]
      %v350 = vld [vmem:[%s1 + $0x34] sm:$0xf]
      %v351 = vld [vmem:[%s1 + $0x38] sm:$0xf]
      %v352 = vld [vmem:[%s1 + $0x3c] sm:$0xf]
      %v363 = vunpack.c.l.b16 %v327
      %v364 = vunpack.c.l.b16 %v328
      %v365 = vunpack.c.l.b16 %v329
      %v366 = vunpack.c.l.b16 %v330
      %v367 = vunpack.c.l.b16 %v331
      %v368 = vunpack.c.l.b16 %v332
      %v369 = vunpack.c.l.b16 %v333
      %v370 = vunpack.c.l.b16 %v334
      %v371 = vunpack.c.l.b16 %v335
      %v372 = vunpack.c.l.b16 %v336
      %v373 = vpack.c.b16 %v364, %v363
      %v374 = vpack.c.b16 %v366, %v365
      %v375 = vpack.c.b16 %v368, %v367
      %v376 = vpack.c.b16 %v370, %v369
      %v377 = vpack.c.b16 %v372, %v371
      %v399 = vunpack.c.l.b16 %v337
      %v400 = vunpack.c.l.b16 %v338
      %v401 = vunpack.c.l.b16 %v339
      %v402 = vunpack.c.l.b16 %v340
      %v403 = vunpack.c.l.b16 %v341
      %v404 = vunpack.c.l.b16 %v342
      %v405 = vunpack.c.l.b16 %v343
      %v406 = vunpack.c.l.b16 %v344
      %v407 = vunpack.c.l.b16 %v345
      %v408 = vunpack.c.l.b16 %v346
      %v409 = vunpack.c.l.b16 %v347
      %v410 = vunpack.c.l.b16 %v348
      %v411 = vunpack.c.l.b16 %v349
      %v412 = vunpack.c.l.b16 %v350
      %v413 = vunpack.c.l.b16 %v351
      %v414 = vunpack.c.l.b16 %v352
      %v415 = vpack.c.b16 %v400, %v399
      %v416 = vpack.c.b16 %v402, %v401
      %v417 = vpack.c.b16 %v404, %v403
      %v418 = vpack.c.b16 %v406, %v405
      %v419 = vpack.c.b16 %v408, %v407
      %v420 = vpack.c.b16 %v410, %v409
      %v421 = vpack.c.b16 %v412, %v411
      %v422 = vpack.c.b16 %v414, %v413
      %431 = vmatprep.subr.bf16.mxu0 0
      %432 = vmatpush1.bf16.msra.mxu0 %v422
      %433 = vmatprep.subr.bf16.mxu0 0
      %434 = vmatpush1.bf16.msra.mxu0 %v421
      %435 = vmatprep.subr.bf16.mxu0 0
      %436 = vmatpush1.bf16.msra.mxu0 %v420
      %437 = vmatprep.subr.bf16.mxu0 0
      %438 = vmatpush1.bf16.msra.mxu0 %v419
      %439 = vmatprep.subr.bf16.mxu0 0
      %440 = vmatpush1.bf16.msra.mxu0 %v418
      %441 = vmatprep.subr.bf16.mxu0 0
      %442 = vmatpush1.bf16.msra.mxu0 %v417
      %443 = vmatprep.subr.bf16.mxu0 0
      %444 = vmatpush1.bf16.msra.mxu0 %v416
      %445 = vmatprep.subr.bf16.mxu0 0
      %446 = vmatpush1.bf16.msra.mxu0 %v415
      %447 = vmatprep.subr.bf16.mxu0 0
      %448 = vmatpush2.bf16.msra.mxu0 0
      %449 = vmatprep.subr.bf16.mxu0 0
      %450 = vmatpush2.bf16.msra.mxu0 0
      %451 = vmatprep.subr.bf16.mxu0 0
      %452 = vmatpush2.bf16.msra.mxu0 0
      %453 = vmatprep.subr.bf16.mxu0 0
      %454 = vmatpush2.bf16.msra.mxu0 0
      %455 = vmatprep.subr.bf16.mxu0 0
      %456 = vmatpush2.bf16.msra.mxu0 0
      %457 = vmatprep.subr.bf16.mxu0 0
      %458 = vmatpush2.bf16.msra.mxu0 0
      %459 = vmatprep.subr.bf16.mxu0 0
      %460 = vmatpush2.bf16.msra.mxu0 0
      %461 = vmatprep.subr.bf16.mxu0 0
      %462 = vmatpush2.bf16.msra.mxu0 0
      %463 = vmatprep.mubr.bf16.mxu0 0
      %464 = vmatmul.mubr.bf16.gmra.mxu0 %v373
      %v465 = vpop.f32.mrf.mxu0
      %v466 = vadd.f32 0.0, %v465
      %v467 = vpop.f32.mrf.mxu0
      %v468 = vpop.f32.mrf.mxu0
      %v469 = vadd.f32 0.0, %v468
      %v470 = vpop.f32.mrf.mxu0
      %471 = vmatprep.mubr.bf16.mxu0 0
      %472 = vmatmul.mubr.bf16.gmra.mxu0 %v374
      %v473 = vpop.f32.mrf.mxu0
      %v474 = vadd.f32 0.0, %v473
      %v475 = vpop.f32.mrf.mxu0
      %v476 = vpop.f32.mrf.mxu0
      %v477 = vadd.f32 0.0, %v476
      %v478 = vpop.f32.mrf.mxu0
      %479 = vmatprep.mubr.bf16.mxu0 0
      %480 = vmatmul.mubr.bf16.gmra.mxu0 %v375
      %v481 = vpop.f32.mrf.mxu0
      %v482 = vadd.f32 0.0, %v481
      %v483 = vpop.f32.mrf.mxu0
      %v484 = vpop.f32.mrf.mxu0
      %v485 = vadd.f32 0.0, %v484
      %v486 = vpop.f32.mrf.mxu0
      %487 = vmatprep.mubr.bf16.mxu0 0
      %488 = vmatmul.mubr.bf16.gmra.mxu0 %v376
      %v489 = vpop.f32.mrf.mxu0
      %v490 = vadd.f32 0.0, %v489
      %v491 = vpop.f32.mrf.mxu0
      %v492 = vpop.f32.mrf.mxu0
      %v493 = vadd.f32 0.0, %v492
      %v494 = vpop.f32.mrf.mxu0
      %495 = vmatprep.mubr.bf16.mxu0 0
      %496 = vmatmul.mubr.bf16.gmra.mxu0 %v377
      %v497 = vpop.f32.mrf.mxu0
      %v498 = vadd.f32 0.0, %v497
      %v499 = vpop.f32.mrf.mxu0
      %v500 = vpop.f32.mrf.mxu0
      %v501 = vadd.f32 0.0, %v500
      %v502 = vpop.f32.mrf.mxu0
      %503 = vdwg.mxu0
      %504 = vst [vmem:[#allocation2] sm:$0xff] %v466
      %505 = vst [vmem:[#allocation2 + $0x8] sm:$0xff] %v469
      %506 = vst [vmem:[#allocation2 + $0x10] sm:$0xff] %v474
      %507 = vst [vmem:[#allocation2 + $0x18] sm:$0xff] %v477
      %508 = vst [vmem:[#allocation2 + $0x20] sm:$0xff] %v482
      %509 = vst [vmem:[#allocation2 + $0x28] sm:$0xff] %v485
      %510 = vst [vmem:[#allocation2 + $0x30] sm:$0xff] %v490
      %511 = vst [vmem:[#allocation2 + $0x38] sm:$0xff] %v493
      %512 = vst [vmem:[#allocation2 + $0x40] sm:$0xff] %v498
      %513 = vst [vmem:[#allocation2 + $0x48] sm:$0xff] %v501
      %v514 = vld [vmem:[%s315] sm:$0xf]
      %v515 = vld [vmem:[%s315 + $0x4] sm:$0xf]
      %v516 = vld [vmem:[%s315 + $0x8] sm:$0xf]
      %v517 = vld [vmem:[%s315 + $0xc] sm:$0xf]
      %v518 = vld [vmem:[%s315 + $0x10] sm:$0xf]
      %v519 = vld [vmem:[%s315 + $0x14] sm:$0xf]
      %v520 = vld [vmem:[%s315 + $0x18] sm:$0xf]
      %v521 = vld [vmem:[%s315 + $0x1c] sm:$0xf]
      %v522 = vld [vmem:[%s315 + $0x20] sm:$0xf]
      %v523 = vld [vmem:[%s315 + $0x24] sm:$0xf]
      %v524 = vld [vmem:[%s315 + $0x28] sm:$0x1]
      %s525 = scalar_lea.vmem %s1, 64
      %v526 = vld [vmem:[%s525] sm:$0xf]
      %v527 = vld [vmem:[%s525 + $0x4] sm:$0xf]
      %v528 = vld [vmem:[%s525 + $0x8] sm:$0xf]
      %v529 = vld [vmem:[%s525 + $0xc] sm:$0xf]
      %v530 = vld [vmem:[%s525 + $0x10] sm:$0xf]
      %v531 = vld [vmem:[%s525 + $0x14] sm:$0xf]
      %v532 = vld [vmem:[%s525 + $0x18] sm:$0xf]
      %v533 = vld [vmem:[%s525 + $0x1c] sm:$0xf]
      %v534 = vld [vmem:[%s525 + $0x20] sm:$0xf]
      %v535 = vld [vmem:[%s525 + $0x24] sm:$0xf]
      %v536 = vld [vmem:[%s525 + $0x28] sm:$0xf]
      %v537 = vld [vmem:[%s525 + $0x2c] sm:$0xf]
      %v538 = vld [vmem:[%s525 + $0x30] sm:$0xf]
      %v539 = vld [vmem:[%s525 + $0x34] sm:$0xf]
      %v540 = vld [vmem:[%s525 + $0x38] sm:$0xf]
      %v541 = vld [vmem:[%s525 + $0x3c] sm:$0xf]
      %v553 = vunpack.c.l.b16 %v514
      %v554 = vunpack.c.l.b16 %v515
      %v555 = vunpack.c.l.b16 %v516
      %v556 = vunpack.c.l.b16 %v517
      %v557 = vunpack.c.l.b16 %v518
      %v558 = vunpack.c.l.b16 %v519
      %v559 = vunpack.c.l.b16 %v520
      %v560 = vunpack.c.l.b16 %v521
      %v561 = vunpack.c.l.b16 %v522
      %v562 = vunpack.c.l.b16 %v523
      %v563 = vunpack.c.l.b16 %v524
      %v564 = vpack.c.b16 %v554, %v553
      %v565 = vpack.c.b16 %v556, %v555
      %v566 = vpack.c.b16 %v558, %v557
      %v567 = vpack.c.b16 %v560, %v559
      %v568 = vpack.c.b16 %v562, %v561
      %v569 = vpack.c.b16 %v563, %v563
      %vm570 = vsmask.f32 7424
      %v572 = vshrl.u32 %v564, 16
      %v574 = vshll.u32 %v564, 16
      %v576 = vrot.slane %v574, 1
      %v577 = vor.u32 %v572, %v576
      %v579 = vshll.u32 %v565, 16
      %v581 = vrot.slane %v579, 1
      %v582 = vsel %vm570, %v577, %v581
      %v583 = vshrl.u32 %v565, 16
      %v585 = vor.u32 %v583, %v581
      %v587 = vshll.u32 %v566, 16
      %v589 = vrot.slane %v587, 1
      %v590 = vsel %vm570, %v585, %v589
      %v591 = vshrl.u32 %v566, 16
      %v593 = vor.u32 %v591, %v589
      %v595 = vshll.u32 %v567, 16
      %v597 = vrot.slane %v595, 1
      %v598 = vsel %vm570, %v593, %v597
      %v599 = vshrl.u32 %v567, 16
      %v601 = vor.u32 %v599, %v597
      %v603 = vshll.u32 %v568, 16
      %v605 = vrot.slane %v603, 1
      %v606 = vsel %vm570, %v601, %v605
      %v607 = vshrl.u32 %v568, 16
      %v609 = vor.u32 %v607, %v605
      %v611 = vshll.u32 %v569, 16
      %v613 = vrot.slane %v611, 1
      %v614 = vsel %vm570, %v609, %v613
      %v636 = vunpack.c.l.b16 %v526
      %v637 = vunpack.c.l.b16 %v527
      %v638 = vunpack.c.l.b16 %v528
      %v639 = vunpack.c.l.b16 %v529
      %v640 = vunpack.c.l.b16 %v530
      %v641 = vunpack.c.l.b16 %v531
      %v642 = vunpack.c.l.b16 %v532
      %v643 = vunpack.c.l.b16 %v533
      %v644 = vunpack.c.l.b16 %v534
      %v645 = vunpack.c.l.b16 %v535
      %v646 = vunpack.c.l.b16 %v536
      %v647 = vunpack.c.l.b16 %v537
      %v648 = vunpack.c.l.b16 %v538
      %v649 = vunpack.c.l.b16 %v539
      %v650 = vunpack.c.l.b16 %v540
      %v651 = vunpack.c.l.b16 %v541
      %v652 = vpack.c.b16 %v637, %v636
      %v653 = vpack.c.b16 %v639, %v638
      %v654 = vpack.c.b16 %v641, %v640
      %v655 = vpack.c.b16 %v643, %v642
      %v656 = vpack.c.b16 %v645, %v644
      %v657 = vpack.c.b16 %v647, %v646
      %v658 = vpack.c.b16 %v649, %v648
      %v659 = vpack.c.b16 %v651, %v650
      %668 = vmatprep.subr.bf16.mxu0 0
      %669 = vmatpush1.bf16.msra.mxu0 %v659
      %670 = vmatprep.subr.bf16.mxu0 0
      %671 = vmatpush1.bf16.msra.mxu0 %v658
      %672 = vmatprep.subr.bf16.mxu0 0
      %673 = vmatpush1.bf16.msra.mxu0 %v657
      %674 = vmatprep.subr.bf16.mxu0 0
      %675 = vmatpush1.bf16.msra.mxu0 %v656
      %676 = vmatprep.subr.bf16.mxu0 0
      %677 = vmatpush1.bf16.msra.mxu0 %v655
      %678 = vmatprep.subr.bf16.mxu0 0
      %679 = vmatpush1.bf16.msra.mxu0 %v654
      %680 = vmatprep.subr.bf16.mxu0 0
      %681 = vmatpush1.bf16.msra.mxu0 %v653
      %682 = vmatprep.subr.bf16.mxu0 0
      %683 = vmatpush1.bf16.msra.mxu0 %v652
      %684 = vmatprep.subr.bf16.mxu0 0
      %685 = vmatpush2.bf16.msra.mxu0 0
      %686 = vmatprep.subr.bf16.mxu0 0
      %687 = vmatpush2.bf16.msra.mxu0 0
      %688 = vmatprep.subr.bf16.mxu0 0
      %689 = vmatpush2.bf16.msra.mxu0 0
      %690 = vmatprep.subr.bf16.mxu0 0
      %691 = vmatpush2.bf16.msra.mxu0 0
      %692 = vmatprep.subr.bf16.mxu0 0
      %693 = vmatpush2.bf16.msra.mxu0 0
      %694 = vmatprep.subr.bf16.mxu0 0
      %695 = vmatpush2.bf16.msra.mxu0 0
      %696 = vmatprep.subr.bf16.mxu0 0
      %697 = vmatpush2.bf16.msra.mxu0 0
      %698 = vmatprep.subr.bf16.mxu0 0
      %699 = vmatpush2.bf16.msra.mxu0 0
      %700 = vmatprep.mubr.bf16.mxu0 0
      %701 = vmatmul.mubr.bf16.gmra.mxu0 %v582
      %v702 = vpop.f32.mrf.mxu0
      %v703 = vadd.f32 0.0, %v702
      %v704 = vpop.f32.mrf.mxu0
      %v705 = vpop.f32.mrf.mxu0
      %v706 = vadd.f32 0.0, %v705
      %v707 = vpop.f32.mrf.mxu0
      %708 = vmatprep.mubr.bf16.mxu0 0
      %709 = vmatmul.mubr.bf16.gmra.mxu0 %v590
      %v710 = vpop.f32.mrf.mxu0
      %v711 = vadd.f32 0.0, %v710
      %v712 = vpop.f32.mrf.mxu0
      %v713 = vpop.f32.mrf.mxu0
      %v714 = vadd.f32 0.0, %v713
      %v715 = vpop.f32.mrf.mxu0
      %716 = vmatprep.mubr.bf16.mxu0 0
      %717 = vmatmul.mubr.bf16.gmra.mxu0 %v598
      %v718 = vpop.f32.mrf.mxu0
      %v719 = vadd.f32 0.0, %v718
      %v720 = vpop.f32.mrf.mxu0
      %v721 = vpop.f32.mrf.mxu0
      %v722 = vadd.f32 0.0, %v721
      %v723 = vpop.f32.mrf.mxu0
      %724 = vmatprep.mubr.bf16.mxu0 0
      %725 = vmatmul.mubr.bf16.gmra.mxu0 %v606
      %v726 = vpop.f32.mrf.mxu0
      %v727 = vadd.f32 0.0, %v726
      %v728 = vpop.f32.mrf.mxu0
      %v729 = vpop.f32.mrf.mxu0
      %v730 = vadd.f32 0.0, %v729
      %v731 = vpop.f32.mrf.mxu0
      %732 = vmatprep.mubr.bf16.mxu0 0
      %733 = vmatmul.mubr.bf16.gmra.mxu0 %v614
      %v734 = vpop.f32.mrf.mxu0
      %v735 = vadd.f32 0.0, %v734
      %v736 = vpop.f32.mrf.mxu0
      %v737 = vpop.f32.mrf.mxu0
      %v738 = vadd.f32 0.0, %v737
      %v739 = vpop.f32.mrf.mxu0
      %740 = vdwg.mxu0
      %v741 = vld [vmem:[#allocation2] sm:$0xff]
      %v742 = vld [vmem:[#allocation2 + $0x8] sm:$0xff]
      %v743 = vld [vmem:[#allocation2 + $0x10] sm:$0xff]
      %v744 = vld [vmem:[#allocation2 + $0x18] sm:$0xff]
      %v745 = vld [vmem:[#allocation2 + $0x20] sm:$0xff]
      %v746 = vld [vmem:[#allocation2 + $0x28] sm:$0xff]
      %v747 = vld [vmem:[#allocation2 + $0x30] sm:$0xff]
      %v748 = vld [vmem:[#allocation2 + $0x38] sm:$0xff]
      %v749 = vld [vmem:[#allocation2 + $0x40] sm:$0xff]
      %v750 = vld [vmem:[#allocation2 + $0x48] sm:$0xff]
      %v751 = vadd.f32 %v741, %v703
      %v752 = vadd.f32 %v742, %v706
      %v753 = vadd.f32 %v743, %v711
      %v754 = vadd.f32 %v744, %v714
      %v755 = vadd.f32 %v745, %v719
      %v756 = vadd.f32 %v746, %v722
      %v757 = vadd.f32 %v747, %v727
      %v758 = vadd.f32 %v748, %v730
      %v759 = vadd.f32 %v749, %v735
      %v760 = vadd.f32 %v750, %v738
      %761 = vst [vmem:[#allocation2] sm:$0xff] %v751
      %762 = vst [vmem:[#allocation2 + $0x8] sm:$0xff] %v752
      %763 = vst [vmem:[#allocation2 + $0x10] sm:$0xff] %v753
      %764 = vst [vmem:[#allocation2 + $0x18] sm:$0xff] %v754
      %765 = vst [vmem:[#allocation2 + $0x20] sm:$0xff] %v755
      %766 = vst [vmem:[#allocation2 + $0x28] sm:$0xff] %v756
      %767 = vst [vmem:[#allocation2 + $0x30] sm:$0xff] %v757
      %768 = vst [vmem:[#allocation2 + $0x38] sm:$0xff] %v758
      %769 = vst [vmem:[#allocation2 + $0x40] sm:$0xff] %v759
      %770 = vst [vmem:[#allocation2 + $0x48] sm:$0xff] %v760
      %v771 = vld [vmem:[%s315] sm:$0xe]
      %v772 = vld [vmem:[%s315 + $0x4] sm:$0xf]
      %v773 = vld [vmem:[%s315 + $0x8] sm:$0xf]
      %v774 = vld [vmem:[%s315 + $0xc] sm:$0xf]
      %v775 = vld [vmem:[%s315 + $0x10] sm:$0xf]
      %v776 = vld [vmem:[%s315 + $0x14] sm:$0xf]
      %v777 = vld [vmem:[%s315 + $0x18] sm:$0xf]
      %v778 = vld [vmem:[%s315 + $0x1c] sm:$0xf]
      %v779 = vld [vmem:[%s315 + $0x20] sm:$0xf]
      %v780 = vld [vmem:[%s315 + $0x24] sm:$0xf]
      %v781 = vld [vmem:[%s315 + $0x28] sm:$0x1]
      %s782 = scalar_lea.vmem %s1, 128
      %v783 = vld [vmem:[%s782] sm:$0xf]
      %v784 = vld [vmem:[%s782 + $0x4] sm:$0xf]
      %v785 = vld [vmem:[%s782 + $0x8] sm:$0xf]
      %v786 = vld [vmem:[%s782 + $0xc] sm:$0xf]
      %v787 = vld [vmem:[%s782 + $0x10] sm:$0xf]
      %v788 = vld [vmem:[%s782 + $0x14] sm:$0xf]
      %v789 = vld [vmem:[%s782 + $0x18] sm:$0xf]
      %v790 = vld [vmem:[%s782 + $0x1c] sm:$0xf]
      %v791 = vld [vmem:[%s782 + $0x20] sm:$0xf]
      %v792 = vld [vmem:[%s782 + $0x24] sm:$0xf]
      %v793 = vld [vmem:[%s782 + $0x28] sm:$0xf]
      %v794 = vld [vmem:[%s782 + $0x2c] sm:$0xf]
      %v795 = vld [vmem:[%s782 + $0x30] sm:$0xf]
      %v796 = vld [vmem:[%s782 + $0x34] sm:$0xf]
      %v797 = vld [vmem:[%s782 + $0x38] sm:$0xf]
      %v798 = vld [vmem:[%s782 + $0x3c] sm:$0xf]
      %v810 = vunpack.c.l.b16 %v771
      %v811 = vunpack.c.l.b16 %v772
      %v812 = vunpack.c.l.b16 %v773
      %v813 = vunpack.c.l.b16 %v774
      %v814 = vunpack.c.l.b16 %v775
      %v815 = vunpack.c.l.b16 %v776
      %v816 = vunpack.c.l.b16 %v777
      %v817 = vunpack.c.l.b16 %v778
      %v818 = vunpack.c.l.b16 %v779
      %v819 = vunpack.c.l.b16 %v780
      %v820 = vunpack.c.l.b16 %v781
      %v821 = vpack.c.b16 %v811, %v810
      %v822 = vpack.c.b16 %v813, %v812
      %v823 = vpack.c.b16 %v815, %v814
      %v824 = vpack.c.b16 %v817, %v816
      %v825 = vpack.c.b16 %v819, %v818
      %v826 = vpack.c.b16 %v820, %v820
      %vm827 = vcmask 1046528
      %v828 = vrot.slane %v821, 1
      %v829 = vrot.slane %v822, 1
      %v830 = vsel %vm827, %v828, %v829
      %v831 = vrot.slane %v823, 1
      %v832 = vsel %vm827, %v829, %v831
      %v833 = vrot.slane %v824, 1
      %v834 = vsel %vm827, %v831, %v833
      %v835 = vrot.slane %v825, 1
      %v836 = vsel %vm827, %v833, %v835
      %v837 = vrot.slane %v826, 1
      %v838 = vsel %vm827, %v835, %v837
      %v860 = vunpack.c.l.b16 %v783
      %v861 = vunpack.c.l.b16 %v784
      %v862 = vunpack.c.l.b16 %v785
      %v863 = vunpack.c.l.b16 %v786
      %v864 = vunpack.c.l.b16 %v787
      %v865 = vunpack.c.l.b16 %v788
      %v866 = vunpack.c.l.b16 %v789
      %v867 = vunpack.c.l.b16 %v790
      %v868 = vunpack.c.l.b16 %v791
      %v869 = vunpack.c.l.b16 %v792
      %v870 = vunpack.c.l.b16 %v793
      %v871 = vunpack.c.l.b16 %v794
      %v872 = vunpack.c.l.b16 %v795
      %v873 = vunpack.c.l.b16 %v796
      %v874 = vunpack.c.l.b16 %v797
      %v875 = vunpack.c.l.b16 %v798
      %v876 = vpack.c.b16 %v861, %v860
      %v877 = vpack.c.b16 %v863, %v862
      %v878 = vpack.c.b16 %v865, %v864
      %v879 = vpack.c.b16 %v867, %v866
      %v880 = vpack.c.b16 %v869, %v868
      %v881 = vpack.c.b16 %v871, %v870
      %v882 = vpack.c.b16 %v873, %v872
      %v883 = vpack.c.b16 %v875, %v874
      %892 = vmatprep.subr.bf16.mxu0 0
      %893 = vmatpush1.bf16.msra.mxu0 %v883
      %894 = vmatprep.subr.bf16.mxu0 0
      %895 = vmatpush1.bf16.msra.mxu0 %v882
      %896 = vmatprep.subr.bf16.mxu0 0
      %897 = vmatpush1.bf16.msra.mxu0 %v881
      %898 = vmatprep.subr.bf16.mxu0 0
      %899 = vmatpush1.bf16.msra.mxu0 %v880
      %900 = vmatprep.subr.bf16.mxu0 0
      %901 = vmatpush1.bf16.msra.mxu0 %v879
      %902 = vmatprep.subr.bf16.mxu0 0
      %903 = vmatpush1.bf16.msra.mxu0 %v878
      %904 = vmatprep.subr.bf16.mxu0 0
      %905 = vmatpush1.bf16.msra.mxu0 %v877
      %906 = vmatprep.subr.bf16.mxu0 0
      %907 = vmatpush1.bf16.msra.mxu0 %v876
      %908 = vmatprep.subr.bf16.mxu0 0
      %909 = vmatpush2.bf16.msra.mxu0 0
      %910 = vmatprep.subr.bf16.mxu0 0
      %911 = vmatpush2.bf16.msra.mxu0 0
      %912 = vmatprep.subr.bf16.mxu0 0
      %913 = vmatpush2.bf16.msra.mxu0 0
      %914 = vmatprep.subr.bf16.mxu0 0
      %915 = vmatpush2.bf16.msra.mxu0 0
      %916 = vmatprep.subr.bf16.mxu0 0
      %917 = vmatpush2.bf16.msra.mxu0 0
      %918 = vmatprep.subr.bf16.mxu0 0
      %919 = vmatpush2.bf16.msra.mxu0 0
      %920 = vmatprep.subr.bf16.mxu0 0
      %921 = vmatpush2.bf16.msra.mxu0 0
      %922 = vmatprep.subr.bf16.mxu0 0
      %923 = vmatpush2.bf16.msra.mxu0 0
      %924 = vmatprep.mubr.bf16.mxu0 0
      %925 = vmatmul.mubr.bf16.gmra.mxu0 %v830
      %v926 = vpop.f32.mrf.mxu0
      %v927 = vadd.f32 0.0, %v926
      %v928 = vpop.f32.mrf.mxu0
      %v929 = vpop.f32.mrf.mxu0
      %v930 = vadd.f32 0.0, %v929
      %v931 = vpop.f32.mrf.mxu0
      %932 = vmatprep.mubr.bf16.mxu0 0
      %933 = vmatmul.mubr.bf16.gmra.mxu0 %v832
      %v934 = vpop.f32.mrf.mxu0
      %v935 = vadd.f32 0.0, %v934
      %v936 = vpop.f32.mrf.mxu0
      %v937 = vpop.f32.mrf.mxu0
      %v938 = vadd.f32 0.0, %v937
      %v939 = vpop.f32.mrf.mxu0
      %940 = vmatprep.mubr.bf16.mxu0 0
      %941 = vmatmul.mubr.bf16.gmra.mxu0 %v834
      %v942 = vpop.f32.mrf.mxu0
      %v943 = vadd.f32 0.0, %v942
      %v944 = vpop.f32.mrf.mxu0
      %v945 = vpop.f32.mrf.mxu0
      %v946 = vadd.f32 0.0, %v945
      %v947 = vpop.f32.mrf.mxu0
      %948 = vmatprep.mubr.bf16.mxu0 0
      %949 = vmatmul.mubr.bf16.gmra.mxu0 %v836
      %v950 = vpop.f32.mrf.mxu0
      %v951 = vadd.f32 0.0, %v950
      %v952 = vpop.f32.mrf.mxu0
      %v953 = vpop.f32.mrf.mxu0
      %v954 = vadd.f32 0.0, %v953
      %v955 = vpop.f32.mrf.mxu0
      %956 = vmatprep.mubr.bf16.mxu0 0
      %957 = vmatmul.mubr.bf16.gmra.mxu0 %v838
      %v958 = vpop.f32.mrf.mxu0
      %v959 = vadd.f32 0.0, %v958
      %v960 = vpop.f32.mrf.mxu0
      %v961 = vpop.f32.mrf.mxu0
      %v962 = vadd.f32 0.0, %v961
      %v963 = vpop.f32.mrf.mxu0
      %964 = vdwg.mxu0
      %v965 = vld [vmem:[#allocation2] sm:$0xff]
      %v966 = vld [vmem:[#allocation2 + $0x8] sm:$0xff]
      %v967 = vld [vmem:[#allocation2 + $0x10] sm:$0xff]
      %v968 = vld [vmem:[#allocation2 + $0x18] sm:$0xff]
      %v969 = vld [vmem:[#allocation2 + $0x20] sm:$0xff]
      %v970 = vld [vmem:[#allocation2 + $0x28] sm:$0xff]
      %v971 = vld [vmem:[#allocation2 + $0x30] sm:$0xff]
      %v972 = vld [vmem:[#allocation2 + $0x38] sm:$0xff]
      %v973 = vld [vmem:[#allocation2 + $0x40] sm:$0xff]
      %v974 = vld [vmem:[#allocation2 + $0x48] sm:$0xff]
      %v975 = vadd.f32 %v965, %v927
      %v976 = vadd.f32 %v966, %v930
      %v977 = vadd.f32 %v967, %v935
      %v978 = vadd.f32 %v968, %v938
      %v979 = vadd.f32 %v969, %v943
      %v980 = vadd.f32 %v970, %v946
      %v981 = vadd.f32 %v971, %v951
      %v982 = vadd.f32 %v972, %v954
      %v983 = vadd.f32 %v973, %v959
      %v984 = vadd.f32 %v974, %v962
      %985 = vst [vmem:[#allocation2] sm:$0xff] %v975
      %986 = vst [vmem:[#allocation2 + $0x8] sm:$0xff] %v976
      %987 = vst [vmem:[#allocation2 + $0x10] sm:$0xff] %v977
      %988 = vst [vmem:[#allocation2 + $0x18] sm:$0xff] %v978
      %989 = vst [vmem:[#allocation2 + $0x20] sm:$0xff] %v979
      %990 = vst [vmem:[#allocation2 + $0x28] sm:$0xff] %v980
      %991 = vst [vmem:[#allocation2 + $0x30] sm:$0xff] %v981
      %992 = vst [vmem:[#allocation2 + $0x38] sm:$0xff] %v982
      %993 = vst [vmem:[#allocation2 + $0x40] sm:$0xff] %v983
      %994 = vst [vmem:[#allocation2 + $0x48] sm:$0xff] %v984
      %v995 = vld [vmem:[%s315 + $0x4] sm:$0xe]
      %v996 = vld [vmem:[%s315 + $0x8] sm:$0xf]
      %v997 = vld [vmem:[%s315 + $0xc] sm:$0xf]
      %v998 = vld [vmem:[%s315 + $0x10] sm:$0xf]
      %v999 = vld [vmem:[%s315 + $0x14] sm:$0xf]
      %v1000 = vld [vmem:[%s315 + $0x18] sm:$0xf]
      %v1001 = vld [vmem:[%s315 + $0x1c] sm:$0xf]
      %v1002 = vld [vmem:[%s315 + $0x20] sm:$0xf]
      %v1003 = vld [vmem:[%s315 + $0x24] sm:$0xf]
      %v1004 = vld [vmem:[%s315 + $0x28] sm:$0xf]
      %v1005 = vld [vmem:[%s315 + $0x2c] sm:$0x1]
      %s1006 = scalar_lea.vmem %s1, 192
      %v1007 = vld [vmem:[%s1006] sm:$0xf]
      %v1008 = vld [vmem:[%s1006 + $0x4] sm:$0xf]
      %v1009 = vld [vmem:[%s1006 + $0x8] sm:$0xf]
      %v1010 = vld [vmem:[%s1006 + $0xc] sm:$0xf]
      %v1011 = vld [vmem:[%s1006 + $0x10] sm:$0xf]
      %v1012 = vld [vmem:[%s1006 + $0x14] sm:$0xf]
      %v1013 = vld [vmem:[%s1006 + $0x18] sm:$0xf]
      %v1014 = vld [vmem:[%s1006 + $0x1c] sm:$0xf]
      %v1015 = vld [vmem:[%s1006 + $0x20] sm:$0xf]
      %v1016 = vld [vmem:[%s1006 + $0x24] sm:$0xf]
      %v1017 = vld [vmem:[%s1006 + $0x28] sm:$0xf]
      %v1018 = vld [vmem:[%s1006 + $0x2c] sm:$0xf]
      %v1019 = vld [vmem:[%s1006 + $0x30] sm:$0xf]
      %v1020 = vld [vmem:[%s1006 + $0x34] sm:$0xf]
      %v1021 = vld [vmem:[%s1006 + $0x38] sm:$0xf]
      %v1022 = vld [vmem:[%s1006 + $0x3c] sm:$0xf]
      %v1034 = vunpack.c.l.b16 %v995
      %v1035 = vunpack.c.l.b16 %v996
      %v1036 = vunpack.c.l.b16 %v997
      %v1037 = vunpack.c.l.b16 %v998
      %v1038 = vunpack.c.l.b16 %v999
      %v1039 = vunpack.c.l.b16 %v1000
      %v1040 = vunpack.c.l.b16 %v1001
      %v1041 = vunpack.c.l.b16 %v1002
      %v1042 = vunpack.c.l.b16 %v1003
      %v1043 = vunpack.c.l.b16 %v1004
      %v1044 = vunpack.c.l.b16 %v1005
      %v1045 = vpack.c.b16 %v1035, %v1034
      %v1046 = vpack.c.b16 %v1037, %v1036
      %v1047 = vpack.c.b16 %v1039, %v1038
      %v1048 = vpack.c.b16 %v1041, %v1040
      %v1049 = vpack.c.b16 %v1043, %v1042
      %v1050 = vpack.c.b16 %v1044, %v1044
      %v1051 = vrot.slane %v1045, 1
      %v1052 = vrot.slane %v1046, 1
      %v1053 = vsel %vm827, %v1051, %v1052
      %v1054 = vrot.slane %v1047, 1
      %v1055 = vsel %vm827, %v1052, %v1054
      %v1056 = vrot.slane %v1048, 1
      %v1057 = vsel %vm827, %v1054, %v1056
      %v1058 = vrot.slane %v1049, 1
      %v1059 = vsel %vm827, %v1056, %v1058
      %v1060 = vrot.slane %v1050, 1
      %v1061 = vsel %vm827, %v1058, %v1060
      %v1083 = vunpack.c.l.b16 %v1007
      %v1084 = vunpack.c.l.b16 %v1008
      %v1085 = vunpack.c.l.b16 %v1009
      %v1086 = vunpack.c.l.b16 %v1010
      %v1087 = vunpack.c.l.b16 %v1011
      %v1088 = vunpack.c.l.b16 %v1012
      %v1089 = vunpack.c.l.b16 %v1013
      %v1090 = vunpack.c.l.b16 %v1014
      %v1091 = vunpack.c.l.b16 %v1015
      %v1092 = vunpack.c.l.b16 %v1016
      %v1093 = vunpack.c.l.b16 %v1017
      %v1094 = vunpack.c.l.b16 %v1018
      %v1095 = vunpack.c.l.b16 %v1019
      %v1096 = vunpack.c.l.b16 %v1020
      %v1097 = vunpack.c.l.b16 %v1021
      %v1098 = vunpack.c.l.b16 %v1022
      %v1099 = vpack.c.b16 %v1084, %v1083
      %v1100 = vpack.c.b16 %v1086, %v1085
      %v1101 = vpack.c.b16 %v1088, %v1087
      %v1102 = vpack.c.b16 %v1090, %v1089
      %v1103 = vpack.c.b16 %v1092, %v1091
      %v1104 = vpack.c.b16 %v1094, %v1093
      %v1105 = vpack.c.b16 %v1096, %v1095
      %v1106 = vpack.c.b16 %v1098, %v1097
      %1115 = vmatprep.subr.bf16.mxu0 0
      %1116 = vmatpush1.bf16.msra.mxu0 %v1106
      %1117 = vmatprep.subr.bf16.mxu0 0
      %1118 = vmatpush1.bf16.msra.mxu0 %v1105
      %1119 = vmatprep.subr.bf16.mxu0 0
      %1120 = vmatpush1.bf16.msra.mxu0 %v1104
      %1121 = vmatprep.subr.bf16.mxu0 0
      %1122 = vmatpush1.bf16.msra.mxu0 %v1103
      %1123 = vmatprep.subr.bf16.mxu0 0
      %1124 = vmatpush1.bf16.msra.mxu0 %v1102
      %1125 = vmatprep.subr.bf16.mxu0 0
      %1126 = vmatpush1.bf16.msra.mxu0 %v1101
      %1127 = vmatprep.subr.bf16.mxu0 0
      %1128 = vmatpush1.bf16.msra.mxu0 %v1100
      %1129 = vmatprep.subr.bf16.mxu0 0
      %1130 = vmatpush1.bf16.msra.mxu0 %v1099
      %1131 = vmatprep.subr.bf16.mxu0 0
      %1132 = vmatpush2.bf16.msra.mxu0 0
      %1133 = vmatprep.subr.bf16.mxu0 0
      %1134 = vmatpush2.bf16.msra.mxu0 0
      %1135 = vmatprep.subr.bf16.mxu0 0
      %1136 = vmatpush2.bf16.msra.mxu0 0
      %1137 = vmatprep.subr.bf16.mxu0 0
      %1138 = vmatpush2.bf16.msra.mxu0 0
      %1139 = vmatprep.subr.bf16.mxu0 0
      %1140 = vmatpush2.bf16.msra.mxu0 0
      %1141 = vmatprep.subr.bf16.mxu0 0
      %1142 = vmatpush2.bf16.msra.mxu0 0
      %1143 = vmatprep.subr.bf16.mxu0 0
      %1144 = vmatpush2.bf16.msra.mxu0 0
      %1145 = vmatprep.subr.bf16.mxu0 0
      %1146 = vmatpush2.bf16.msra.mxu0 0
      %1147 = vmatprep.mubr.bf16.mxu0 0
      %1148 = vmatmul.mubr.bf16.gmra.mxu0 %v1053
      %v1149 = vpop.f32.mrf.mxu0
      %v1150 = vadd.f32 0.0, %v1149
      %v1151 = vpop.f32.mrf.mxu0
      %v1152 = vpop.f32.mrf.mxu0
      %v1153 = vadd.f32 0.0, %v1152
      %v1154 = vpop.f32.mrf.mxu0
      %1155 = vmatprep.mubr.bf16.mxu0 0
      %1156 = vmatmul.mubr.bf16.gmra.mxu0 %v1055
      %v1157 = vpop.f32.mrf.mxu0
      %v1158 = vadd.f32 0.0, %v1157
      %v1159 = vpop.f32.mrf.mxu0
      %v1160 = vpop.f32.mrf.mxu0
      %v1161 = vadd.f32 0.0, %v1160
      %v1162 = vpop.f32.mrf.mxu0
      %1163 = vmatprep.mubr.bf16.mxu0 0
      %1164 = vmatmul.mubr.bf16.gmra.mxu0 %v1057
      %v1165 = vpop.f32.mrf.mxu0
      %v1166 = vadd.f32 0.0, %v1165
      %v1167 = vpop.f32.mrf.mxu0
      %v1168 = vpop.f32.mrf.mxu0
      %v1169 = vadd.f32 0.0, %v1168
      %v1170 = vpop.f32.mrf.mxu0
      %1171 = vmatprep.mubr.bf16.mxu0 0
      %1172 = vmatmul.mubr.bf16.gmra.mxu0 %v1059
      %v1173 = vpop.f32.mrf.mxu0
      %v1174 = vadd.f32 0.0, %v1173
      %v1175 = vpop.f32.mrf.mxu0
      %v1176 = vpop.f32.mrf.mxu0
      %v1177 = vadd.f32 0.0, %v1176
      %v1178 = vpop.f32.mrf.mxu0
      %1179 = vmatprep.mubr.bf16.mxu0 0
      %1180 = vmatmul.mubr.bf16.gmra.mxu0 %v1061
      %v1181 = vpop.f32.mrf.mxu0
      %v1182 = vadd.f32 0.0, %v1181
      %v1183 = vpop.f32.mrf.mxu0
      %v1184 = vpop.f32.mrf.mxu0
      %v1185 = vadd.f32 0.0, %v1184
      %v1186 = vpop.f32.mrf.mxu0
      %1187 = vdwg.mxu0
      %v1188 = vld [vmem:[#allocation2] sm:$0xff]
      %v1189 = vld [vmem:[#allocation2 + $0x8] sm:$0xff]
      %v1190 = vld [vmem:[#allocation2 + $0x10] sm:$0xff]
      %v1191 = vld [vmem:[#allocation2 + $0x18] sm:$0xff]
      %v1192 = vld [vmem:[#allocation2 + $0x20] sm:$0xff]
      %v1193 = vld [vmem:[#allocation2 + $0x28] sm:$0xff]
      %v1194 = vld [vmem:[#allocation2 + $0x30] sm:$0xff]
      %v1195 = vld [vmem:[#allocation2 + $0x38] sm:$0xff]
      %v1196 = vld [vmem:[#allocation2 + $0x40] sm:$0xff]
      %v1197 = vld [vmem:[#allocation2 + $0x48] sm:$0xff]
      %v1198 = vadd.f32 %v1188, %v1150
      %v1199 = vadd.f32 %v1189, %v1153
      %v1200 = vadd.f32 %v1190, %v1158
      %v1201 = vadd.f32 %v1191, %v1161
      %v1202 = vadd.f32 %v1192, %v1166
      %v1203 = vadd.f32 %v1193, %v1169
      %v1204 = vadd.f32 %v1194, %v1174
      %v1205 = vadd.f32 %v1195, %v1177
      %v1206 = vadd.f32 %v1196, %v1182
      %v1207 = vadd.f32 %v1197, %v1185
      %1208 = vst [vmem:[#allocation2] sm:$0xff] %v1198
      %1209 = vst [vmem:[#allocation2 + $0x8] sm:$0xff] %v1199
      %1210 = vst [vmem:[#allocation2 + $0x10] sm:$0xff] %v1200
      %1211 = vst [vmem:[#allocation2 + $0x18] sm:$0xff] %v1201
      %1212 = vst [vmem:[#allocation2 + $0x20] sm:$0xff] %v1202
      %1213 = vst [vmem:[#allocation2 + $0x28] sm:$0xff] %v1203
      %1214 = vst [vmem:[#allocation2 + $0x30] sm:$0xff] %v1204
      %1215 = vst [vmem:[#allocation2 + $0x38] sm:$0xff] %v1205
      %1216 = vst [vmem:[#allocation2 + $0x40] sm:$0xff] %v1206
      %1217 = vst [vmem:[#allocation2 + $0x48] sm:$0xff] %v1207
      %v1218 = vld [vmem:[%s315 + $0x4] sm:$0xe]
      %v1219 = vld [vmem:[%s315 + $0x8] sm:$0xf]
      %v1220 = vld [vmem:[%s315 + $0xc] sm:$0xf]
      %v1221 = vld [vmem:[%s315 + $0x10] sm:$0xf]
      %v1222 = vld [vmem:[%s315 + $0x14] sm:$0xf]
      %v1223 = vld [vmem:[%s315 + $0x18] sm:$0xf]
      %v1224 = vld [vmem:[%s315 + $0x1c] sm:$0xf]
      %v1225 = vld [vmem:[%s315 + $0x20] sm:$0xf]
      %v1226 = vld [vmem:[%s315 + $0x24] sm:$0xf]
      %v1227 = vld [vmem:[%s315 + $0x28] sm:$0xf]
      %v1228 = vld [vmem:[%s315 + $0x2c] sm:$0x3]
      %s1229 = scalar_lea.vmem %s1, 256
      %v1230 = vld [vmem:[%s1229] sm:$0xf]
      %v1231 = vld [vmem:[%s1229 + $0x4] sm:$0xf]
      %v1232 = vld [vmem:[%s1229 + $0x8] sm:$0xf]
      %v1233 = vld [vmem:[%s1229 + $0xc] sm:$0xf]
      %v1234 = vld [vmem:[%s1229 + $0x10] sm:$0xf]
      %v1235 = vld [vmem:[%s1229 + $0x14] sm:$0xf]
      %v1236 = vld [vmem:[%s1229 + $0x18] sm:$0xf]
      %v1237 = vld [vmem:[%s1229 + $0x1c] sm:$0xf]
      %v1238 = vld [vmem:[%s1229 + $0x20] sm:$0xf]
      %v1239 = vld [vmem:[%s1229 + $0x24] sm:$0xf]
      %v1240 = vld [vmem:[%s1229 + $0x28] sm:$0xf]
      %v1241 = vld [vmem:[%s1229 + $0x2c] sm:$0xf]
      %v1242 = vld [vmem:[%s1229 + $0x30] sm:$0xf]
      %v1243 = vld [vmem:[%s1229 + $0x34] sm:$0xf]
      %v1244 = vld [vmem:[%s1229 + $0x38] sm:$0xf]
      %v1245 = vld [vmem:[%s1229 + $0x3c] sm:$0xf]
      %v1257 = vunpack.c.l.b16 %v1218
      %v1258 = vunpack.c.l.b16 %v1219
      %v1259 = vunpack.c.l.b16 %v1220
      %v1260 = vunpack.c.l.b16 %v1221
      %v1261 = vunpack.c.l.b16 %v1222
      %v1262 = vunpack.c.l.b16 %v1223
      %v1263 = vunpack.c.l.b16 %v1224
      %v1264 = vunpack.c.l.b16 %v1225
      %v1265 = vunpack.c.l.b16 %v1226
      %v1266 = vunpack.c.l.b16 %v1227
      %v1267 = vunpack.c.l.b16 %v1228
      %v1268 = vpack.c.b16 %v1258, %v1257
      %v1269 = vpack.c.b16 %v1260, %v1259
      %v1270 = vpack.c.b16 %v1262, %v1261
      %v1271 = vpack.c.b16 %v1264, %v1263
      %v1272 = vpack.c.b16 %v1266, %v1265
      %v1273 = vpack.c.b16 %v1267, %v1267
      %vm1274 = vsmask.f32 6400
      %v1276 = vshrl.u32 %v1268, 16
      %v1278 = vrot.slane %v1276, 1
      %v1279 = vshll.u32 %v1268, 16
      %v1281 = vrot.slane %v1279, 2
      %v1282 = vor.u32 %v1278, %v1281
      %v1284 = vshrl.u32 %v1269, 16
      %v1286 = vrot.slane %v1284, 1
      %v1287 = vshll.u32 %v1269, 16
      %v1289 = vrot.slane %v1287, 2
      %v1290 = vor.u32 %v1286, %v1289
      %v1291 = vsel %vm1274, %v1282, %v1290
      %v1293 = vshrl.u32 %v1270, 16
      %v1295 = vrot.slane %v1293, 1
      %v1296 = vshll.u32 %v1270, 16
      %v1298 = vrot.slane %v1296, 2
      %v1299 = vor.u32 %v1295, %v1298
      %v1300 = vsel %vm1274, %v1290, %v1299
      %v1302 = vshrl.u32 %v1271, 16
      %v1304 = vrot.slane %v1302, 1
      %v1305 = vshll.u32 %v1271, 16
      %v1307 = vrot.slane %v1305, 2
      %v1308 = vor.u32 %v1304, %v1307
      %v1309 = vsel %vm1274, %v1299, %v1308
      %v1311 = vshrl.u32 %v1272, 16
      %v1313 = vrot.slane %v1311, 1
      %v1314 = vshll.u32 %v1272, 16
      %v1316 = vrot.slane %v1314, 2
      %v1317 = vor.u32 %v1313, %v1316
      %v1318 = vsel %vm1274, %v1308, %v1317
      %v1320 = vshrl.u32 %v1273, 16
      %v1322 = vrot.slane %v1320, 1
      %v1323 = vshll.u32 %v1273, 16
      %v1325 = vrot.slane %v1323, 2
      %v1326 = vor.u32 %v1322, %v1325
      %v1327 = vsel %vm1274, %v1317, %v1326
      %v1349 = vunpack.c.l.b16 %v1230
      %v1350 = vunpack.c.l.b16 %v1231
      %v1351 = vunpack.c.l.b16 %v1232
      %v1352 = vunpack.c.l.b16 %v1233
      %v1353 = vunpack.c.l.b16 %v1234
      %v1354 = vunpack.c.l.b16 %v1235
      %v1355 = vunpack.c.l.b16 %v1236
      %v1356 = vunpack.c.l.b16 %v1237
      %v1357 = vunpack.c.l.b16 %v1238
      %v1358 = vunpack.c.l.b16 %v1239
      %v1359 = vunpack.c.l.b16 %v1240
      %v1360 = vunpack.c.l.b16 %v1241
      %v1361 = vunpack.c.l.b16 %v1242
      %v1362 = vunpack.c.l.b16 %v1243
      %v1363 = vunpack.c.l.b16 %v1244
      %v1364 = vunpack.c.l.b16 %v1245
      %v1365 = vpack.c.b16 %v1350, %v1349
      %v1366 = vpack.c.b16 %v1352, %v1351
      %v1367 = vpack.c.b16 %v1354, %v1353
      %v1368 = vpack.c.b16 %v1356, %v1355
      %v1369 = vpack.c.b16 %v1358, %v1357
      %v1370 = vpack.c.b16 %v1360, %v1359
      %v1371 = vpack.c.b16 %v1362, %v1361
      %v1372 = vpack.c.b16 %v1364, %v1363
      %1381 = vmatprep.subr.bf16.mxu0 0
      %1382 = vmatpush1.bf16.msra.mxu0 %v1372
      %1383 = vmatprep.subr.bf16.mxu0 0
      %1384 = vmatpush1.bf16.msra.mxu0 %v1371
      %1385 = vmatprep.subr.bf16.mxu0 0
      %1386 = vmatpush1.bf16.msra.mxu0 %v1370
      %1387 = vmatprep.subr.bf16.mxu0 0
      %1388 = vmatpush1.bf16.msra.mxu0 %v1369
      %1389 = vmatprep.subr.bf16.mxu0 0
      %1390 = vmatpush1.bf16.msra.mxu0 %v1368
      %1391 = vmatprep.subr.bf16.mxu0 0
      %1392 = vmatpush1.bf16.msra.mxu0 %v1367
      %1393 = vmatprep.subr.bf16.mxu0 0
      %1394 = vmatpush1.bf16.msra.mxu0 %v1366
      %1395 = vmatprep.subr.bf16.mxu0 0
      %1396 = vmatpush1.bf16.msra.mxu0 %v1365
      %1397 = vmatprep.subr.bf16.mxu0 0
      %1398 = vmatpush2.bf16.msra.mxu0 0
      %1399 = vmatprep.subr.bf16.mxu0 0
      %1400 = vmatpush2.bf16.msra.mxu0 0
      %1401 = vmatprep.subr.bf16.mxu0 0
      %1402 = vmatpush2.bf16.msra.mxu0 0
      %1403 = vmatprep.subr.bf16.mxu0 0
      %1404 = vmatpush2.bf16.msra.mxu0 0
      %1405 = vmatprep.subr.bf16.mxu0 0
      %1406 = vmatpush2.bf16.msra.mxu0 0
      %1407 = vmatprep.subr.bf16.mxu0 0
      %1408 = vmatpush2.bf16.msra.mxu0 0
      %1409 = vmatprep.subr.bf16.mxu0 0
      %1410 = vmatpush2.bf16.msra.mxu0 0
      %1411 = vmatprep.subr.bf16.mxu0 0
      %1412 = vmatpush2.bf16.msra.mxu0 0
      %1413 = vmatprep.mubr.bf16.mxu0 0
      %1414 = vmatmul.mubr.bf16.gmra.mxu0 %v1291
      %v1415 = vpop.f32.mrf.mxu0
      %v1416 = vadd.f32 0.0, %v1415
      %v1417 = vpop.f32.mrf.mxu0
      %v1418 = vpop.f32.mrf.mxu0
      %v1419 = vadd.f32 0.0, %v1418
      %v1420 = vpop.f32.mrf.mxu0
      %1421 = vmatprep.mubr.bf16.mxu0 0
      %1422 = vmatmul.mubr.bf16.gmra.mxu0 %v1300
      %v1423 = vpop.f32.mrf.mxu0
      %v1424 = vadd.f32 0.0, %v1423
      %v1425 = vpop.f32.mrf.mxu0
      %v1426 = vpop.f32.mrf.mxu0
      %v1427 = vadd.f32 0.0, %v1426
      %v1428 = vpop.f32.mrf.mxu0
      %1429 = vmatprep.mubr.bf16.mxu0 0
      %1430 = vmatmul.mubr.bf16.gmra.mxu0 %v1309
      %v1431 = vpop.f32.mrf.mxu0
      %v1432 = vadd.f32 0.0, %v1431
      %v1433 = vpop.f32.mrf.mxu0
      %v1434 = vpop.f32.mrf.mxu0
      %v1435 = vadd.f32 0.0, %v1434
      %v1436 = vpop.f32.mrf.mxu0
      %1437 = vmatprep.mubr.bf16.mxu0 0
      %1438 = vmatmul.mubr.bf16.gmra.mxu0 %v1318
      %v1439 = vpop.f32.mrf.mxu0
      %v1440 = vadd.f32 0.0, %v1439
      %v1441 = vpop.f32.mrf.mxu0
      %v1442 = vpop.f32.mrf.mxu0
      %v1443 = vadd.f32 0.0, %v1442
      %v1444 = vpop.f32.mrf.mxu0
      %1445 = vmatprep.mubr.bf16.mxu0 0
      %1446 = vmatmul.mubr.bf16.gmra.mxu0 %v1327
      %v1447 = vpop.f32.mrf.mxu0
      %v1448 = vadd.f32 0.0, %v1447
      %v1449 = vpop.f32.mrf.mxu0
      %v1450 = vpop.f32.mrf.mxu0
      %v1451 = vadd.f32 0.0, %v1450
      %v1452 = vpop.f32.mrf.mxu0
      %1453 = vdwg.mxu0
      %v1454 = vld [vmem:[#allocation2] sm:$0xff]
      %v1455 = vld [vmem:[#allocation2 + $0x8] sm:$0xff]
      %v1456 = vld [vmem:[#allocation2 + $0x10] sm:$0xff]
      %v1457 = vld [vmem:[#allocation2 + $0x18] sm:$0xff]
      %v1458 = vld [vmem:[#allocation2 + $0x20] sm:$0xff]
      %v1459 = vld [vmem:[#allocation2 + $0x28] sm:$0xff]
      %v1460 = vld [vmem:[#allocation2 + $0x30] sm:$0xff]
      %v1461 = vld [vmem:[#allocation2 + $0x38] sm:$0xff]
      %v1462 = vld [vmem:[#allocation2 + $0x40] sm:$0xff]
      %v1463 = vld [vmem:[#allocation2 + $0x48] sm:$0xff]
      %v1464 = vadd.f32 %v1454, %v1416
      %v1465 = vadd.f32 %v1455, %v1419
      %v1466 = vadd.f32 %v1456, %v1424
      %v1467 = vadd.f32 %v1457, %v1427
      %v1468 = vadd.f32 %v1458, %v1432
      %v1469 = vadd.f32 %v1459, %v1435
      %v1470 = vadd.f32 %v1460, %v1440
      %v1471 = vadd.f32 %v1461, %v1443
      %v1472 = vadd.f32 %v1462, %v1448
      %v1473 = vadd.f32 %v1463, %v1451
      %1474 = vst [vmem:[#allocation2] sm:$0xff] %v1464
      %1475 = vst [vmem:[#allocation2 + $0x8] sm:$0xff] %v1465
      %1476 = vst [vmem:[#allocation2 + $0x10] sm:$0xff] %v1466
      %1477 = vst [vmem:[#allocation2 + $0x18] sm:$0xff] %v1467
      %1478 = vst [vmem:[#allocation2 + $0x20] sm:$0xff] %v1468
      %1479 = vst [vmem:[#allocation2 + $0x28] sm:$0xff] %v1469
      %1480 = vst [vmem:[#allocation2 + $0x30] sm:$0xff] %v1470
      %1481 = vst [vmem:[#allocation2 + $0x38] sm:$0xff] %v1471
      %1482 = vst [vmem:[#allocation2 + $0x40] sm:$0xff] %v1472
      %1483 = vst [vmem:[#allocation2 + $0x48] sm:$0xff] %v1473
      %v1484 = vld [vmem:[%s315 + $0x4] sm:$0xc]
      %v1485 = vld [vmem:[%s315 + $0x8] sm:$0xf]
      %v1486 = vld [vmem:[%s315 + $0xc] sm:$0xf]
      %v1487 = vld [vmem:[%s315 + $0x10] sm:$0xf]
      %v1488 = vld [vmem:[%s315 + $0x14] sm:$0xf]
      %v1489 = vld [vmem:[%s315 + $0x18] sm:$0xf]
      %v1490 = vld [vmem:[%s315 + $0x1c] sm:$0xf]
      %v1491 = vld [vmem:[%s315 + $0x20] sm:$0xf]
      %v1492 = vld [vmem:[%s315 + $0x24] sm:$0xf]
      %v1493 = vld [vmem:[%s315 + $0x28] sm:$0xf]
      %v1494 = vld [vmem:[%s315 + $0x2c] sm:$0x3]
      %s1495 = scalar_lea.vmem %s1, 320
      %v1496 = vld [vmem:[%s1495] sm:$0xf]
      %v1497 = vld [vmem:[%s1495 + $0x4] sm:$0xf]
      %v1498 = vld [vmem:[%s1495 + $0x8] sm:$0xf]
      %v1499 = vld [vmem:[%s1495 + $0xc] sm:$0xf]
      %v1500 = vld [vmem:[%s1495 + $0x10] sm:$0xf]
      %v1501 = vld [vmem:[%s1495 + $0x14] sm:$0xf]
      %v1502 = vld [vmem:[%s1495 + $0x18] sm:$0xf]
      %v1503 = vld [vmem:[%s1495 + $0x1c] sm:$0xf]
      %v1504 = vld [vmem:[%s1495 + $0x20] sm:$0xf]
      %v1505 = vld [vmem:[%s1495 + $0x24] sm:$0xf]
      %v1506 = vld [vmem:[%s1495 + $0x28] sm:$0xf]
      %v1507 = vld [vmem:[%s1495 + $0x2c] sm:$0xf]
      %v1508 = vld [vmem:[%s1495 + $0x30] sm:$0xf]
      %v1509 = vld [vmem:[%s1495 + $0x34] sm:$0xf]
      %v1510 = vld [vmem:[%s1495 + $0x38] sm:$0xf]
      %v1511 = vld [vmem:[%s1495 + $0x3c] sm:$0xf]
      %v1523 = vunpack.c.l.b16 %v1484
      %v1524 = vunpack.c.l.b16 %v1485
      %v1525 = vunpack.c.l.b16 %v1486
      %v1526 = vunpack.c.l.b16 %v1487
      %v1527 = vunpack.c.l.b16 %v1488
      %v1528 = vunpack.c.l.b16 %v1489
      %v1529 = vunpack.c.l.b16 %v1490
      %v1530 = vunpack.c.l.b16 %v1491
      %v1531 = vunpack.c.l.b16 %v1492
      %v1532 = vunpack.c.l.b16 %v1493
      %v1533 = vunpack.c.l.b16 %v1494
      %v1534 = vpack.c.b16 %v1524, %v1523
      %v1535 = vpack.c.b16 %v1526, %v1525
      %v1536 = vpack.c.b16 %v1528, %v1527
      %v1537 = vpack.c.b16 %v1530, %v1529
      %v1538 = vpack.c.b16 %v1532, %v1531
      %v1539 = vpack.c.b16 %v1533, %v1533
      %vm1540 = vcmask 1045504
      %v1541 = vrot.slane %v1534, 2
      %v1542 = vrot.slane %v1535, 2
      %v1543 = vsel %vm1540, %v1541, %v1542
      %v1544 = vrot.slane %v1536, 2
      %v1545 = vsel %vm1540, %v1542, %v1544
      %v1546 = vrot.slane %v1537, 2
      %v1547 = vsel %vm1540, %v1544, %v1546
      %v1548 = vrot.slane %v1538, 2
      %v1549 = vsel %vm1540, %v1546, %v1548
      %v1550 = vrot.slane %v1539, 2
      %v1551 = vsel %vm1540, %v1548, %v1550
      %v1573 = vunpack.c.l.b16 %v1496
      %v1574 = vunpack.c.l.b16 %v1497
      %v1575 = vunpack.c.l.b16 %v1498
      %v1576 = vunpack.c.l.b16 %v1499
      %v1577 = vunpack.c.l.b16 %v1500
      %v1578 = vunpack.c.l.b16 %v1501
      %v1579 = vunpack.c.l.b16 %v1502
      %v1580 = vunpack.c.l.b16 %v1503
      %v1581 = vunpack.c.l.b16 %v1504
      %v1582 = vunpack.c.l.b16 %v1505
      %v1583 = vunpack.c.l.b16 %v1506
      %v1584 = vunpack.c.l.b16 %v1507
      %v1585 = vunpack.c.l.b16 %v1508
      %v1586 = vunpack.c.l.b16 %v1509
      %v1587 = vunpack.c.l.b16 %v1510
      %v1588 = vunpack.c.l.b16 %v1511
      %v1589 = vpack.c.b16 %v1574, %v1573
      %v1590 = vpack.c.b16 %v1576, %v1575
      %v1591 = vpack.c.b16 %v1578, %v1577
      %v1592 = vpack.c.b16 %v1580, %v1579
      %v1593 = vpack.c.b16 %v1582, %v1581
      %v1594 = vpack.c.b16 %v1584, %v1583
      %v1595 = vpack.c.b16 %v1586, %v1585
      %v1596 = vpack.c.b16 %v1588, %v1587
      %1605 = vmatprep.subr.bf16.mxu0 0
      %1606 = vmatpush1.bf16.msra.mxu0 %v1596
      %1607 = vmatprep.subr.bf16.mxu0 0
      %1608 = vmatpush1.bf16.msra.mxu0 %v1595
      %1609 = vmatprep.subr.bf16.mxu0 0
      %1610 = vmatpush1.bf16.msra.mxu0 %v1594
      %1611 = vmatprep.subr.bf16.mxu0 0
      %1612 = vmatpush1.bf16.msra.mxu0 %v1593
      %1613 = vmatprep.subr.bf16.mxu0 0
      %1614 = vmatpush1.bf16.msra.mxu0 %v1592
      %1615 = vmatprep.subr.bf16.mxu0 0
      %1616 = vmatpush1.bf16.msra.mxu0 %v1591
      %1617 = vmatprep.subr.bf16.mxu0 0
      %1618 = vmatpush1.bf16.msra.mxu0 %v1590
      %1619 = vmatprep.subr.bf16.mxu0 0
      %1620 = vmatpush1.bf16.msra.mxu0 %v1589
      %1621 = vmatprep.subr.bf16.mxu0 0
      %1622 = vmatpush2.bf16.msra.mxu0 0
      %1623 = vmatprep.subr.bf16.mxu0 0
      %1624 = vmatpush2.bf16.msra.mxu0 0
      %1625 = vmatprep.subr.bf16.mxu0 0
      %1626 = vmatpush2.bf16.msra.mxu0 0
      %1627 = vmatprep.subr.bf16.mxu0 0
      %1628 = vmatpush2.bf16.msra.mxu0 0
      %1629 = vmatprep.subr.bf16.mxu0 0
      %1630 = vmatpush2.bf16.msra.mxu0 0
      %1631 = vmatprep.subr.bf16.mxu0 0
      %1632 = vmatpush2.bf16.msra.mxu0 0
      %1633 = vmatprep.subr.bf16.mxu0 0
      %1634 = vmatpush2.bf16.msra.mxu0 0
      %1635 = vmatprep.subr.bf16.mxu0 0
      %1636 = vmatpush2.bf16.msra.mxu0 0
      %1637 = vmatprep.mubr.bf16.mxu0 0
      %1638 = vmatmul.mubr.bf16.gmra.mxu0 %v1543
      %v1639 = vpop.f32.mrf.mxu0
      %v1640 = vadd.f32 0.0, %v1639
      %v1641 = vpop.f32.mrf.mxu0
      %v1642 = vpop.f32.mrf.mxu0
      %v1643 = vadd.f32 0.0, %v1642
      %v1644 = vpop.f32.mrf.mxu0
      %1645 = vmatprep.mubr.bf16.mxu0 0
      %1646 = vmatmul.mubr.bf16.gmra.mxu0 %v1545
      %v1647 = vpop.f32.mrf.mxu0
      %v1648 = vadd.f32 0.0, %v1647
      %v1649 = vpop.f32.mrf.mxu0
      %v1650 = vpop.f32.mrf.mxu0
      %v1651 = vadd.f32 0.0, %v1650
      %v1652 = vpop.f32.mrf.mxu0
      %1653 = vmatprep.mubr.bf16.mxu0 0
      %1654 = vmatmul.mubr.bf16.gmra.mxu0 %v1547
      %v1655 = vpop.f32.mrf.mxu0
      %v1656 = vadd.f32 0.0, %v1655
      %v1657 = vpop.f32.mrf.mxu0
      %v1658 = vpop.f32.mrf.mxu0
      %v1659 = vadd.f32 0.0, %v1658
      %v1660 = vpop.f32.mrf.mxu0
      %1661 = vmatprep.mubr.bf16.mxu0 0
      %1662 = vmatmul.mubr.bf16.gmra.mxu0 %v1549
      %v1663 = vpop.f32.mrf.mxu0
      %v1664 = vadd.f32 0.0, %v1663
      %v1665 = vpop.f32.mrf.mxu0
      %v1666 = vpop.f32.mrf.mxu0
      %v1667 = vadd.f32 0.0, %v1666
      %v1668 = vpop.f32.mrf.mxu0
      %1669 = vmatprep.mubr.bf16.mxu0 0
      %1670 = vmatmul.mubr.bf16.gmra.mxu0 %v1551
      %v1671 = vpop.f32.mrf.mxu0
      %v1672 = vadd.f32 0.0, %v1671
      %v1673 = vpop.f32.mrf.mxu0
      %v1674 = vpop.f32.mrf.mxu0
      %v1675 = vadd.f32 0.0, %v1674
      %v1676 = vpop.f32.mrf.mxu0
      %1677 = vdwg.mxu0
      %v1678 = vld [vmem:[#allocation2] sm:$0xff]
      %v1679 = vld [vmem:[#allocation2 + $0x8] sm:$0xff]
      %v1680 = vld [vmem:[#allocation2 + $0x10] sm:$0xff]
      %v1681 = vld [vmem:[#allocation2 + $0x18] sm:$0xff]
      %v1682 = vld [vmem:[#allocation2 + $0x20] sm:$0xff]
      %v1683 = vld [vmem:[#allocation2 + $0x28] sm:$0xff]
      %v1684 = vld [vmem:[#allocation2 + $0x30] sm:$0xff]
      %v1685 = vld [vmem:[#allocation2 + $0x38] sm:$0xff]
      %v1686 = vld [vmem:[#allocation2 + $0x40] sm:$0xff]
      %v1687 = vld [vmem:[#allocation2 + $0x48] sm:$0xff]
      %v1688 = vadd.f32 %v1678, %v1640
      %v1689 = vadd.f32 %v1679, %v1643
      %v1690 = vadd.f32 %v1680, %v1648
      %v1691 = vadd.f32 %v1681, %v1651
      %v1692 = vadd.f32 %v1682, %v1656
      %v1693 = vadd.f32 %v1683, %v1659
      %v1694 = vadd.f32 %v1684, %v1664
      %v1695 = vadd.f32 %v1685, %v1667
      %v1696 = vadd.f32 %v1686, %v1672
      %v1697 = vadd.f32 %v1687, %v1675
      %1698 = vst [vmem:[#allocation2] sm:$0xff] %v1688
      %1699 = vst [vmem:[#allocation2 + $0x8] sm:$0xff] %v1689
      %1700 = vst [vmem:[#allocation2 + $0x10] sm:$0xff] %v1690
      %1701 = vst [vmem:[#allocation2 + $0x18] sm:$0xff] %v1691
      %1702 = vst [vmem:[#allocation2 + $0x20] sm:$0xff] %v1692
      %1703 = vst [vmem:[#allocation2 + $0x28] sm:$0xff] %v1693
      %1704 = vst [vmem:[#allocation2 + $0x30] sm:$0xff] %v1694
      %1705 = vst [vmem:[#allocation2 + $0x38] sm:$0xff] %v1695
      %1706 = vst [vmem:[#allocation2 + $0x40] sm:$0xff] %v1696
      %1707 = vst [vmem:[#allocation2 + $0x48] sm:$0xff] %v1697
      %v1708 = vld [vmem:[%s315 + $0x8] sm:$0xc]
      %v1709 = vld [vmem:[%s315 + $0xc] sm:$0xf]
      %v1710 = vld [vmem:[%s315 + $0x10] sm:$0xf]
      %v1711 = vld [vmem:[%s315 + $0x14] sm:$0xf]
      %v1712 = vld [vmem:[%s315 + $0x18] sm:$0xf]
      %v1713 = vld [vmem:[%s315 + $0x1c] sm:$0xf]
      %v1714 = vld [vmem:[%s315 + $0x20] sm:$0xf]
      %v1715 = vld [vmem:[%s315 + $0x24] sm:$0xf]
      %v1716 = vld [vmem:[%s315 + $0x28] sm:$0xf]
      %v1717 = vld [vmem:[%s315 + $0x2c] sm:$0xf]
      %v1718 = vld [vmem:[%s315 + $0x30] sm:$0x3]
      %s1719 = scalar_lea.vmem %s1, 384
      %v1720 = vld [vmem:[%s1719] sm:$0xf]
      %v1721 = vld [vmem:[%s1719 + $0x4] sm:$0xf]
      %v1722 = vld [vmem:[%s1719 + $0x8] sm:$0xf]
      %v1723 = vld [vmem:[%s1719 + $0xc] sm:$0xf]
      %v1724 = vld [vmem:[%s1719 + $0x10] sm:$0xf]
      %v1725 = vld [vmem:[%s1719 + $0x14] sm:$0xf]
      %v1726 = vld [vmem:[%s1719 + $0x18] sm:$0xf]
      %v1727 = vld [vmem:[%s1719 + $0x1c] sm:$0xf]
      %v1728 = vld [vmem:[%s1719 + $0x20] sm:$0xf]
      %v1729 = vld [vmem:[%s1719 + $0x24] sm:$0xf]
      %v1730 = vld [vmem:[%s1719 + $0x28] sm:$0xf]
      %v1731 = vld [vmem:[%s1719 + $0x2c] sm:$0xf]
      %v1732 = vld [vmem:[%s1719 + $0x30] sm:$0xf]
      %v1733 = vld [vmem:[%s1719 + $0x34] sm:$0xf]
      %v1734 = vld [vmem:[%s1719 + $0x38] sm:$0xf]
      %v1735 = vld [vmem:[%s1719 + $0x3c] sm:$0xf]
      %v1747 = vunpack.c.l.b16 %v1708
      %v1748 = vunpack.c.l.b16 %v1709
      %v1749 = vunpack.c.l.b16 %v1710
      %v1750 = vunpack.c.l.b16 %v1711
      %v1751 = vunpack.c.l.b16 %v1712
      %v1752 = vunpack.c.l.b16 %v1713
      %v1753 = vunpack.c.l.b16 %v1714
      %v1754 = vunpack.c.l.b16 %v1715
      %v1755 = vunpack.c.l.b16 %v1716
      %v1756 = vunpack.c.l.b16 %v1717
      %v1757 = vunpack.c.l.b16 %v1718
      %v1758 = vpack.c.b16 %v1748, %v1747
      %v1759 = vpack.c.b16 %v1750, %v1749
      %v1760 = vpack.c.b16 %v1752, %v1751
      %v1761 = vpack.c.b16 %v1754, %v1753
      %v1762 = vpack.c.b16 %v1756, %v1755
      %v1763 = vpack.c.b16 %v1757, %v1757
      %v1764 = vrot.slane %v1758, 2
      %v1765 = vrot.slane %v1759, 2
      %v1766 = vsel %vm1540, %v1764, %v1765
      %v1767 = vrot.slane %v1760, 2
      %v1768 = vsel %vm1540, %v1765, %v1767
      %v1769 = vrot.slane %v1761, 2
      %v1770 = vsel %vm1540, %v1767, %v1769
      %v1771 = vrot.slane %v1762, 2
      %v1772 = vsel %vm1540, %v1769, %v1771
      %v1773 = vrot.slane %v1763, 2
      %v1774 = vsel %vm1540, %v1771, %v1773
      %v1796 = vunpack.c.l.b16 %v1720
      %v1797 = vunpack.c.l.b16 %v1721
      %v1798 = vunpack.c.l.b16 %v1722
      %v1799 = vunpack.c.l.b16 %v1723
      %v1800 = vunpack.c.l.b16 %v1724
      %v1801 = vunpack.c.l.b16 %v1725
      %v1802 = vunpack.c.l.b16 %v1726
      %v1803 = vunpack.c.l.b16 %v1727
      %v1804 = vunpack.c.l.b16 %v1728
      %v1805 = vunpack.c.l.b16 %v1729
      %v1806 = vunpack.c.l.b16 %v1730
      %v1807 = vunpack.c.l.b16 %v1731
      %v1808 = vunpack.c.l.b16 %v1732
      %v1809 = vunpack.c.l.b16 %v1733
      %v1810 = vunpack.c.l.b16 %v1734
      %v1811 = vunpack.c.l.b16 %v1735
      %v1812 = vpack.c.b16 %v1797, %v1796
      %v1813 = vpack.c.b16 %v1799, %v1798
      %v1814 = vpack.c.b16 %v1801, %v1800
      %v1815 = vpack.c.b16 %v1803, %v1802
      %v1816 = vpack.c.b16 %v1805, %v1804
      %v1817 = vpack.c.b16 %v1807, %v1806
      %v1818 = vpack.c.b16 %v1809, %v1808
      %v1819 = vpack.c.b16 %v1811, %v1810
      %1828 = vmatprep.subr.bf16.mxu0 0
      %1829 = vmatpush1.bf16.msra.mxu0 %v1819
      %1830 = vmatprep.subr.bf16.mxu0 0
      %1831 = vmatpush1.bf16.msra.mxu0 %v1818
      %1832 = vmatprep.subr.bf16.mxu0 0
      %1833 = vmatpush1.bf16.msra.mxu0 %v1817
      %1834 = vmatprep.subr.bf16.mxu0 0
      %1835 = vmatpush1.bf16.msra.mxu0 %v1816
      %1836 = vmatprep.subr.bf16.mxu0 0
      %1837 = vmatpush1.bf16.msra.mxu0 %v1815
      %1838 = vmatprep.subr.bf16.mxu0 0
      %1839 = vmatpush1.bf16.msra.mxu0 %v1814
      %1840 = vmatprep.subr.bf16.mxu0 0
      %1841 = vmatpush1.bf16.msra.mxu0 %v1813
      %1842 = vmatprep.subr.bf16.mxu0 0
      %1843 = vmatpush1.bf16.msra.mxu0 %v1812
      %1844 = vmatprep.subr.bf16.mxu0 0
      %1845 = vmatpush2.bf16.msra.mxu0 0
      %1846 = vmatprep.subr.bf16.mxu0 0
      %1847 = vmatpush2.bf16.msra.mxu0 0
      %1848 = vmatprep.subr.bf16.mxu0 0
      %1849 = vmatpush2.bf16.msra.mxu0 0
      %1850 = vmatprep.subr.bf16.mxu0 0
      %1851 = vmatpush2.bf16.msra.mxu0 0
      %1852 = vmatprep.subr.bf16.mxu0 0
      %1853 = vmatpush2.bf16.msra.mxu0 0
      %1854 = vmatprep.subr.bf16.mxu0 0
      %1855 = vmatpush2.bf16.msra.mxu0 0
      %1856 = vmatprep.subr.bf16.mxu0 0
      %1857 = vmatpush2.bf16.msra.mxu0 0
      %1858 = vmatprep.subr.bf16.mxu0 0
      %1859 = vmatpush2.bf16.msra.mxu0 0
      %1860 = vmatprep.mubr.bf16.mxu0 0
      %1861 = vmatmul.mubr.bf16.gmra.mxu0 %v1766
      %v1862 = vpop.f32.mrf.mxu0
      %v1863 = vadd.f32 0.0, %v1862
      %v1864 = vpop.f32.mrf.mxu0
      %v1865 = vpop.f32.mrf.mxu0
      %v1866 = vadd.f32 0.0, %v1865
      %v1867 = vpop.f32.mrf.mxu0
      %1868 = vmatprep.mubr.bf16.mxu0 0
      %1869 = vmatmul.mubr.bf16.gmra.mxu0 %v1768
      %v1870 = vpop.f32.mrf.mxu0
      %v1871 = vadd.f32 0.0, %v1870
      %v1872 = vpop.f32.mrf.mxu0
      %v1873 = vpop.f32.mrf.mxu0
      %v1874 = vadd.f32 0.0, %v1873
      %v1875 = vpop.f32.mrf.mxu0
      %1876 = vmatprep.mubr.bf16.mxu0 0
      %1877 = vmatmul.mubr.bf16.gmra.mxu0 %v1770
      %v1878 = vpop.f32.mrf.mxu0
      %v1879 = vadd.f32 0.0, %v1878
      %v1880 = vpop.f32.mrf.mxu0
      %v1881 = vpop.f32.mrf.mxu0
      %v1882 = vadd.f32 0.0, %v1881
      %v1883 = vpop.f32.mrf.mxu0
      %1884 = vmatprep.mubr.bf16.mxu0 0
      %1885 = vmatmul.mubr.bf16.gmra.mxu0 %v1772
      %v1886 = vpop.f32.mrf.mxu0
      %v1887 = vadd.f32 0.0, %v1886
      %v1888 = vpop.f32.mrf.mxu0
      %v1889 = vpop.f32.mrf.mxu0
      %v1890 = vadd.f32 0.0, %v1889
      %v1891 = vpop.f32.mrf.mxu0
      %1892 = vmatprep.mubr.bf16.mxu0 0
      %1893 = vmatmul.mubr.bf16.gmra.mxu0 %v1774
      %v1894 = vpop.f32.mrf.mxu0
      %v1895 = vadd.f32 0.0, %v1894
      %v1896 = vpop.f32.mrf.mxu0
      %v1897 = vpop.f32.mrf.mxu0
      %v1898 = vadd.f32 0.0, %v1897
      %v1899 = vpop.f32.mrf.mxu0
      %1900 = vdwg.mxu0
      %v1901 = vld [vmem:[#allocation2] sm:$0xff]
      %v1902 = vld [vmem:[#allocation2 + $0x8] sm:$0xff]
      %v1903 = vld [vmem:[#allocation2 + $0x10] sm:$0xff]
      %v1904 = vld [vmem:[#allocation2 + $0x18] sm:$0xff]
      %v1905 = vld [vmem:[#allocation2 + $0x20] sm:$0xff]
      %v1906 = vld [vmem:[#allocation2 + $0x28] sm:$0xff]
      %v1907 = vld [vmem:[#allocation2 + $0x30] sm:$0xff]
      %v1908 = vld [vmem:[#allocation2 + $0x38] sm:$0xff]
      %v1909 = vld [vmem:[#allocation2 + $0x40] sm:$0xff]
      %v1910 = vld [vmem:[#allocation2 + $0x48] sm:$0xff]
      %v1911 = vadd.f32 %v1901, %v1863
      %v1912 = vadd.f32 %v1902, %v1866
      %v1913 = vadd.f32 %v1903, %v1871
      %v1914 = vadd.f32 %v1904, %v1874
      %v1915 = vadd.f32 %v1905, %v1879
      %v1916 = vadd.f32 %v1906, %v1882
      %v1917 = vadd.f32 %v1907, %v1887
      %v1918 = vadd.f32 %v1908, %v1890
      %v1919 = vadd.f32 %v1909, %v1895
      %v1920 = vadd.f32 %v1910, %v1898
      %1921 = vst [vmem:[#allocation2] sm:$0xff] %v1911
      %1922 = vst [vmem:[#allocation2 + $0x8] sm:$0xff] %v1912
      %1923 = vst [vmem:[#allocation2 + $0x10] sm:$0xff] %v1913
      %1924 = vst [vmem:[#allocation2 + $0x18] sm:$0xff] %v1914
      %1925 = vst [vmem:[#allocation2 + $0x20] sm:$0xff] %v1915
      %1926 = vst [vmem:[#allocation2 + $0x28] sm:$0xff] %v1916
      %1927 = vst [vmem:[#allocation2 + $0x30] sm:$0xff] %v1917
      %1928 = vst [vmem:[#allocation2 + $0x38] sm:$0xff] %v1918
      %1929 = vst [vmem:[#allocation2 + $0x40] sm:$0xff] %v1919
      %1930 = vst [vmem:[#allocation2 + $0x48] sm:$0xff] %v1920
      %v1931 = vld [vmem:[%s315 + $0x8] sm:$0xc]
      %v1932 = vld [vmem:[%s315 + $0xc] sm:$0xf]
      %v1933 = vld [vmem:[%s315 + $0x10] sm:$0xf]
      %v1934 = vld [vmem:[%s315 + $0x14] sm:$0xf]
      %v1935 = vld [vmem:[%s315 + $0x18] sm:$0xf]
      %v1936 = vld [vmem:[%s315 + $0x1c] sm:$0xf]
      %v1937 = vld [vmem:[%s315 + $0x20] sm:$0xf]
      %v1938 = vld [vmem:[%s315 + $0x24] sm:$0xf]
      %v1939 = vld [vmem:[%s315 + $0x28] sm:$0xf]
      %v1940 = vld [vmem:[%s315 + $0x2c] sm:$0xf]
      %v1941 = vld [vmem:[%s315 + $0x30] sm:$0x7]
      %s1942 = scalar_lea.vmem %s1, 448
      %v1943 = vld [vmem:[%s1942] sm:$0xf]
      %v1944 = vld [vmem:[%s1942 + $0x4] sm:$0xf]
      %v1945 = vld [vmem:[%s1942 + $0x8] sm:$0xf]
      %v1946 = vld [vmem:[%s1942 + $0xc] sm:$0xf]
      %v1947 = vld [vmem:[%s1942 + $0x10] sm:$0xf]
      %v1948 = vld [vmem:[%s1942 + $0x14] sm:$0xf]
      %v1949 = vld [vmem:[%s1942 + $0x18] sm:$0xf]
      %v1950 = vld [vmem:[%s1942 + $0x1c] sm:$0xf]
      %v1951 = vld [vmem:[%s1942 + $0x20] sm:$0xf]
      %v1952 = vld [vmem:[%s1942 + $0x24] sm:$0xf]
      %v1953 = vld [vmem:[%s1942 + $0x28] sm:$0xf]
      %v1954 = vld [vmem:[%s1942 + $0x2c] sm:$0xf]
      %v1955 = vld [vmem:[%s1942 + $0x30] sm:$0xf]
      %v1956 = vld [vmem:[%s1942 + $0x34] sm:$0xf]
      %v1957 = vld [vmem:[%s1942 + $0x38] sm:$0xf]
      %v1958 = vld [vmem:[%s1942 + $0x3c] sm:$0xf]
      %v1970 = vunpack.c.l.b16 %v1931
      %v1971 = vunpack.c.l.b16 %v1932
      %v1972 = vunpack.c.l.b16 %v1933
      %v1973 = vunpack.c.l.b16 %v1934
      %v1974 = vunpack.c.l.b16 %v1935
      %v1975 = vunpack.c.l.b16 %v1936
      %v1976 = vunpack.c.l.b16 %v1937
      %v1977 = vunpack.c.l.b16 %v1938
      %v1978 = vunpack.c.l.b16 %v1939
      %v1979 = vunpack.c.l.b16 %v1940
      %v1980 = vunpack.c.l.b16 %v1941
      %v1981 = vpack.c.b16 %v1971, %v1970
      %v1982 = vpack.c.b16 %v1973, %v1972
      %v1983 = vpack.c.b16 %v1975, %v1974
      %v1984 = vpack.c.b16 %v1977, %v1976
      %v1985 = vpack.c.b16 %v1979, %v1978
      %v1986 = vpack.c.b16 %v1980, %v1980
      %vm1987 = vsmask.f32 5376
      %v1989 = vshrl.u32 %v1981, 16
      %v1991 = vrot.slane %v1989, 2
      %v1992 = vshll.u32 %v1981, 16
      %v1994 = vrot.slane %v1992, 3
      %v1995 = vor.u32 %v1991, %v1994
      %v1997 = vshrl.u32 %v1982, 16
      %v1999 = vrot.slane %v1997, 2
      %v2000 = vshll.u32 %v1982, 16
      %v2002 = vrot.slane %v2000, 3
      %v2003 = vor.u32 %v1999, %v2002
      %v2004 = vsel %vm1987, %v1995, %v2003
      %v2006 = vshrl.u32 %v1983, 16
      %v2008 = vrot.slane %v2006, 2
      %v2009 = vshll.u32 %v1983, 16
      %v2011 = vrot.slane %v2009, 3
      %v2012 = vor.u32 %v2008, %v2011
      %v2013 = vsel %vm1987, %v2003, %v2012
      %v2015 = vshrl.u32 %v1984, 16
      %v2017 = vrot.slane %v2015, 2
      %v2018 = vshll.u32 %v1984, 16
      %v2020 = vrot.slane %v2018, 3
      %v2021 = vor.u32 %v2017, %v2020
      %v2022 = vsel %vm1987, %v2012, %v2021
      %v2024 = vshrl.u32 %v1985, 16
      %v2026 = vrot.slane %v2024, 2
      %v2027 = vshll.u32 %v1985, 16
      %v2029 = vrot.slane %v2027, 3
      %v2030 = vor.u32 %v2026, %v2029
      %v2031 = vsel %vm1987, %v2021, %v2030
      %v2033 = vshrl.u32 %v1986, 16
      %v2035 = vrot.slane %v2033, 2
      %v2036 = vshll.u32 %v1986, 16
      %v2038 = vrot.slane %v2036, 3
      %v2039 = vor.u32 %v2035, %v2038
      %v2040 = vsel %vm1987, %v2030, %v2039
      %v2062 = vunpack.c.l.b16 %v1943
      %v2063 = vunpack.c.l.b16 %v1944
      %v2064 = vunpack.c.l.b16 %v1945
      %v2065 = vunpack.c.l.b16 %v1946
      %v2066 = vunpack.c.l.b16 %v1947
      %v2067 = vunpack.c.l.b16 %v1948
      %v2068 = vunpack.c.l.b16 %v1949
      %v2069 = vunpack.c.l.b16 %v1950
      %v2070 = vunpack.c.l.b16 %v1951
      %v2071 = vunpack.c.l.b16 %v1952
      %v2072 = vunpack.c.l.b16 %v1953
      %v2073 = vunpack.c.l.b16 %v1954
      %v2074 = vunpack.c.l.b16 %v1955
      %v2075 = vunpack.c.l.b16 %v1956
      %v2076 = vunpack.c.l.b16 %v1957
      %v2077 = vunpack.c.l.b16 %v1958
      %v2078 = vpack.c.b16 %v2063, %v2062
      %v2079 = vpack.c.b16 %v2065, %v2064
      %v2080 = vpack.c.b16 %v2067, %v2066
      %v2081 = vpack.c.b16 %v2069, %v2068
      %v2082 = vpack.c.b16 %v2071, %v2070
      %v2083 = vpack.c.b16 %v2073, %v2072
      %v2084 = vpack.c.b16 %v2075, %v2074
      %v2085 = vpack.c.b16 %v2077, %v2076
      %2094 = vmatprep.subr.bf16.mxu0 0
      %2095 = vmatpush1.bf16.msra.mxu0 %v2085
      %2096 = vmatprep.subr.bf16.mxu0 0
      %2097 = vmatpush1.bf16.msra.mxu0 %v2084
      %2098 = vmatprep.subr.bf16.mxu0 0
      %2099 = vmatpush1.bf16.msra.mxu0 %v2083
      %2100 = vmatprep.subr.bf16.mxu0 0
      %2101 = vmatpush1.bf16.msra.mxu0 %v2082
      %2102 = vmatprep.subr.bf16.mxu0 0
      %2103 = vmatpush1.bf16.msra.mxu0 %v2081
      %2104 = vmatprep.subr.bf16.mxu0 0
      %2105 = vmatpush1.bf16.msra.mxu0 %v2080
      %2106 = vmatprep.subr.bf16.mxu0 0
      %2107 = vmatpush1.bf16.msra.mxu0 %v2079
      %2108 = vmatprep.subr.bf16.mxu0 0
      %2109 = vmatpush1.bf16.msra.mxu0 %v2078
      %2110 = vmatprep.subr.bf16.mxu0 0
      %2111 = vmatpush2.bf16.msra.mxu0 0
      %2112 = vmatprep.subr.bf16.mxu0 0
      %2113 = vmatpush2.bf16.msra.mxu0 0
      %2114 = vmatprep.subr.bf16.mxu0 0
      %2115 = vmatpush2.bf16.msra.mxu0 0
      %2116 = vmatprep.subr.bf16.mxu0 0
      %2117 = vmatpush2.bf16.msra.mxu0 0
      %2118 = vmatprep.subr.bf16.mxu0 0
      %2119 = vmatpush2.bf16.msra.mxu0 0
      %2120 = vmatprep.subr.bf16.mxu0 0
      %2121 = vmatpush2.bf16.msra.mxu0 0
      %2122 = vmatprep.subr.bf16.mxu0 0
      %2123 = vmatpush2.bf16.msra.mxu0 0
      %2124 = vmatprep.subr.bf16.mxu0 0
      %2125 = vmatpush2.bf16.msra.mxu0 0
      %2126 = vmatprep.mubr.bf16.mxu0 0
      %2127 = vmatmul.mubr.bf16.gmra.mxu0 %v2004
      %v2128 = vpop.f32.mrf.mxu0
      %v2129 = vadd.f32 0.0, %v2128
      %v2130 = vpop.f32.mrf.mxu0
      %v2131 = vpop.f32.mrf.mxu0
      %v2132 = vadd.f32 0.0, %v2131
      %v2133 = vpop.f32.mrf.mxu0
      %2134 = vmatprep.mubr.bf16.mxu0 0
      %2135 = vmatmul.mubr.bf16.gmra.mxu0 %v2013
      %v2136 = vpop.f32.mrf.mxu0
      %v2137 = vadd.f32 0.0, %v2136
      %v2138 = vpop.f32.mrf.mxu0
      %v2139 = vpop.f32.mrf.mxu0
      %v2140 = vadd.f32 0.0, %v2139
      %v2141 = vpop.f32.mrf.mxu0
      %2142 = vmatprep.mubr.bf16.mxu0 0
      %2143 = vmatmul.mubr.bf16.gmra.mxu0 %v2022
      %v2144 = vpop.f32.mrf.mxu0
      %v2145 = vadd.f32 0.0, %v2144
      %v2146 = vpop.f32.mrf.mxu0
      %v2147 = vpop.f32.mrf.mxu0
      %v2148 = vadd.f32 0.0, %v2147
      %v2149 = vpop.f32.mrf.mxu0
      %2150 = vmatprep.mubr.bf16.mxu0 0
      %2151 = vmatmul.mubr.bf16.gmra.mxu0 %v2031
      %v2152 = vpop.f32.mrf.mxu0
      %v2153 = vadd.f32 0.0, %v2152
      %v2154 = vpop.f32.mrf.mxu0
      %v2155 = vpop.f32.mrf.mxu0
      %v2156 = vadd.f32 0.0, %v2155
      %v2157 = vpop.f32.mrf.mxu0
      %2158 = vmatprep.mubr.bf16.mxu0 0
      %2159 = vmatmul.mubr.bf16.gmra.mxu0 %v2040
      %v2160 = vpop.f32.mrf.mxu0
      %v2161 = vadd.f32 0.0, %v2160
      %v2162 = vpop.f32.mrf.mxu0
      %v2163 = vpop.f32.mrf.mxu0
      %v2164 = vadd.f32 0.0, %v2163
      %v2165 = vpop.f32.mrf.mxu0
      %2166 = vdwg.mxu0
      %v2167 = vld [vmem:[#allocation2] sm:$0xff]
      %v2168 = vld [vmem:[#allocation2 + $0x8] sm:$0xff]
      %v2169 = vld [vmem:[#allocation2 + $0x10] sm:$0xff]
      %v2170 = vld [vmem:[#allocation2 + $0x18] sm:$0xff]
      %v2171 = vld [vmem:[#allocation2 + $0x20] sm:$0xff]
      %v2172 = vld [vmem:[#allocation2 + $0x28] sm:$0xff]
      %v2173 = vld [vmem:[#allocation2 + $0x30] sm:$0xff]
      %v2174 = vld [vmem:[#allocation2 + $0x38] sm:$0xff]
      %v2175 = vld [vmem:[#allocation2 + $0x40] sm:$0xff]
      %v2176 = vld [vmem:[#allocation2 + $0x48] sm:$0xff]
      %v2177 = vadd.f32 %v2167, %v2129
      %v2178 = vadd.f32 %v2168, %v2132
      %v2179 = vadd.f32 %v2169, %v2137
      %v2180 = vadd.f32 %v2170, %v2140
      %v2181 = vadd.f32 %v2171, %v2145
      %v2182 = vadd.f32 %v2172, %v2148
      %v2183 = vadd.f32 %v2173, %v2153
      %v2184 = vadd.f32 %v2174, %v2156
      %v2185 = vadd.f32 %v2175, %v2161
      %v2186 = vadd.f32 %v2176, %v2164
      %2187 = vst [vmem:[#allocation2] sm:$0xff] %v2177
      %2188 = vst [vmem:[#allocation2 + $0x8] sm:$0xff] %v2178
      %2189 = vst [vmem:[#allocation2 + $0x10] sm:$0xff] %v2179
      %2190 = vst [vmem:[#allocation2 + $0x18] sm:$0xff] %v2180
      %2191 = vst [vmem:[#allocation2 + $0x20] sm:$0xff] %v2181
      %2192 = vst [vmem:[#allocation2 + $0x28] sm:$0xff] %v2182
      %2193 = vst [vmem:[#allocation2 + $0x30] sm:$0xff] %v2183
      %2194 = vst [vmem:[#allocation2 + $0x38] sm:$0xff] %v2184
      %2195 = vst [vmem:[#allocation2 + $0x40] sm:$0xff] %v2185
      %2196 = vst [vmem:[#allocation2 + $0x48] sm:$0xff] %v2186
      %v2197 = vld [vmem:[%s315 + $0x8] sm:$0x8]
      %v2198 = vld [vmem:[%s315 + $0xc] sm:$0xf]
      %v2199 = vld [vmem:[%s315 + $0x10] sm:$0xf]
      %v2200 = vld [vmem:[%s315 + $0x14] sm:$0xf]
      %v2201 = vld [vmem:[%s315 + $0x18] sm:$0xf]
      %v2202 = vld [vmem:[%s315 + $0x1c] sm:$0xf]
      %v2203 = vld [vmem:[%s315 + $0x20] sm:$0xf]
      %v2204 = vld [vmem:[%s315 + $0x24] sm:$0xf]
      %v2205 = vld [vmem:[%s315 + $0x28] sm:$0xf]
      %v2206 = vld [vmem:[%s315 + $0x2c] sm:$0xf]
      %v2207 = vld [vmem:[%s315 + $0x30] sm:$0x7]
      %s2208 = scalar_lea.vmem %s1, 512
      %v2209 = vld [vmem:[%s2208] sm:$0xf]
      %v2210 = vld [vmem:[%s2208 + $0x4] sm:$0xf]
      %v2211 = vld [vmem:[%s2208 + $0x8] sm:$0xf]
      %v2212 = vld [vmem:[%s2208 + $0xc] sm:$0xf]
      %v2213 = vld [vmem:[%s2208 + $0x10] sm:$0xf]
      %v2214 = vld [vmem:[%s2208 + $0x14] sm:$0xf]
      %v2215 = vld [vmem:[%s2208 + $0x18] sm:$0xf]
      %v2216 = vld [vmem:[%s2208 + $0x1c] sm:$0xf]
      %v2217 = vld [vmem:[%s2208 + $0x20] sm:$0xf]
      %v2218 = vld [vmem:[%s2208 + $0x24] sm:$0xf]
      %v2219 = vld [vmem:[%s2208 + $0x28] sm:$0xf]
      %v2220 = vld [vmem:[%s2208 + $0x2c] sm:$0xf]
      %v2221 = vld [vmem:[%s2208 + $0x30] sm:$0xf]
      %v2222 = vld [vmem:[%s2208 + $0x34] sm:$0xf]
      %v2223 = vld [vmem:[%s2208 + $0x38] sm:$0xf]
      %v2224 = vld [vmem:[%s2208 + $0x3c] sm:$0xf]
      %v2236 = vunpack.c.l.b16 %v2197
      %v2237 = vunpack.c.l.b16 %v2198
      %v2238 = vunpack.c.l.b16 %v2199
      %v2239 = vunpack.c.l.b16 %v2200
      %v2240 = vunpack.c.l.b16 %v2201
      %v2241 = vunpack.c.l.b16 %v2202
      %v2242 = vunpack.c.l.b16 %v2203
      %v2243 = vunpack.c.l.b16 %v2204
      %v2244 = vunpack.c.l.b16 %v2205
      %v2245 = vunpack.c.l.b16 %v2206
      %v2246 = vunpack.c.l.b16 %v2207
      %v2247 = vpack.c.b16 %v2237, %v2236
      %v2248 = vpack.c.b16 %v2239, %v2238
      %v2249 = vpack.c.b16 %v2241, %v2240
      %v2250 = vpack.c.b16 %v2243, %v2242
      %v2251 = vpack.c.b16 %v2245, %v2244
      %v2252 = vpack.c.b16 %v2246, %v2246
      %vm2253 = vcmask 1044480
      %v2254 = vrot.slane %v2247, 3
      %v2255 = vrot.slane %v2248, 3
      %v2256 = vsel %vm2253, %v2254, %v2255
      %v2257 = vrot.slane %v2249, 3
      %v2258 = vsel %vm2253, %v2255, %v2257
      %v2259 = vrot.slane %v2250, 3
      %v2260 = vsel %vm2253, %v2257, %v2259
      %v2261 = vrot.slane %v2251, 3
      %v2262 = vsel %vm2253, %v2259, %v2261
      %v2263 = vrot.slane %v2252, 3
      %v2264 = vsel %vm2253, %v2261, %v2263
      %v2286 = vunpack.c.l.b16 %v2209
      %v2287 = vunpack.c.l.b16 %v2210
      %v2288 = vunpack.c.l.b16 %v2211
      %v2289 = vunpack.c.l.b16 %v2212
      %v2290 = vunpack.c.l.b16 %v2213
      %v2291 = vunpack.c.l.b16 %v2214
      %v2292 = vunpack.c.l.b16 %v2215
      %v2293 = vunpack.c.l.b16 %v2216
      %v2294 = vunpack.c.l.b16 %v2217
      %v2295 = vunpack.c.l.b16 %v2218
      %v2296 = vunpack.c.l.b16 %v2219
      %v2297 = vunpack.c.l.b16 %v2220
      %v2298 = vunpack.c.l.b16 %v2221
      %v2299 = vunpack.c.l.b16 %v2222
      %v2300 = vunpack.c.l.b16 %v2223
      %v2301 = vunpack.c.l.b16 %v2224
      %v2302 = vpack.c.b16 %v2287, %v2286
      %v2303 = vpack.c.b16 %v2289, %v2288
      %v2304 = vpack.c.b16 %v2291, %v2290
      %v2305 = vpack.c.b16 %v2293, %v2292
      %v2306 = vpack.c.b16 %v2295, %v2294
      %v2307 = vpack.c.b16 %v2297, %v2296
      %v2308 = vpack.c.b16 %v2299, %v2298
      %v2309 = vpack.c.b16 %v2301, %v2300
      %2318 = vmatprep.subr.bf16.mxu0 0
      %2319 = vmatpush1.bf16.msra.mxu0 %v2309
      %2320 = vmatprep.subr.bf16.mxu0 0
      %2321 = vmatpush1.bf16.msra.mxu0 %v2308
      %2322 = vmatprep.subr.bf16.mxu0 0
      %2323 = vmatpush1.bf16.msra.mxu0 %v2307
      %2324 = vmatprep.subr.bf16.mxu0 0
      %2325 = vmatpush1.bf16.msra.mxu0 %v2306
      %2326 = vmatprep.subr.bf16.mxu0 0
      %2327 = vmatpush1.bf16.msra.mxu0 %v2305
      %2328 = vmatprep.subr.bf16.mxu0 0
      %2329 = vmatpush1.bf16.msra.mxu0 %v2304
      %2330 = vmatprep.subr.bf16.mxu0 0
      %2331 = vmatpush1.bf16.msra.mxu0 %v2303
      %2332 = vmatprep.subr.bf16.mxu0 0
      %2333 = vmatpush1.bf16.msra.mxu0 %v2302
      %2334 = vmatprep.subr.bf16.mxu0 0
      %2335 = vmatpush2.bf16.msra.mxu0 0
      %2336 = vmatprep.subr.bf16.mxu0 0
      %2337 = vmatpush2.bf16.msra.mxu0 0
      %2338 = vmatprep.subr.bf16.mxu0 0
      %2339 = vmatpush2.bf16.msra.mxu0 0
      %2340 = vmatprep.subr.bf16.mxu0 0
      %2341 = vmatpush2.bf16.msra.mxu0 0
      %2342 = vmatprep.subr.bf16.mxu0 0
      %2343 = vmatpush2.bf16.msra.mxu0 0
      %2344 = vmatprep.subr.bf16.mxu0 0
      %2345 = vmatpush2.bf16.msra.mxu0 0
      %2346 = vmatprep.subr.bf16.mxu0 0
      %2347 = vmatpush2.bf16.msra.mxu0 0
      %2348 = vmatprep.subr.bf16.mxu0 0
      %2349 = vmatpush2.bf16.msra.mxu0 0
      %2350 = vmatprep.mubr.bf16.mxu0 0
      %2351 = vmatmul.mubr.bf16.gmra.mxu0 %v2256
      %v2352 = vpop.f32.mrf.mxu0
      %v2353 = vadd.f32 0.0, %v2352
      %v2354 = vpop.f32.mrf.mxu0
      %v2355 = vpop.f32.mrf.mxu0
      %v2356 = vadd.f32 0.0, %v2355
      %v2357 = vpop.f32.mrf.mxu0
      %2358 = vmatprep.mubr.bf16.mxu0 0
      %2359 = vmatmul.mubr.bf16.gmra.mxu0 %v2258
      %v2360 = vpop.f32.mrf.mxu0
      %v2361 = vadd.f32 0.0, %v2360
      %v2362 = vpop.f32.mrf.mxu0
      %v2363 = vpop.f32.mrf.mxu0
      %v2364 = vadd.f32 0.0, %v2363
      %v2365 = vpop.f32.mrf.mxu0
      %2366 = vmatprep.mubr.bf16.mxu0 0
      %2367 = vmatmul.mubr.bf16.gmra.mxu0 %v2260
      %v2368 = vpop.f32.mrf.mxu0
      %v2369 = vadd.f32 0.0, %v2368
      %v2370 = vpop.f32.mrf.mxu0
      %v2371 = vpop.f32.mrf.mxu0
      %v2372 = vadd.f32 0.0, %v2371
      %v2373 = vpop.f32.mrf.mxu0
      %2374 = vmatprep.mubr.bf16.mxu0 0
      %2375 = vmatmul.mubr.bf16.gmra.mxu0 %v2262
      %v2376 = vpop.f32.mrf.mxu0
      %v2377 = vadd.f32 0.0, %v2376
      %v2378 = vpop.f32.mrf.mxu0
      %v2379 = vpop.f32.mrf.mxu0
      %v2380 = vadd.f32 0.0, %v2379
      %v2381 = vpop.f32.mrf.mxu0
      %2382 = vmatprep.mubr.bf16.mxu0 0
      %2383 = vmatmul.mubr.bf16.gmra.mxu0 %v2264
      %v2384 = vpop.f32.mrf.mxu0
      %v2385 = vadd.f32 0.0, %v2384
      %v2386 = vpop.f32.mrf.mxu0
      %v2387 = vpop.f32.mrf.mxu0
      %v2388 = vadd.f32 0.0, %v2387
      %v2389 = vpop.f32.mrf.mxu0
      %2390 = vdwg.mxu0
      %v2391 = vld [vmem:[#allocation2] sm:$0xff]
      %v2392 = vld [vmem:[#allocation2 + $0x8] sm:$0xff]
      %v2393 = vld [vmem:[#allocation2 + $0x10] sm:$0xff]
      %v2394 = vld [vmem:[#allocation2 + $0x18] sm:$0xff]
      %v2395 = vld [vmem:[#allocation2 + $0x20] sm:$0xff]
      %v2396 = vld [vmem:[#allocation2 + $0x28] sm:$0xff]
      %v2397 = vld [vmem:[#allocation2 + $0x30] sm:$0xff]
      %v2398 = vld [vmem:[#allocation2 + $0x38] sm:$0xff]
      %v2399 = vld [vmem:[#allocation2 + $0x40] sm:$0xff]
      %v2400 = vld [vmem:[#allocation2 + $0x48] sm:$0xff]
      %v2401 = vadd.f32 %v2391, %v2353
      %v2402 = vadd.f32 %v2392, %v2356
      %v2403 = vadd.f32 %v2393, %v2361
      %v2404 = vadd.f32 %v2394, %v2364
      %v2405 = vadd.f32 %v2395, %v2369
      %v2406 = vadd.f32 %v2396, %v2372
      %v2407 = vadd.f32 %v2397, %v2377
      %v2408 = vadd.f32 %v2398, %v2380
      %v2409 = vadd.f32 %v2399, %v2385
      %v2410 = vadd.f32 %v2400, %v2388
      %2411 = vst [vmem:[#allocation2] sm:$0xff] %v2401
      %2412 = vst [vmem:[#allocation2 + $0x8] sm:$0xff] %v2402
      %2413 = vst [vmem:[#allocation2 + $0x10] sm:$0xff] %v2403
      %2414 = vst [vmem:[#allocation2 + $0x18] sm:$0xff] %v2404
      %2415 = vst [vmem:[#allocation2 + $0x20] sm:$0xff] %v2405
      %2416 = vst [vmem:[#allocation2 + $0x28] sm:$0xff] %v2406
      %2417 = vst [vmem:[#allocation2 + $0x30] sm:$0xff] %v2407
      %2418 = vst [vmem:[#allocation2 + $0x38] sm:$0xff] %v2408
      %2419 = vst [vmem:[#allocation2 + $0x40] sm:$0xff] %v2409
      %2420 = vst [vmem:[#allocation2 + $0x48] sm:$0xff] %v2410
      %v2421 = vld [vmem:[#allocation2] sm:$0xff]
      %v2422 = vld [vmem:[#allocation2 + $0x8] sm:$0xff]
      %v2423 = vld [vmem:[#allocation2 + $0x10] sm:$0xff]
      %v2424 = vld [vmem:[#allocation2 + $0x18] sm:$0xff]
      %v2425 = vld [vmem:[#allocation2 + $0x20] sm:$0xff]
      %v2426 = vld [vmem:[#allocation2 + $0x28] sm:$0xff]
      %v2427 = vld [vmem:[#allocation2 + $0x30] sm:$0xff]
      %v2428 = vld [vmem:[#allocation2 + $0x38] sm:$0xff]
      %v2429 = vld [vmem:[#allocation2 + $0x40] sm:$0xff]
      %v2430 = vld [vmem:[#allocation2 + $0x48] sm:$0xff]
      %v2431 = vld [vmem:[%s2] sm:$0x1]
      %v2433 = vlaneseq
      %v2434 = vshrl.u32 %v2433, 7
      %v2435 = vsub.s32 0, %v2434
      %v2436 = vrot.slane %v2431, %v2435
      %v2438 = vmul.f32 %v2421, %v2436
      %v2439 = vmul.f32 %v2422, %v2436
      %v2440 = vmul.f32 %v2423, %v2436
      %v2441 = vmul.f32 %v2424, %v2436
      %v2442 = vmul.f32 %v2425, %v2436
      %v2443 = vmul.f32 %v2426, %v2436
      %v2444 = vmul.f32 %v2427, %v2436
      %v2445 = vmul.f32 %v2428, %v2436
      %v2446 = vmul.f32 %v2429, %v2436
      %v2447 = vmul.f32 %v2430, %v2436
      %v2448 = vld [vmem:[%s3] sm:$0x1]
      %v2450 = vlaneseq
      %v2451 = vshrl.u32 %v2450, 7
      %v2452 = vsub.s32 0, %v2451
      %v2453 = vrot.slane %v2448, %v2452
      %v2455 = vadd.f32 %v2438, %v2453
      %v2456 = vadd.f32 %v2439, %v2453
      %v2457 = vadd.f32 %v2440, %v2453
      %v2458 = vadd.f32 %v2441, %v2453
      %v2459 = vadd.f32 %v2442, %v2453
      %v2460 = vadd.f32 %v2443, %v2453
      %v2461 = vadd.f32 %v2444, %v2453
      %v2462 = vadd.f32 %v2445, %v2453
      %v2463 = vadd.f32 %v2446, %v2453
      %v2464 = vadd.f32 %v2447, %v2453
      %v2465 = vld [vmem:[%s320] sm:$0xf]
      %v2466 = vld [vmem:[%s320 + $0x4] sm:$0xf]
      %v2467 = vld [vmem:[%s320 + $0x8] sm:$0xf]
      %v2468 = vld [vmem:[%s320 + $0xc] sm:$0xf]
      %v2469 = vld [vmem:[%s320 + $0x10] sm:$0xf]
      %v2470 = vld [vmem:[%s320 + $0x14] sm:$0xf]
      %v2471 = vld [vmem:[%s320 + $0x18] sm:$0xf]
      %v2472 = vld [vmem:[%s320 + $0x1c] sm:$0xf]
      %v2473 = vld [vmem:[%s320 + $0x20] sm:$0xf]
      %v2474 = vld [vmem:[%s320 + $0x24] sm:$0xf]
      %v2475 = vld [vmem:[%s5] sm:$0x3]
      %v2486 = vunpack.c.l.b16 %v2465
      %v2487 = vunpack.c.l.b16 %v2466
      %v2488 = vunpack.c.l.b16 %v2467
      %v2489 = vunpack.c.l.b16 %v2468
      %v2490 = vunpack.c.l.b16 %v2469
      %v2491 = vunpack.c.l.b16 %v2470
      %v2492 = vunpack.c.l.b16 %v2471
      %v2493 = vunpack.c.l.b16 %v2472
      %v2494 = vunpack.c.l.b16 %v2473
      %v2495 = vunpack.c.l.b16 %v2474
      %v2496 = vpack.c.b16 %v2487, %v2486
      %v2497 = vpack.c.b16 %v2489, %v2488
      %v2498 = vpack.c.b16 %v2491, %v2490
      %v2499 = vpack.c.b16 %v2493, %v2492
      %v2500 = vpack.c.b16 %v2495, %v2494
      %vm2501 = vcmask 31744
      %v2503 = vsel %vm2501, %v2496, 0
      %v2506 = vsel %vm2501, %v2497, 0
      %v2509 = vsel %vm2501, %v2498, 0
      %v2512 = vsel %vm2501, %v2499, 0
      %v2515 = vsel %vm2501, %v2500, 0
      %vm2517 = vcmask 1041408
      %v2519 = vsel %vm2517, %v2475, 0
      %2521 = vmatprep.subr.bf16.mxu0 0
      %2522 = vmatpush1.bf16.msra.mxu0 0
      %2523 = vmatprep.subr.bf16.mxu0 0
      %2524 = vmatpush1.bf16.msra.mxu0 0
      %2525 = vmatprep.subr.bf16.mxu0 0
      %2526 = vmatpush1.bf16.msra.mxu0 0
      %2527 = vmatprep.subr.bf16.mxu0 0
      %2528 = vmatpush1.bf16.msra.mxu0 0
      %2529 = vmatprep.subr.bf16.mxu0 0
      %2530 = vmatpush1.bf16.msra.mxu0 0
      %2531 = vmatprep.subr.bf16.mxu0 0
      %2532 = vmatpush1.bf16.msra.mxu0 0
      %2533 = vmatprep.subr.bf16.mxu0 0
      %2534 = vmatpush1.bf16.msra.mxu0 0
      %2535 = vmatprep.subr.bf16.mxu0 0
      %2536 = vmatpush1.bf16.msra.mxu0 %v2519
      %2537 = vmatprep.subr.bf16.mxu0 0
      %2538 = vmatpush2.bf16.msra.mxu0 0
      %2539 = vmatprep.subr.bf16.mxu0 0
      %2540 = vmatpush2.bf16.msra.mxu0 0
      %2541 = vmatprep.subr.bf16.mxu0 0
      %2542 = vmatpush2.bf16.msra.mxu0 0
      %2543 = vmatprep.subr.bf16.mxu0 0
      %2544 = vmatpush2.bf16.msra.mxu0 0
      %2545 = vmatprep.subr.bf16.mxu0 0
      %2546 = vmatpush2.bf16.msra.mxu0 0
      %2547 = vmatprep.subr.bf16.mxu0 0
      %2548 = vmatpush2.bf16.msra.mxu0 0
      %2549 = vmatprep.subr.bf16.mxu0 0
      %2550 = vmatpush2.bf16.msra.mxu0 0
      %2551 = vmatprep.subr.bf16.mxu0 0
      %2552 = vmatpush2.bf16.msra.mxu0 0
      %2553 = vmatprep.mubr.bf16.mxu0 0
      %2554 = vmatmul.mubr.bf16.gmra.mxu0 %v2503
      %v2555 = vpop.f32.mrf.mxu0
      %v2556 = vadd.f32 0.0, %v2555
      %v2557 = vpop.f32.mrf.mxu0
      %v2558 = vpop.f32.mrf.mxu0
      %v2559 = vadd.f32 0.0, %v2558
      %v2560 = vpop.f32.mrf.mxu0
      %2561 = vmatprep.mubr.bf16.mxu0 0
      %2562 = vmatmul.mubr.bf16.gmra.mxu0 %v2506
      %v2563 = vpop.f32.mrf.mxu0
      %v2564 = vadd.f32 0.0, %v2563
      %v2565 = vpop.f32.mrf.mxu0
      %v2566 = vpop.f32.mrf.mxu0
      %v2567 = vadd.f32 0.0, %v2566
      %v2568 = vpop.f32.mrf.mxu0
      %2569 = vmatprep.mubr.bf16.mxu0 0
      %2570 = vmatmul.mubr.bf16.gmra.mxu0 %v2509
      %v2571 = vpop.f32.mrf.mxu0
      %v2572 = vadd.f32 0.0, %v2571
      %v2573 = vpop.f32.mrf.mxu0
      %v2574 = vpop.f32.mrf.mxu0
      %v2575 = vadd.f32 0.0, %v2574
      %v2576 = vpop.f32.mrf.mxu0
      %2577 = vmatprep.mubr.bf16.mxu0 0
      %2578 = vmatmul.mubr.bf16.gmra.mxu0 %v2512
      %v2579 = vpop.f32.mrf.mxu0
      %v2580 = vadd.f32 0.0, %v2579
      %v2581 = vpop.f32.mrf.mxu0
      %v2582 = vpop.f32.mrf.mxu0
      %v2583 = vadd.f32 0.0, %v2582
      %v2584 = vpop.f32.mrf.mxu0
      %2585 = vmatprep.mubr.bf16.mxu0 0
      %2586 = vmatmul.mubr.bf16.gmra.mxu0 %v2515
      %v2587 = vpop.f32.mrf.mxu0
      %v2588 = vadd.f32 0.0, %v2587
      %v2589 = vpop.f32.mrf.mxu0
      %v2590 = vpop.f32.mrf.mxu0
      %v2591 = vadd.f32 0.0, %v2590
      %v2592 = vpop.f32.mrf.mxu0
      %2593 = vdwg.mxu0
      %v2594 = vld [vmem:[%s6] sm:$0x1]
      %v2596 = vlaneseq
      %v2597 = vshrl.u32 %v2596, 7
      %v2598 = vsub.s32 0, %v2597
      %v2599 = vrot.slane %v2594, %v2598
      %v2601 = vmul.f32 %v2556, %v2599
      %v2602 = vmul.f32 %v2559, %v2599
      %v2603 = vmul.f32 %v2564, %v2599
      %v2604 = vmul.f32 %v2567, %v2599
      %v2605 = vmul.f32 %v2572, %v2599
      %v2606 = vmul.f32 %v2575, %v2599
      %v2607 = vmul.f32 %v2580, %v2599
      %v2608 = vmul.f32 %v2583, %v2599
      %v2609 = vmul.f32 %v2588, %v2599
      %v2610 = vmul.f32 %v2591, %v2599
      %v2611 = vadd.f32 %v2455, %v2601
      %v2612 = vadd.f32 %v2456, %v2602
      %v2613 = vadd.f32 %v2457, %v2603
      %v2614 = vadd.f32 %v2458, %v2604
      %v2615 = vadd.f32 %v2459, %v2605
      %v2616 = vadd.f32 %v2460, %v2606
      %v2617 = vadd.f32 %v2461, %v2607
      %v2618 = vadd.f32 %v2462, %v2608
      %v2619 = vadd.f32 %v2463, %v2609
      %v2620 = vadd.f32 %v2464, %v2610
      %v2621 = vld [vmem:[%s7] sm:$0x1]
      %v2623 = vlaneseq
      %v2624 = vshrl.u32 %v2623, 7
      %v2625 = vsub.s32 0, %v2624
      %v2626 = vrot.slane %v2621, %v2625
      %v2628 = vadd.f32 %v2611, %v2626
      %v2629 = vadd.f32 %v2612, %v2626
      %v2630 = vadd.f32 %v2613, %v2626
      %v2631 = vadd.f32 %v2614, %v2626
      %v2632 = vadd.f32 %v2615, %v2626
      %v2633 = vadd.f32 %v2616, %v2626
      %v2634 = vadd.f32 %v2617, %v2626
      %v2635 = vadd.f32 %v2618, %v2626
      %v2636 = vadd.f32 %v2619, %v2626
      %v2637 = vadd.f32 %v2620, %v2626
      %v2638 = vmax.f32 %v2628, 0.0
      %v2639 = vmax.f32 %v2629, 0.0
      %v2640 = vmax.f32 %v2630, 0.0
      %v2641 = vmax.f32 %v2631, 0.0
      %v2642 = vmax.f32 %v2632, 0.0
      %v2643 = vmax.f32 %v2633, 0.0
      %v2644 = vmax.f32 %v2634, 0.0
      %v2645 = vmax.f32 %v2635, 0.0
      %v2646 = vmax.f32 %v2636, 0.0
      %v2647 = vmax.f32 %v2637, 0.0
      %v2648 = vmin.f32 %v2638, 6.0
      %v2649 = vmin.f32 %v2639, 6.0
      %v2650 = vmin.f32 %v2640, 6.0
      %v2651 = vmin.f32 %v2641, 6.0
      %v2652 = vmin.f32 %v2642, 6.0
      %v2653 = vmin.f32 %v2643, 6.0
      %v2654 = vmin.f32 %v2644, 6.0
      %v2655 = vmin.f32 %v2645, 6.0
      %v2656 = vmin.f32 %v2646, 6.0
      %v2657 = vmin.f32 %v2647, 6.0
      %2658 = vst [vmem:[%s325] sm:$0xff] %v2648
      %2659 = vst [vmem:[%s325 + $0x8] sm:$0xff] %v2649
      %2660 = vst [vmem:[%s325 + $0x10] sm:$0xff] %v2650
      %2661 = vst [vmem:[%s325 + $0x18] sm:$0xff] %v2651
      %2662 = vst [vmem:[%s325 + $0x20] sm:$0xff] %v2652
      %2663 = vst [vmem:[%s325 + $0x28] sm:$0xff] %v2653
      %2664 = vst [vmem:[%s325 + $0x30] sm:$0xff] %v2654
      %2665 = vst [vmem:[%s325 + $0x38] sm:$0xff] %v2655
      %2666 = vst [vmem:[%s325 + $0x40] sm:$0xff] %v2656
      %2667 = vst [vmem:[%s325 + $0x48] sm:$0xff] %v2657
      %p2668 = scmp.lt.s32.totalorder %s19, 1
      %s2669 = scalar_select %p2668, %s19, 1
      %s2670 = smul.addr %s2669, 10
      %s2671 = smul.addr %s2670, 8
      %s2672 = scalar_lea.vmem %s8, %s2671
      // Predicated region
      $region53: #{basic_block_forward.3} parent=51 // pred_check
        %p2673 = pneg %p215
      $region54: #{basic_block_forward.3} parent=51 // pred_check_branch
        %2675 = sbr.rel (%p2673) target = $region56
      $region55: #{basic_block_forward.3} parent=51 // pred_region
        _
      $region56: #{basic_block_forward.3} parent=51 // pred_fallthru
        _
    $region52: #{basic_block_forward.3} parent=5 // pred_fallthru
      _
    %p2676 = scmp.le.s32.totalorder 2, %s14
    // Predicated region
    $region57: #{basic_block_forward.3} parent=5 // pred_check
      %p2677 = pneg %p2676
    $region58: #{basic_block_forward.3} parent=5 // pred_check_branch
      %2679 = sbr.rel (%p2677) target = $region60
    $region59: #{basic_block_forward.3} parent=5 // pred_region
      %s2680 = ssub.s32 %s14, 2
      // Predicated region
      $region61: #{basic_block_forward.3} parent=59 // pred_check
        %p2681 = pneg %p221
      $region62: #{basic_block_forward.3} parent=59 // pred_check_branch
        %2683 = sbr.rel (%p2681) target = $region64
      $region63: #{basic_block_forward.3} parent=59 // pred_region
        %p2684 = scmp.lt.s32.totalorder %s20, 1
        %s2685 = scalar_select %p2684, %s20, 1
        %s2686 = smul.addr %s2685, 10
        %s2687 = smul.addr %s2686, 8
        %s2688 = scalar_lea.vmem %s8, %s2687
      $region64: #{basic_block_forward.3} parent=59 // pred_fallthru
        _
    $region60: #{basic_block_forward.3} parent=5 // pred_fallthru
      _
  $region6: #{basic_block_forward.3} parent=0 // loop_footer
    %s18 = sadd.s32 1, %s14
  $region7: #{basic_block_forward.3} parent=0 // loop_footer_branch
    %13 = sbr.rel target = $region3
  $region8: #{basic_block_forward.3} parent=0 // loop_exit
    _

</llo_original>
